<compile_context>
chip_gen: v7x
topology: tpu7x:2x2x1
jax: 0.10.0
libtpu: 0.0.40
codegen_flags: <defaults>
</compile_context>

<pallas_src>
import jax
import jax.numpy as jnp
from jax import lax
from jax.experimental import pallas as pl
from jax.experimental.pallas import tpu as pltpu


# ------------------------------ fused kernel ------------------------------- #

def cnn_kernel(x_ref, w1e_ref, b1_ref, w2e_ref, b2_ref,
               wf1_ref, bf1_ref, wf2_ref, bf2_ref, o_ref):
    TB = x_ref.shape[0]
    f32, bf16 = jnp.float32, jnp.bfloat16
    x = x_ref[...]                                              # [TB, 28, 28] f32

    # ---- conv1 (1->10, k=5): dj-Toeplitz matmul over 5 sublane-shifted slices ----
    # p1 lanes = (di, c);  K = 140.  Output columns ordered (parity, jhalf, co).
    p1 = jnp.concatenate([x[:, di:di + 24, :] for di in range(5)], axis=-1)  # [TB,24,140]
    p1 = p1.reshape(TB * 24, 140).astype(bf16)
    y1 = jnp.dot(p1, w1e_ref[...], preferred_element_type=f32)  # [TB*24, 240]
    y1 = jnp.maximum(y1 + b1_ref[...], 0.0)                     # bias+ReLU commute with max
    y1 = y1.reshape(TB, 24, 240)
    # 2x2 max-pool: column-pair selection folded into weight column order ->
    # lane pool is a single two-half maximum.
    y1 = jnp.maximum(y1[..., :120], y1[..., 120:])              # [TB, 24, 120] lanes (jh, co)
    # Row-pair (sublane) pool.
    h1 = jnp.concatenate(
        [jnp.maximum(y1[:, 2 * p:2 * p + 1, :], y1[:, 2 * p + 1:2 * p + 2, :])
         for p in range(12)], axis=1)                           # [TB, 12, 120]

    # ---- conv2 (10->20, k=5): same structure ----
    # TODO(synk): nn.Dropout2d is implemented as eval-mode identity.
    p2 = jnp.concatenate([h1[:, di:di + 8, :] for di in range(5)], axis=-1)  # [TB,8,600]
    p2 = p2.reshape(TB * 8, 600).astype(bf16)
    y2 = jnp.dot(p2, w2e_ref[...], preferred_element_type=f32)  # [TB*8, 160]
    y2 = jnp.maximum(y2 + b2_ref[...], 0.0)
    y2 = y2.reshape(TB, 8, 160)
    y2 = jnp.maximum(y2[..., :80], y2[..., 80:])                # [TB, 8, 80] lanes (qh, co)
    h2 = jnp.concatenate(
        [jnp.maximum(y2[:, 2 * p:2 * p + 1, :], y2[:, 2 * p + 1:2 * p + 2, :])
         for p in range(4)], axis=1)                            # [TB, 4, 80]

    # ---- flatten + fc1 + ReLU + fc2 + softmax (fc dims padded to 128 lanes) ----
    flat = h2.reshape(TB, 320).astype(bf16)   # lane order (ip, qh, co); fc1 rows pre-permuted
    # TODO(synk): F.dropout(training=False) is identity.
    h = jnp.dot(flat, wf1_ref[...], preferred_element_type=f32) + bf1_ref[...]
    h = jnp.maximum(h, 0.0).astype(bf16)                        # [TB, 128]
    logits = jnp.dot(h, wf2_ref[...], preferred_element_type=f32) + bf2_ref[...]
    z = logits - jnp.max(logits, axis=1, keepdims=True)
    e = jnp.exp(z)                                              # padded logits -1e30 -> 0
    o_ref[...] = e / jnp.sum(e, axis=1, keepdims=True)          # [TB, 128] lane-dense


# ------------------------- static weight preparation ------------------------ #

def _prep_weights(p):
    f32, bf16 = jnp.float32, jnp.bfloat16

    # conv1: W1e[di*28 + c, parity*120 + jh*10 + co] = w1[co,0,di, c - (2*jh+parity)]
    w1 = p["w_conv1"].astype(f32)                               # [10, 1, 5, 5]
    w1t = jnp.transpose(w1[:, 0], (1, 2, 0))                    # [di, dj, co]
    c = jnp.arange(28)[:, None]
    jout = jnp.arange(24)[None, :]
    dj = c - jout
    v1 = ((dj >= 0) & (dj < 5)).astype(f32)                     # [28, 24]
    w1g = w1t[:, jnp.clip(dj, 0, 4), :] * v1[None, :, :, None]  # [5, 28, 24, 10]
    w1g = w1g.reshape(5, 28, 12, 2, 10)                         # jout -> (jh, parity)
    w1e = jnp.transpose(w1g, (0, 1, 3, 2, 4)).reshape(140, 240).astype(bf16)
    b1r = jnp.tile(p["b_conv1"].astype(f32), 24).reshape(1, 240)

    # conv2: W2e[di*120 + hc*10 + ci, parity*80 + qh*20 + co] = w2[co,ci,di, hc - (2*qh+parity)]
    w2 = p["w_conv2"].astype(f32)                               # [20, 10, 5, 5]
    w2t = jnp.transpose(w2, (2, 3, 1, 0))                       # [di, dj, ci, co]
    hc = jnp.arange(12)[:, None]
    oc = jnp.arange(8)[None, :]
    dj2 = hc - oc
    v2 = ((dj2 >= 0) & (dj2 < 5)).astype(f32)                   # [12, 8]
    w2g = w2t[:, jnp.clip(dj2, 0, 4), :, :] * v2[None, :, :, None, None]  # [5,12,8,10,20]
    w2g = jnp.transpose(w2g, (0, 1, 3, 2, 4))                   # [di, hc, ci, oc, co]
    w2g = w2g.reshape(5, 12, 10, 4, 2, 20)                      # oc -> (qh, parity)
    w2e = jnp.transpose(w2g, (0, 1, 2, 4, 3, 5)).reshape(600, 160).astype(bf16)
    b2r = jnp.tile(p["b_conv2"].astype(f32), 8).reshape(1, 160)

    # fc1: permute 320 inputs from torch (co, ip, q) order to kernel (ip, q, co);
    # pad hidden 50 -> 128 lanes (zero weights / zero bias).
    wf1 = p["w_fc1"].astype(f32).reshape(50, 20, 4, 4)          # [h, co, ip, q]
    wf1p = jnp.transpose(wf1, (2, 3, 1, 0)).reshape(320, 50)
    wf1p = jnp.zeros((320, 128), f32).at[:, :50].set(wf1p).astype(bf16)
    bf1r = jnp.zeros((1, 128), f32).at[0, :50].set(p["b_fc1"].astype(f32))

    # fc2: K padded to 128 (zero rows), 10 outputs padded to 128 lanes;
    # padded logits get bias -1e30 -> softmax probability 0.
    wf2p = jnp.zeros((128, 128), f32).at[:50, :10].set(p["w_fc2"].astype(f32).T).astype(bf16)
    bf2r = jnp.full((128,), -1e30, f32).at[:10].set(p["b_fc2"].astype(f32)).reshape(1, 128)

    return w1e, b1r, w2e, b2r, wf1p, bf1r, wf2p, bf2r


# --------------------------------- wrapper ---------------------------------- #

def _round_up(n, m):
    return -(-n // m) * m


def cnn_forward(x_nchw, params, block_b=128):
    B = x_nchw.shape[0]
    x = x_nchw.astype(jnp.float32).reshape(B, 28, 28)           # C == 1

    # Batch tile: multiple of 8 (sublane aligned, keeps output blocks legal) and
    # at least 2 grid blocks when batch allows, so both v7x TensorCores get work.
    tb = min(block_b, _round_up(B, 8))
    if B > 8:
        tb = min(tb, _round_up(-(-B // 2), 8))
    n_blk = pl.cdiv(B, tb)
    Bp = n_blk * tb
    if Bp != B:
        x = jnp.concatenate([x, jnp.zeros((Bp - B, 28, 28), x.dtype)], axis=0)

    ws = _prep_weights(params)

    def rep(w):
        nd = w.ndim
        return pl.BlockSpec(w.shape, lambda i, _nd=nd: (0,) * _nd)   # fetched once, VMEM-resident

    flops = Bp * 2 * (24 * 140 * 240 + 8 * 600 * 160 + 320 * 128 + 128 * 128)
    wbytes = sum(int(w.size) * w.dtype.itemsize for w in ws)
    cost = pl.CostEstimate(flops=flops, transcendentals=Bp * 128,
                           bytes_accessed=4 * Bp * (28 * 28 + 128) + wbytes)

    out = pl.pallas_call(
        cnn_kernel,
        out_shape=jax.ShapeDtypeStruct((Bp, 128), jnp.float32),
        grid=(n_blk,),
        in_specs=[pl.BlockSpec((tb, 28, 28), lambda i: (i, 0, 0))] + [rep(w) for w in ws],
        out_specs=pl.BlockSpec((tb, 128), lambda i: (i, 0)),
        compiler_params=pltpu.CompilerParams(
            dimension_semantics=("parallel",),
            vmem_limit_bytes=48 * 1024 * 1024),
        cost_estimate=cost,
    )(x, *ws)
    return out[:B, :10]


# ------------------------------ params & check ------------------------------ #

def init_params(key):
    ks = jax.random.split(key, 8)

    def u(k, shape, fan_in):
        bound = 1.0 / jnp.sqrt(jnp.float32(fan_in))
        return jax.random.uniform(k, shape, jnp.float32, -bound, bound)

    return {
        "w_conv1": u(ks[0], (10, 1, 5, 5), 25),
        "b_conv1": u(ks[1], (10,), 25),
        "w_conv2": u(ks[2], (20, 10, 5, 5), 250),
        "b_conv2": u(ks[3], (20,), 250),
        "w_fc1":   u(ks[4], (50, 320), 320),
        "b_fc1":   u(ks[5], (50,), 320),
        "w_fc2":   u(ks[6], (10, 50), 50),
        "b_fc2":   u(ks[7], (10,), 50),
    }


def _reference(x_nchw, p):
    hp = lax.Precision.HIGHEST

    def conv(x, w, b):
        y = lax.conv_general_dilated(x, w, (1, 1), "VALID",
                                     dimension_numbers=("NCHW", "OIHW", "NCHW"),
                                     precision=hp)
        return y + b[None, :, None, None]

    def pool(x):
        return lax.reduce_window(x, -jnp.inf, lax.max, (1, 1, 2, 2), (1, 1, 2, 2), "VALID")

    h = jax.nn.relu(pool(conv(x_nchw, p["w_conv1"], p["b_conv1"])))
    h = jax.nn.relu(pool(conv(h, p["w_conv2"], p["b_conv2"])))
    h = h.reshape(x_nchw.shape[0], 320)
    h = jax.nn.relu(jnp.dot(h, p["w_fc1"].T, precision=hp) + p["b_fc1"])
    logits = jnp.dot(h, p["w_fc2"].T, precision=hp) + p["b_fc2"]
    return jax.nn.softmax(logits, axis=1)


if __name__ == "__main__":
    key = jax.random.PRNGKey(0)
    kx, kp = jax.random.split(key)
    # Module implies MNIST-shaped input: 1x28x28 (so flatten gives 320).
    x = jax.random.normal(kx, (2, 1, 28, 28), dtype=jnp.float32)
    params = init_params(kp)

    y = jax.jit(cnn_forward)(x, params)
    y = jax.block_until_ready(y)

    assert y.shape == (2, 10)
    assert bool(jnp.all(jnp.abs(jnp.sum(y, axis=1) - 1.0) < 1e-5))
    y_ref = _reference(x, params)
    err = float(jnp.max(jnp.abs(y - y_ref)))
    # bf16 MXU operands (f32 accumulate / bias / softmax) -> loosened tolerance.
    assert err < 2e-2, err
    print("KERNEL_OK")
</pallas_src>

<mosaic_0001>
module attributes {stable_mosaic.version = 11 : i64} {
  func.func @cnn_kernel(%arg0: i32, %arg1: memref<8x28x28xf32, #tpu.memory_space<vmem>>, %arg2: memref<140x240xbf16, #tpu.memory_space<vmem>>, %arg3: memref<1x240xf32, #tpu.memory_space<vmem>>, %arg4: memref<600x160xbf16, #tpu.memory_space<vmem>>, %arg5: memref<1x160xf32, #tpu.memory_space<vmem>>, %arg6: memref<320x128xbf16, #tpu.memory_space<vmem>>, %arg7: memref<1x128xf32, #tpu.memory_space<vmem>>, %arg8: memref<128x128xbf16, #tpu.memory_space<vmem>>, %arg9: memref<1x128xf32, #tpu.memory_space<vmem>>, %arg10: memref<8x128xf32, #tpu.memory_space<vmem>>) attributes {dimension_semantics = [#tpu.dimension_semantics<parallel>], iteration_bounds = array<i64: 1>, scalar_prefetch = 0 : i64, scratch_operands = 0 : i64, tpu.core_type = #tpu.core_type<tc>, window_params = [{transform_indices = @transform_0, window_bounds = array<i64: 8, 28, 28>}, {pipeline_mode = #tpu.pipeline_mode<synchronous>, transform_indices = @transform_1, window_bounds = array<i64: 140, 240>}, {pipeline_mode = #tpu.pipeline_mode<synchronous>, transform_indices = @transform_2, window_bounds = array<i64: 1, 240>}, {pipeline_mode = #tpu.pipeline_mode<synchronous>, transform_indices = @transform_3, window_bounds = array<i64: 600, 160>}, {pipeline_mode = #tpu.pipeline_mode<synchronous>, transform_indices = @transform_4, window_bounds = array<i64: 1, 160>}, {pipeline_mode = #tpu.pipeline_mode<synchronous>, transform_indices = @transform_5, window_bounds = array<i64: 320, 128>}, {pipeline_mode = #tpu.pipeline_mode<synchronous>, transform_indices = @transform_6, window_bounds = array<i64: 1, 128>}, {pipeline_mode = #tpu.pipeline_mode<synchronous>, transform_indices = @transform_7, window_bounds = array<i64: 128, 128>}, {pipeline_mode = #tpu.pipeline_mode<synchronous>, transform_indices = @transform_8, window_bounds = array<i64: 1, 128>}, {transform_indices = @transform_9, window_bounds = array<i64: 8, 128>}]} {
    %c0 = arith.constant 0 : index
    %c0_0 = arith.constant 0 : index
    %c0_1 = arith.constant 0 : index
    %0 = vector.load %arg1[%c0, %c0_0, %c0_1] : memref<8x28x28xf32, #tpu.memory_space<vmem>>, vector<8x28x28xf32>
    %1 = vector.extract_strided_slice %0 {offsets = [0, 0, 0], sizes = [8, 24, 28], strides = [1, 1, 1]} : vector<8x28x28xf32> to vector<8x24x28xf32>
    %2 = vector.extract_strided_slice %0 {offsets = [0, 1, 0], sizes = [8, 24, 28], strides = [1, 1, 1]} : vector<8x28x28xf32> to vector<8x24x28xf32>
    %3 = vector.extract_strided_slice %0 {offsets = [0, 2, 0], sizes = [8, 24, 28], strides = [1, 1, 1]} : vector<8x28x28xf32> to vector<8x24x28xf32>
    %4 = vector.extract_strided_slice %0 {offsets = [0, 3, 0], sizes = [8, 24, 28], strides = [1, 1, 1]} : vector<8x28x28xf32> to vector<8x24x28xf32>
    %5 = vector.extract_strided_slice %0 {offsets = [0, 4, 0], sizes = [8, 24, 28], strides = [1, 1, 1]} : vector<8x28x28xf32> to vector<8x24x28xf32>
    %6 = tpu.concatenate %1, %2, %3, %4, %5 in 2 : vector<8x24x28xf32>, vector<8x24x28xf32>, vector<8x24x28xf32>, vector<8x24x28xf32>, vector<8x24x28xf32> -> vector<8x24x140xf32>
    %7 = vector.shape_cast %6 : vector<8x24x140xf32> to vector<192x140xf32>
    %8 = arith.truncf %7 : vector<192x140xf32> to vector<192x140xbf16>
    %c0_2 = arith.constant 0 : index
    %c0_3 = arith.constant 0 : index
    %9 = vector.load %arg2[%c0_2, %c0_3] : memref<140x240xbf16, #tpu.memory_space<vmem>>, vector<140x240xbf16>
    %cst = arith.constant dense<0.000000e+00> : vector<192x240xf32>
    %10 = tpu.matmul %8, %9, %cst {dimension_numbers = #tpu.dot_dimension_numbers<[1], [0], [0], [1], [0, 0, 1, 1], [], []>} : vector<192x140xbf16>, vector<140x240xbf16>, vector<192x240xf32> -> vector<192x240xf32>
    %c0_4 = arith.constant 0 : index
    %c0_5 = arith.constant 0 : index
    %11 = vector.load %arg3[%c0_4, %c0_5] : memref<1x240xf32, #tpu.memory_space<vmem>>, vector<1x240xf32>
    %12 = vector.broadcast %11 : vector<1x240xf32> to vector<192x240xf32>
    %13 = arith.addf %10, %12 : vector<192x240xf32>
    %cst_6 = arith.constant 0.000000e+00 : f32
    %14 = vector.broadcast %cst_6 : f32 to vector<192x240xf32>
    %15 = arith.maximumf %13, %14 : vector<192x240xf32>
    %16 = vector.shape_cast %15 : vector<192x240xf32> to vector<8x24x240xf32>
    %17 = vector.extract_strided_slice %16 {offsets = [0, 0, 0], sizes = [8, 24, 120], strides = [1, 1, 1]} : vector<8x24x240xf32> to vector<8x24x120xf32>
    %18 = vector.extract_strided_slice %16 {offsets = [0, 0, 120], sizes = [8, 24, 120], strides = [1, 1, 1]} : vector<8x24x240xf32> to vector<8x24x120xf32>
    %19 = arith.maximumf %17, %18 : vector<8x24x120xf32>
    %20 = vector.extract_strided_slice %19 {offsets = [0, 0, 0], sizes = [8, 1, 120], strides = [1, 1, 1]} : vector<8x24x120xf32> to vector<8x1x120xf32>
    %21 = vector.extract_strided_slice %19 {offsets = [0, 1, 0], sizes = [8, 1, 120], strides = [1, 1, 1]} : vector<8x24x120xf32> to vector<8x1x120xf32>
    %22 = arith.maximumf %20, %21 : vector<8x1x120xf32>
    %23 = vector.extract_strided_slice %19 {offsets = [0, 2, 0], sizes = [8, 1, 120], strides = [1, 1, 1]} : vector<8x24x120xf32> to vector<8x1x120xf32>
    %24 = vector.extract_strided_slice %19 {offsets = [0, 3, 0], sizes = [8, 1, 120], strides = [1, 1, 1]} : vector<8x24x120xf32> to vector<8x1x120xf32>
    %25 = arith.maximumf %23, %24 : vector<8x1x120xf32>
    %26 = vector.extract_strided_slice %19 {offsets = [0, 4, 0], sizes = [8, 1, 120], strides = [1, 1, 1]} : vector<8x24x120xf32> to vector<8x1x120xf32>
    %27 = vector.extract_strided_slice %19 {offsets = [0, 5, 0], sizes = [8, 1, 120], strides = [1, 1, 1]} : vector<8x24x120xf32> to vector<8x1x120xf32>
    %28 = arith.maximumf %26, %27 : vector<8x1x120xf32>
    %29 = vector.extract_strided_slice %19 {offsets = [0, 6, 0], sizes = [8, 1, 120], strides = [1, 1, 1]} : vector<8x24x120xf32> to vector<8x1x120xf32>
    %30 = vector.extract_strided_slice %19 {offsets = [0, 7, 0], sizes = [8, 1, 120], strides = [1, 1, 1]} : vector<8x24x120xf32> to vector<8x1x120xf32>
    %31 = arith.maximumf %29, %30 : vector<8x1x120xf32>
    %32 = vector.extract_strided_slice %19 {offsets = [0, 8, 0], sizes = [8, 1, 120], strides = [1, 1, 1]} : vector<8x24x120xf32> to vector<8x1x120xf32>
    %33 = vector.extract_strided_slice %19 {offsets = [0, 9, 0], sizes = [8, 1, 120], strides = [1, 1, 1]} : vector<8x24x120xf32> to vector<8x1x120xf32>
    %34 = arith.maximumf %32, %33 : vector<8x1x120xf32>
    %35 = vector.extract_strided_slice %19 {offsets = [0, 10, 0], sizes = [8, 1, 120], strides = [1, 1, 1]} : vector<8x24x120xf32> to vector<8x1x120xf32>
    %36 = vector.extract_strided_slice %19 {offsets = [0, 11, 0], sizes = [8, 1, 120], strides = [1, 1, 1]} : vector<8x24x120xf32> to vector<8x1x120xf32>
    %37 = arith.maximumf %35, %36 : vector<8x1x120xf32>
    %38 = vector.extract_strided_slice %19 {offsets = [0, 12, 0], sizes = [8, 1, 120], strides = [1, 1, 1]} : vector<8x24x120xf32> to vector<8x1x120xf32>
    %39 = vector.extract_strided_slice %19 {offsets = [0, 13, 0], sizes = [8, 1, 120], strides = [1, 1, 1]} : vector<8x24x120xf32> to vector<8x1x120xf32>
    %40 = arith.maximumf %38, %39 : vector<8x1x120xf32>
    %41 = vector.extract_strided_slice %19 {offsets = [0, 14, 0], sizes = [8, 1, 120], strides = [1, 1, 1]} : vector<8x24x120xf32> to vector<8x1x120xf32>
    %42 = vector.extract_strided_slice %19 {offsets = [0, 15, 0], sizes = [8, 1, 120], strides = [1, 1, 1]} : vector<8x24x120xf32> to vector<8x1x120xf32>
    %43 = arith.maximumf %41, %42 : vector<8x1x120xf32>
    %44 = vector.extract_strided_slice %19 {offsets = [0, 16, 0], sizes = [8, 1, 120], strides = [1, 1, 1]} : vector<8x24x120xf32> to vector<8x1x120xf32>
    %45 = vector.extract_strided_slice %19 {offsets = [0, 17, 0], sizes = [8, 1, 120], strides = [1, 1, 1]} : vector<8x24x120xf32> to vector<8x1x120xf32>
    %46 = arith.maximumf %44, %45 : vector<8x1x120xf32>
    %47 = vector.extract_strided_slice %19 {offsets = [0, 18, 0], sizes = [8, 1, 120], strides = [1, 1, 1]} : vector<8x24x120xf32> to vector<8x1x120xf32>
    %48 = vector.extract_strided_slice %19 {offsets = [0, 19, 0], sizes = [8, 1, 120], strides = [1, 1, 1]} : vector<8x24x120xf32> to vector<8x1x120xf32>
    %49 = arith.maximumf %47, %48 : vector<8x1x120xf32>
    %50 = vector.extract_strided_slice %19 {offsets = [0, 20, 0], sizes = [8, 1, 120], strides = [1, 1, 1]} : vector<8x24x120xf32> to vector<8x1x120xf32>
    %51 = vector.extract_strided_slice %19 {offsets = [0, 21, 0], sizes = [8, 1, 120], strides = [1, 1, 1]} : vector<8x24x120xf32> to vector<8x1x120xf32>
    %52 = arith.maximumf %50, %51 : vector<8x1x120xf32>
    %53 = vector.extract_strided_slice %19 {offsets = [0, 22, 0], sizes = [8, 1, 120], strides = [1, 1, 1]} : vector<8x24x120xf32> to vector<8x1x120xf32>
    %54 = vector.extract_strided_slice %19 {offsets = [0, 23, 0], sizes = [8, 1, 120], strides = [1, 1, 1]} : vector<8x24x120xf32> to vector<8x1x120xf32>
    %55 = arith.maximumf %53, %54 : vector<8x1x120xf32>
    %56 = tpu.concatenate %22, %25, %28, %31, %34, %37, %40, %43, %46, %49, %52, %55 in 1 : vector<8x1x120xf32>, vector<8x1x120xf32>, vector<8x1x120xf32>, vector<8x1x120xf32>, vector<8x1x120xf32>, vector<8x1x120xf32>, vector<8x1x120xf32>, vector<8x1x120xf32>, vector<8x1x120xf32>, vector<8x1x120xf32>, vector<8x1x120xf32>, vector<8x1x120xf32> -> vector<8x12x120xf32>
    %57 = vector.extract_strided_slice %56 {offsets = [0, 0, 0], sizes = [8, 8, 120], strides = [1, 1, 1]} : vector<8x12x120xf32> to vector<8x8x120xf32>
    %58 = vector.extract_strided_slice %56 {offsets = [0, 1, 0], sizes = [8, 8, 120], strides = [1, 1, 1]} : vector<8x12x120xf32> to vector<8x8x120xf32>
    %59 = vector.extract_strided_slice %56 {offsets = [0, 2, 0], sizes = [8, 8, 120], strides = [1, 1, 1]} : vector<8x12x120xf32> to vector<8x8x120xf32>
    %60 = vector.extract_strided_slice %56 {offsets = [0, 3, 0], sizes = [8, 8, 120], strides = [1, 1, 1]} : vector<8x12x120xf32> to vector<8x8x120xf32>
    %61 = vector.extract_strided_slice %56 {offsets = [0, 4, 0], sizes = [8, 8, 120], strides = [1, 1, 1]} : vector<8x12x120xf32> to vector<8x8x120xf32>
    %62 = tpu.concatenate %57, %58, %59, %60, %61 in 2 : vector<8x8x120xf32>, vector<8x8x120xf32>, vector<8x8x120xf32>, vector<8x8x120xf32>, vector<8x8x120xf32> -> vector<8x8x600xf32>
    %63 = vector.shape_cast %62 : vector<8x8x600xf32> to vector<64x600xf32>
    %64 = arith.truncf %63 : vector<64x600xf32> to vector<64x600xbf16>
    %c0_7 = arith.constant 0 : index
    %c0_8 = arith.constant 0 : index
    %65 = vector.load %arg4[%c0_7, %c0_8] : memref<600x160xbf16, #tpu.memory_space<vmem>>, vector<600x160xbf16>
    %cst_9 = arith.constant dense<0.000000e+00> : vector<64x160xf32>
    %66 = tpu.matmul %64, %65, %cst_9 {dimension_numbers = #tpu.dot_dimension_numbers<[1], [0], [0], [1], [0, 0, 1, 1], [], []>} : vector<64x600xbf16>, vector<600x160xbf16>, vector<64x160xf32> -> vector<64x160xf32>
    %c0_10 = arith.constant 0 : index
    %c0_11 = arith.constant 0 : index
    %67 = vector.load %arg5[%c0_10, %c0_11] : memref<1x160xf32, #tpu.memory_space<vmem>>, vector<1x160xf32>
    %68 = vector.broadcast %67 : vector<1x160xf32> to vector<64x160xf32>
    %69 = arith.addf %66, %68 : vector<64x160xf32>
    %cst_12 = arith.constant 0.000000e+00 : f32
    %70 = vector.broadcast %cst_12 : f32 to vector<64x160xf32>
    %71 = arith.maximumf %69, %70 : vector<64x160xf32>
    %72 = vector.shape_cast %71 : vector<64x160xf32> to vector<8x8x160xf32>
    %73 = vector.extract_strided_slice %72 {offsets = [0, 0, 0], sizes = [8, 8, 80], strides = [1, 1, 1]} : vector<8x8x160xf32> to vector<8x8x80xf32>
    %74 = vector.extract_strided_slice %72 {offsets = [0, 0, 80], sizes = [8, 8, 80], strides = [1, 1, 1]} : vector<8x8x160xf32> to vector<8x8x80xf32>
    %75 = arith.maximumf %73, %74 : vector<8x8x80xf32>
    %76 = vector.extract_strided_slice %75 {offsets = [0, 0, 0], sizes = [8, 1, 80], strides = [1, 1, 1]} : vector<8x8x80xf32> to vector<8x1x80xf32>
    %77 = vector.extract_strided_slice %75 {offsets = [0, 1, 0], sizes = [8, 1, 80], strides = [1, 1, 1]} : vector<8x8x80xf32> to vector<8x1x80xf32>
    %78 = arith.maximumf %76, %77 : vector<8x1x80xf32>
    %79 = vector.extract_strided_slice %75 {offsets = [0, 2, 0], sizes = [8, 1, 80], strides = [1, 1, 1]} : vector<8x8x80xf32> to vector<8x1x80xf32>
    %80 = vector.extract_strided_slice %75 {offsets = [0, 3, 0], sizes = [8, 1, 80], strides = [1, 1, 1]} : vector<8x8x80xf32> to vector<8x1x80xf32>
    %81 = arith.maximumf %79, %80 : vector<8x1x80xf32>
    %82 = vector.extract_strided_slice %75 {offsets = [0, 4, 0], sizes = [8, 1, 80], strides = [1, 1, 1]} : vector<8x8x80xf32> to vector<8x1x80xf32>
    %83 = vector.extract_strided_slice %75 {offsets = [0, 5, 0], sizes = [8, 1, 80], strides = [1, 1, 1]} : vector<8x8x80xf32> to vector<8x1x80xf32>
    %84 = arith.maximumf %82, %83 : vector<8x1x80xf32>
    %85 = vector.extract_strided_slice %75 {offsets = [0, 6, 0], sizes = [8, 1, 80], strides = [1, 1, 1]} : vector<8x8x80xf32> to vector<8x1x80xf32>
    %86 = vector.extract_strided_slice %75 {offsets = [0, 7, 0], sizes = [8, 1, 80], strides = [1, 1, 1]} : vector<8x8x80xf32> to vector<8x1x80xf32>
    %87 = arith.maximumf %85, %86 : vector<8x1x80xf32>
    %88 = tpu.concatenate %78, %81, %84, %87 in 1 : vector<8x1x80xf32>, vector<8x1x80xf32>, vector<8x1x80xf32>, vector<8x1x80xf32> -> vector<8x4x80xf32>
    %89 = vector.shape_cast %88 : vector<8x4x80xf32> to vector<8x320xf32>
    %90 = arith.truncf %89 : vector<8x320xf32> to vector<8x320xbf16>
    %c0_13 = arith.constant 0 : index
    %c0_14 = arith.constant 0 : index
    %91 = vector.load %arg6[%c0_13, %c0_14] : memref<320x128xbf16, #tpu.memory_space<vmem>>, vector<320x128xbf16>
    %cst_15 = arith.constant dense<0.000000e+00> : vector<8x128xf32>
    %92 = tpu.matmul %90, %91, %cst_15 {dimension_numbers = #tpu.dot_dimension_numbers<[1], [0], [0], [1], [0, 0, 1, 1], [], []>} : vector<8x320xbf16>, vector<320x128xbf16>, vector<8x128xf32> -> vector<8x128xf32>
    %c0_16 = arith.constant 0 : index
    %c0_17 = arith.constant 0 : index
    %93 = vector.load %arg7[%c0_16, %c0_17] : memref<1x128xf32, #tpu.memory_space<vmem>>, vector<1x128xf32>
    %94 = vector.broadcast %93 : vector<1x128xf32> to vector<8x128xf32>
    %95 = arith.addf %92, %94 : vector<8x128xf32>
    %cst_18 = arith.constant 0.000000e+00 : f32
    %96 = vector.broadcast %cst_18 : f32 to vector<8x128xf32>
    %97 = arith.maximumf %95, %96 : vector<8x128xf32>
    %98 = arith.truncf %97 : vector<8x128xf32> to vector<8x128xbf16>
    %c0_19 = arith.constant 0 : index
    %c0_20 = arith.constant 0 : index
    %99 = vector.load %arg8[%c0_19, %c0_20] : memref<128x128xbf16, #tpu.memory_space<vmem>>, vector<128x128xbf16>
    %cst_21 = arith.constant dense<0.000000e+00> : vector<8x128xf32>
    %100 = tpu.matmul %98, %99, %cst_21 {dimension_numbers = #tpu.dot_dimension_numbers<[1], [0], [0], [1], [0, 0, 1, 1], [], []>} : vector<8x128xbf16>, vector<128x128xbf16>, vector<8x128xf32> -> vector<8x128xf32>
    %c0_22 = arith.constant 0 : index
    %c0_23 = arith.constant 0 : index
    %101 = vector.load %arg9[%c0_22, %c0_23] : memref<1x128xf32, #tpu.memory_space<vmem>>, vector<1x128xf32>
    %102 = vector.broadcast %101 : vector<1x128xf32> to vector<8x128xf32>
    %103 = arith.addf %100, %102 : vector<8x128xf32>
    %cst_24 = arith.constant dense<0xFF800000> : vector<8xf32>
    %104 = vector.multi_reduction <maximumf>, %103, %cst_24 [1] : vector<8x128xf32> to vector<8xf32>
    %105 = vector.shape_cast %104 : vector<8xf32> to vector<8x1xf32>
    %106 = vector.broadcast %105 : vector<8x1xf32> to vector<8x128xf32>
    %107 = arith.subf %103, %106 : vector<8x128xf32>
    %108 = math.exp %107 : vector<8x128xf32>
    %cst_25 = arith.constant dense<0.000000e+00> : vector<8xf32>
    %109 = vector.multi_reduction <add>, %108, %cst_25 [1] : vector<8x128xf32> to vector<8xf32>
    %110 = vector.shape_cast %109 : vector<8xf32> to vector<8x1xf32>
    %111 = vector.broadcast %110 : vector<8x1xf32> to vector<8x128xf32>
    %112 = arith.divf %108, %111 : vector<8x128xf32>
    %c0_26 = arith.constant 0 : index
    %c0_27 = arith.constant 0 : index
    %113 = vector.load %arg10[%c0_26, %c0_27] : memref<8x128xf32, #tpu.memory_space<vmem>>, vector<8x128xf32>
    tpu.vector_store %arg10[%c0_26, %c0_27], %112 {strides = array<i32>} : memref<8x128xf32, #tpu.memory_space<vmem>>, vector<8x128xf32>,
    return
  }
  func.func @transform_0(%arg0: i32) -> (i32, i32, i32) {
    %c0_i32 = arith.constant 0 : i32
    %c0_i32_0 = arith.constant 0 : i32
    %c0_i32_1 = arith.constant 0 : i32
    return %arg0, %c0_i32, %c0_i32_0 : i32, i32, i32
  }
  func.func @transform_1(%arg0: i32) -> (i32, i32) {
    %c0_i32 = arith.constant 0 : i32
    %c0_i32_0 = arith.constant 0 : i32
    %c0_i32_1 = arith.constant 0 : i32
    return %c0_i32, %c0_i32_0 : i32, i32
  }
  func.func @transform_2(%arg0: i32) -> (i32, i32) {
    %c0_i32 = arith.constant 0 : i32
    %c0_i32_0 = arith.constant 0 : i32
    %c0_i32_1 = arith.constant 0 : i32
    return %c0_i32, %c0_i32_0 : i32, i32
  }
  func.func @transform_3(%arg0: i32) -> (i32, i32) {
    %c0_i32 = arith.constant 0 : i32
    %c0_i32_0 = arith.constant 0 : i32
    %c0_i32_1 = arith.constant 0 : i32
    return %c0_i32, %c0_i32_0 : i32, i32
  }
  func.func @transform_4(%arg0: i32) -> (i32, i32) {
    %c0_i32 = arith.constant 0 : i32
    %c0_i32_0 = arith.constant 0 : i32
    %c0_i32_1 = arith.constant 0 : i32
    return %c0_i32, %c0_i32_0 : i32, i32
  }
  func.func @transform_5(%arg0: i32) -> (i32, i32) {
    %c0_i32 = arith.constant 0 : i32
    %c0_i32_0 = arith.constant 0 : i32
    %c0_i32_1 = arith.constant 0 : i32
    return %c0_i32, %c0_i32_0 : i32, i32
  }
  func.func @transform_6(%arg0: i32) -> (i32, i32) {
    %c0_i32 = arith.constant 0 : i32
    %c0_i32_0 = arith.constant 0 : i32
    %c0_i32_1 = arith.constant 0 : i32
    return %c0_i32, %c0_i32_0 : i32, i32
  }
  func.func @transform_7(%arg0: i32) -> (i32, i32) {
    %c0_i32 = arith.constant 0 : i32
    %c0_i32_0 = arith.constant 0 : i32
    %c0_i32_1 = arith.constant 0 : i32
    return %c0_i32, %c0_i32_0 : i32, i32
  }
  func.func @transform_8(%arg0: i32) -> (i32, i32) {
    %c0_i32 = arith.constant 0 : i32
    %c0_i32_0 = arith.constant 0 : i32
    %c0_i32_1 = arith.constant 0 : i32
    return %c0_i32, %c0_i32_0 : i32, i32
  }
  func.func @transform_9(%arg0: i32) -> (i32, i32) {
    %c0_i32 = arith.constant 0 : i32
    %c0_i32_0 = arith.constant 0 : i32
    return %arg0, %c0_i32 : i32, i32
  }
}

</mosaic_0001>

<llo_original>
// kernel: tile.13
$region0: #{tile.13}
  #allocation0 [shape = 's32[1]{0}', space=sflag, size = 0x4, scoped, tag = 'scoped memory for tile.13']
  %s0 = inlined_call_operand.vmem [shape: f32[10], index: 0, kind: input, shape index: {}]
  %s1 = inlined_call_operand.vmem [shape: f32[24,10], index: 1, kind: output, shape index: {}]
  // Predicated region
  $region2: #{tile.13} parent=0 // pred_check
    _
  $region3: #{tile.13} parent=0 // pred_check_branch
    %3 = sbr.rel (0) target = $region5
  $region4: #{tile.13} parent=0 // pred_region
    _
  $region5: #{tile.13} parent=0 // pred_fallthru
    _
  %v4 = vld [vmem:[%s0] ss:$0 sm:$0xff]
  %5 = vst [vmem:[%s1] sm:$0xff] %v4
  %s6 = scalar_lea.vmem %s1, 8
  %7 = vst [vmem:[%s6] sm:$0xff] %v4
  %s8 = scalar_lea.vmem %s1, 16
  %9 = vst [vmem:[%s8] sm:$0xff] %v4

// kernel: tile.14
$region0: #{tile.14}
  %s0 = inlined_call_operand.vmem [shape: f32[24,10], index: 0, kind: input, shape index: {}]
  %s1 = inlined_call_operand.vmem [shape: f32[1,240], index: 1, kind: output, shape index: {}]
  $region1: #{tile.14} parent=0
    #allocation0 [shape = 'u8[8192]{0}', space=vmem, size = 0x2000, scoped, tag = 'scoped mem for output reshape']
    %v2 = vld [vmem:[%s0] sm:$0x1]
    %vm3 = vcmask 80896
    %4 = vst.msk [vmem:[#allocation0] sm:$0x1] %vm3, %v2
    %s5 = scalar_lea.vmem %s0, 12
    %v6 = vld [vmem:[%s5] sm:$0x1]
    %s7 = scalar_lea.vmem %s0, 12
    %v8 = vld [vmem:[%s7] sm:$0x1]
    %vm9 = vcmask 64512
    %v10 = vsel %vm9, %v8, %v6
    %11 = vrot.lane.b32.xlu0 %v10, 120
    %v12 = vpop.permute.xlu0 %11
    %vm13 = vcmask 15360
    %s14 = scalar_lea.vmem [#allocation0], 8
    %15 = vst.msk [vmem:[%s14] sm:$0x1] %vm13, %v12
    %vm16 = vcmask 1048512
    %17 = vst.msk [vmem:[#allocation0] sm:$0x1] %vm16, %v12
    %s18 = scalar_lea.vmem %s0, 11
    %v19 = vld [vmem:[%s18] sm:$0x1]
    %20 = vrot.lane.b32.xlu0 %v19, 110
    %v21 = vpop.permute.xlu0 %20
    %vm22 = vcmask 982896
    %23 = vst.msk [vmem:[#allocation0] sm:$0x1] %vm22, %v21
    %s24 = scalar_lea.vmem %s0, 23
    %v25 = vld [vmem:[%s24] sm:$0x1]
    %26 = vrot.lane.b32.xlu0 %v25, 102
    %v27 = vpop.permute.xlu0 %26
    %vm28 = vcmask 917296
    %s29 = scalar_lea.vmem [#allocation0], 8
    %30 = vst.msk [vmem:[%s29] sm:$0x1] %vm28, %v27
    %s31 = scalar_lea.vmem %s0, 10
    %v32 = vld [vmem:[%s31] sm:$0x1]
    %33 = vrot.lane.b32.xlu0 %v32, 100
    %v34 = vpop.permute.xlu0 %33
    %vm35 = vcmask 900896
    %36 = vst.msk [vmem:[#allocation0] sm:$0x1] %vm35, %v34
    %s37 = scalar_lea.vmem %s0, 22
    %v38 = vld [vmem:[%s37] sm:$0x1]
    %39 = vrot.lane.b32.xlu0 %v38, 92
    %v40 = vpop.permute.xlu0 %39
    %vm41 = vcmask 835296
    %s42 = scalar_lea.vmem [#allocation0], 8
    %43 = vst.msk [vmem:[%s42] sm:$0x1] %vm41, %v40
    %s44 = scalar_lea.vmem %s0, 9
    %v45 = vld [vmem:[%s44] sm:$0x1]
    %46 = vrot.lane.b32.xlu0 %v45, 90
    %v47 = vpop.permute.xlu0 %46
    %vm48 = vcmask 818896
    %49 = vst.msk [vmem:[#allocation0] sm:$0x1] %vm48, %v47
    %s50 = scalar_lea.vmem %s0, 21
    %v51 = vld [vmem:[%s50] sm:$0x1]
    %52 = vrot.lane.b32.xlu0 %v51, 82
    %v53 = vpop.permute.xlu0 %52
    %vm54 = vcmask 753296
    %s55 = scalar_lea.vmem [#allocation0], 8
    %56 = vst.msk [vmem:[%s55] sm:$0x1] %vm54, %v53
    %s57 = scalar_lea.vmem %s0, 8
    %v58 = vld [vmem:[%s57] sm:$0x1]
    %59 = vrot.lane.b32.xlu0 %v58, 80
    %v60 = vpop.permute.xlu0 %59
    %vm61 = vcmask 736896
    %62 = vst.msk [vmem:[#allocation0] sm:$0x1] %vm61, %v60
    %s63 = scalar_lea.vmem %s0, 20
    %v64 = vld [vmem:[%s63] sm:$0x1]
    %65 = vrot.lane.b32.xlu0 %v64, 72
    %v66 = vpop.permute.xlu0 %65
    %vm67 = vcmask 671296
    %s68 = scalar_lea.vmem [#allocation0], 8
    %69 = vst.msk [vmem:[%s68] sm:$0x1] %vm67, %v66
    %s70 = scalar_lea.vmem %s0, 7
    %v71 = vld [vmem:[%s70] sm:$0x1]
    %72 = vrot.lane.b32.xlu0 %v71, 70
    %v73 = vpop.permute.xlu0 %72
    %vm74 = vcmask 654896
    %75 = vst.msk [vmem:[#allocation0] sm:$0x1] %vm74, %v73
    %s76 = scalar_lea.vmem %s0, 19
    %v77 = vld [vmem:[%s76] sm:$0x1]
    %78 = vrot.lane.b32.xlu0 %v77, 62
    %v79 = vpop.permute.xlu0 %78
    %vm80 = vcmask 589296
    %s81 = scalar_lea.vmem [#allocation0], 8
    %82 = vst.msk [vmem:[%s81] sm:$0x1] %vm80, %v79
    %s83 = scalar_lea.vmem %s0, 6
    %v84 = vld [vmem:[%s83] sm:$0x1]
    %85 = vrot.lane.b32.xlu0 %v84, 60
    %v86 = vpop.permute.xlu0 %85
    %vm87 = vcmask 572896
    %88 = vst.msk [vmem:[#allocation0] sm:$0x1] %vm87, %v86
    %s89 = scalar_lea.vmem %s0, 18
    %v90 = vld [vmem:[%s89] sm:$0x1]
    %91 = vrot.lane.b32.xlu0 %v90, 52
    %v92 = vpop.permute.xlu0 %91
    %vm93 = vcmask 507296
    %s94 = scalar_lea.vmem [#allocation0], 8
    %95 = vst.msk [vmem:[%s94] sm:$0x1] %vm93, %v92
    %s96 = scalar_lea.vmem %s0, 5
    %v97 = vld [vmem:[%s96] sm:$0x1]
    %98 = vrot.lane.b32.xlu0 %v97, 50
    %v99 = vpop.permute.xlu0 %98
    %vm100 = vcmask 490896
    %101 = vst.msk [vmem:[#allocation0] sm:$0x1] %vm100, %v99
    %s102 = scalar_lea.vmem %s0, 17
    %v103 = vld [vmem:[%s102] sm:$0x1]
    %104 = vrot.lane.b32.xlu0 %v103, 42
    %v105 = vpop.permute.xlu0 %104
    %vm106 = vcmask 425296
    %s107 = scalar_lea.vmem [#allocation0], 8
    %108 = vst.msk [vmem:[%s107] sm:$0x1] %vm106, %v105
    %s109 = scalar_lea.vmem %s0, 4
    %v110 = vld [vmem:[%s109] sm:$0x1]
    %111 = vrot.lane.b32.xlu0 %v110, 40
    %v112 = vpop.permute.xlu0 %111
    %vm113 = vcmask 408896
    %114 = vst.msk [vmem:[#allocation0] sm:$0x1] %vm113, %v112
    %s115 = scalar_lea.vmem %s0, 16
    %v116 = vld [vmem:[%s115] sm:$0x1]
    %117 = vrot.lane.b32.xlu0 %v116, 32
    %v118 = vpop.permute.xlu0 %117
    %vm119 = vcmask 343296
    %s120 = scalar_lea.vmem [#allocation0], 8
    %121 = vst.msk [vmem:[%s120] sm:$0x1] %vm119, %v118
    %s122 = scalar_lea.vmem %s0, 3
    %v123 = vld [vmem:[%s122] sm:$0x1]
    %124 = vrot.lane.b32.xlu0 %v123, 30
    %v125 = vpop.permute.xlu0 %124
    %vm126 = vcmask 326896
    %127 = vst.msk [vmem:[#allocation0] sm:$0x1] %vm126, %v125
    %s128 = scalar_lea.vmem %s0, 15
    %v129 = vld [vmem:[%s128] sm:$0x1]
    %130 = vrot.lane.b32.xlu0 %v129, 22
    %v131 = vpop.permute.xlu0 %130
    %vm132 = vcmask 261296
    %s133 = scalar_lea.vmem [#allocation0], 8
    %134 = vst.msk [vmem:[%s133] sm:$0x1] %vm132, %v131
    %s135 = scalar_lea.vmem %s0, 2
    %v136 = vld [vmem:[%s135] sm:$0x1]
    %137 = vrot.lane.b32.xlu0 %v136, 20
    %v138 = vpop.permute.xlu0 %137
    %vm139 = vcmask 244896
    %140 = vst.msk [vmem:[#allocation0] sm:$0x1] %vm139, %v138
    %s141 = scalar_lea.vmem %s0, 14
    %v142 = vld [vmem:[%s141] sm:$0x1]
    %143 = vrot.lane.b32.xlu0 %v142, 12
    %v144 = vpop.permute.xlu0 %143
    %vm145 = vcmask 179296
    %s146 = scalar_lea.vmem [#allocation0], 8
    %147 = vst.msk [vmem:[%s146] sm:$0x1] %vm145, %v144
    %s148 = scalar_lea.vmem %s0, 1
    %v149 = vld [vmem:[%s148] sm:$0x1]
    %150 = vrot.lane.b32.xlu0 %v149, 10
    %v151 = vpop.permute.xlu0 %150
    %vm152 = vcmask 162896
    %153 = vst.msk [vmem:[#allocation0] sm:$0x1] %vm152, %v151
    %s154 = scalar_lea.vmem %s0, 13
    %v155 = vld [vmem:[%s154] sm:$0x1]
    %156 = vrot.lane.b32.xlu0 %v155, 2
    %v157 = vpop.permute.xlu0 %156
    %vm158 = vcmask 97296
    %s159 = scalar_lea.vmem [#allocation0], 8
    %160 = vst.msk [vmem:[%s159] sm:$0x1] %vm158, %v157
    %s162 = sshllo.u32 0, 1
    %v164 = vld [vmem:[#allocation0] sm:%s162]
    %s165 = sshllo.u32 0, 1
    %166 = vst [vmem:[%s1] sm:%s165] %v164
    %s167 = scalar_lea.vmem [#allocation0], 8
    %v168 = vld [vmem:[%s167] sm:%s162]
    %s169 = sshllo.u32 0, 1
    %s170 = scalar_lea.vmem %s1, 1
    %171 = vst [vmem:[%s170] sm:%s169] %v168

// kernel: tile.18
$region0: #{tile.18}
  #allocation0 [shape = 's32[1]{0}', space=sflag, size = 0x4, scoped, tag = 'scoped memory for tile.18']
  %s0 = inlined_call_operand.vmem [shape: f32[20], index: 0, kind: input, shape index: {}]
  %s1 = inlined_call_operand.vmem [shape: f32[8,20], index: 1, kind: output, shape index: {}]
  // Predicated region
  $region2: #{tile.18} parent=0 // pred_check
    _
  $region3: #{tile.18} parent=0 // pred_check_branch
    %3 = sbr.rel (0) target = $region5
  $region4: #{tile.18} parent=0 // pred_region
    _
  $region5: #{tile.18} parent=0 // pred_fallthru
    _
  %v4 = vld [vmem:[%s0] ss:$0 sm:$0xff]
  %5 = vst [vmem:[%s1] sm:$0xff] %v4

// kernel: tile.19
$region0: #{tile.19}
  %s0 = inlined_call_operand.vmem [shape: f32[8,20], index: 0, kind: input, shape index: {}]
  %s1 = inlined_call_operand.vmem [shape: f32[1,160], index: 1, kind: output, shape index: {}]
  $region1: #{tile.19} parent=0
    #allocation0 [shape = 'u8[8192]{0}', space=vmem, size = 0x2000, scoped, tag = 'scoped mem for output reshape']
    %v2 = vld [vmem:[%s0] sm:$0x1]
    %vm3 = vcmask 162816
    %4 = vst.msk [vmem:[#allocation0] sm:$0x1] %vm3, %v2
    %s5 = scalar_lea.vmem %s0, 6
    %v6 = vld [vmem:[%s5] sm:$0x1]
    %s7 = scalar_lea.vmem %s0, 6
    %v8 = vld [vmem:[%s7] sm:$0x1]
    %vm9 = vcmask 64512
    %v10 = vsel %vm9, %v8, %v6
    %11 = vrot.lane.b32.xlu0 %v10, 120
    %v12 = vpop.permute.xlu0 %11
    %vm13 = vcmask 97280
    %s14 = scalar_lea.vmem [#allocation0], 8
    %15 = vst.msk [vmem:[%s14] sm:$0x1] %vm13, %v12
    %vm16 = vcmask 1048512
    %17 = vst.msk [vmem:[#allocation0] sm:$0x1] %vm16, %v12
    %s18 = scalar_lea.vmem %s0, 5
    %v19 = vld [vmem:[%s18] sm:$0x1]
    %20 = vrot.lane.b32.xlu0 %v19, 100
    %v21 = vpop.permute.xlu0 %20
    %vm22 = vcmask 982816
    %23 = vst.msk [vmem:[#allocation0] sm:$0x1] %vm22, %v21
    %s24 = scalar_lea.vmem %s0, 4
    %v25 = vld [vmem:[%s24] sm:$0x1]
    %26 = vrot.lane.b32.xlu0 %v25, 80
    %v27 = vpop.permute.xlu0 %26
    %vm28 = vcmask 818816
    %29 = vst.msk [vmem:[#allocation0] sm:$0x1] %vm28, %v27
    %s30 = scalar_lea.vmem %s0, 3
    %v31 = vld [vmem:[%s30] sm:$0x1]
    %32 = vrot.lane.b32.xlu0 %v31, 60
    %v33 = vpop.permute.xlu0 %32
    %vm34 = vcmask 654816
    %35 = vst.msk [vmem:[#allocation0] sm:$0x1] %vm34, %v33
    %s36 = scalar_lea.vmem %s0, 2
    %v37 = vld [vmem:[%s36] sm:$0x1]
    %38 = vrot.lane.b32.xlu0 %v37, 40
    %v39 = vpop.permute.xlu0 %38
    %vm40 = vcmask 490816
    %41 = vst.msk [vmem:[#allocation0] sm:$0x1] %vm40, %v39
    %s42 = scalar_lea.vmem %s0, 1
    %v43 = vld [vmem:[%s42] sm:$0x1]
    %44 = vrot.lane.b32.xlu0 %v43, 20
    %v45 = vpop.permute.xlu0 %44
    %vm46 = vcmask 326816
    %47 = vst.msk [vmem:[#allocation0] sm:$0x1] %vm46, %v45
    %s48 = scalar_lea.vmem %s0, 7
    %v49 = vld [vmem:[%s48] sm:$0x1]
    %50 = vrot.lane.b32.xlu0 %v49, 12
    %v51 = vpop.permute.xlu0 %50
    %vm52 = vcmask 261216
    %s53 = scalar_lea.vmem [#allocation0], 8
    %54 = vst.msk [vmem:[%s53] sm:$0x1] %vm52, %v51
    %s56 = sshllo.u32 0, 1
    %v58 = vld [vmem:[#allocation0] sm:%s56]
    %s59 = sshllo.u32 0, 1
    %60 = vst [vmem:[%s1] sm:%s59] %v58
    %s61 = scalar_lea.vmem [#allocation0], 8
    %v62 = vld [vmem:[%s61] sm:%s56]
    %s63 = sshllo.u32 0, 1
    %s64 = scalar_lea.vmem %s1, 1
    %65 = vst [vmem:[%s64] sm:%s63] %v62

// kernel: cnn_forward.1
$region0: #{cnn_forward.1}
  #allocation0 [shape = 'u32[]', space=smem, size = 0x4, offset = 0x4, fixed_abs, tag = 'smem constant byte address 0x4 - core index']
  #allocation1 [shape = 'u32[144,128]{1,0:T(1,128)}', space=vmem, size = 0x12000, scoped, tag = 'internal scratch']
  %s0 = inlined_call_operand.vmem [shape: f32[8,28,28], index: 0, kind: input, shape index: {}]
  %s1 = inlined_call_operand.vmem [shape: bf16[140,240], index: 1, kind: input, shape index: {}]
  %s2 = inlined_call_operand.vmem [shape: f32[1,240], index: 2, kind: input, shape index: {}]
  %s3 = inlined_call_operand.vmem [shape: bf16[600,160], index: 3, kind: input, shape index: {}]
  %s4 = inlined_call_operand.vmem [shape: f32[1,160], index: 4, kind: input, shape index: {}]
  %s5 = inlined_call_operand.vmem [shape: bf16[320,128], index: 5, kind: input, shape index: {}]
  %s6 = inlined_call_operand.vmem [shape: f32[1,128], index: 6, kind: input, shape index: {}]
  %s7 = inlined_call_operand.vmem [shape: bf16[128,128], index: 7, kind: input, shape index: {}]
  %s8 = inlined_call_operand.vmem [shape: f32[1,128], index: 8, kind: input, shape index: {}]
  %s9 = inlined_call_operand.vmem [shape: f32[8,128], index: 9, kind: output, shape index: {}]
  %s10 = sld [smem:[#allocation0]]
  $region46: #{cnn_forward.1} parent=0
    _
  %s12 = ssub.s32 1, %s10
  %s13 = scalar_select 0, %s12, %s10
  // Predicated region
  $region2: #{cnn_forward.1} parent=0 // pred_check
    _
  $region3: #{cnn_forward.1} parent=0 // pred_check_branch
    %15 = sbr.rel (0) target = $region5
  $region4: #{cnn_forward.1} parent=0 // pred_region
    _
  $region5: #{cnn_forward.1} parent=0 // pred_fallthru
    _
  // Predicated region
  $region6: #{cnn_forward.1} parent=0 // pred_check
    _
  $region7: #{cnn_forward.1} parent=0 // pred_check_branch
    %17 = sbr.rel (0) target = $region9
  $region8: #{cnn_forward.1} parent=0 // pred_region
    _
  $region9: #{cnn_forward.1} parent=0 // pred_fallthru
    _
  // Predicated region
  $region10: #{cnn_forward.1} parent=0 // pred_check
    _
  $region11: #{cnn_forward.1} parent=0 // pred_check_branch
    %19 = sbr.rel (0) target = $region13
  $region12: #{cnn_forward.1} parent=0 // pred_region
    _
  $region13: #{cnn_forward.1} parent=0 // pred_fallthru
    _
  // Predicated region
  $region14: #{cnn_forward.1} parent=0 // pred_check
    _
  $region15: #{cnn_forward.1} parent=0 // pred_check_branch
    %21 = sbr.rel (0) target = $region17
  $region16: #{cnn_forward.1} parent=0 // pred_region
    _
  $region17: #{cnn_forward.1} parent=0 // pred_fallthru
    _
  // Predicated region
  $region18: #{cnn_forward.1} parent=0 // pred_check
    _
  $region19: #{cnn_forward.1} parent=0 // pred_check_branch
    %23 = sbr.rel (0) target = $region21
  $region20: #{cnn_forward.1} parent=0 // pred_region
    _
  $region21: #{cnn_forward.1} parent=0 // pred_fallthru
    _
  // Predicated region
  $region22: #{cnn_forward.1} parent=0 // pred_check
    _
  $region23: #{cnn_forward.1} parent=0 // pred_check_branch
    %25 = sbr.rel (0) target = $region25
  $region24: #{cnn_forward.1} parent=0 // pred_region
    _
  $region25: #{cnn_forward.1} parent=0 // pred_fallthru
    _
  // Predicated region
  $region26: #{cnn_forward.1} parent=0 // pred_check
    _
  $region27: #{cnn_forward.1} parent=0 // pred_check_branch
    %27 = sbr.rel (0) target = $region29
  $region28: #{cnn_forward.1} parent=0 // pred_region
    _
  $region29: #{cnn_forward.1} parent=0 // pred_fallthru
    _
  // Predicated region
  $region30: #{cnn_forward.1} parent=0 // pred_check
    _
  $region31: #{cnn_forward.1} parent=0 // pred_check_branch
    %29 = sbr.rel (0) target = $region33
  $region32: #{cnn_forward.1} parent=0 // pred_region
    _
  $region33: #{cnn_forward.1} parent=0 // pred_fallthru
    _
  // Predicated region
  $region34: #{cnn_forward.1} parent=0 // pred_check
    _
  $region35: #{cnn_forward.1} parent=0 // pred_check_branch
    %31 = sbr.rel (0) target = $region37
  $region36: #{cnn_forward.1} parent=0 // pred_region
    _
  $region37: #{cnn_forward.1} parent=0 // pred_fallthru
    _
  %v33 = vld [vmem:[%s0] sm:$0xff]
  %v34 = vld [vmem:[%s0 + $0x8] sm:$0xff]
  %v35 = vld [vmem:[%s0 + $0x10] sm:$0xff]
  %v36 = vld [vmem:[%s0 + $0x18] sm:$0xf]
  %v37 = vld [vmem:[%s0 + $0x20] sm:$0xff]
  %v38 = vld [vmem:[%s0 + $0x28] sm:$0xff]
  %v39 = vld [vmem:[%s0 + $0x30] sm:$0xff]
  %v40 = vld [vmem:[%s0 + $0x38] sm:$0xf]
  %v41 = vld [vmem:[%s0 + $0x40] sm:$0xff]
  %v42 = vld [vmem:[%s0 + $0x48] sm:$0xff]
  %v43 = vld [vmem:[%s0 + $0x50] sm:$0xff]
  %v44 = vld [vmem:[%s0 + $0x58] sm:$0xf]
  %v45 = vld [vmem:[%s0 + $0x60] sm:$0xff]
  %v46 = vld [vmem:[%s0 + $0x68] sm:$0xff]
  %v47 = vld [vmem:[%s0 + $0x70] sm:$0xff]
  %v48 = vld [vmem:[%s0 + $0x78] sm:$0xf]
  %v49 = vld [vmem:[%s0 + $0x80] sm:$0xff]
  %v50 = vld [vmem:[%s0 + $0x88] sm:$0xff]
  %v51 = vld [vmem:[%s0 + $0x90] sm:$0xff]
  %v52 = vld [vmem:[%s0 + $0x98] sm:$0xf]
  %v53 = vld [vmem:[%s0 + $0xa0] sm:$0xff]
  %v54 = vld [vmem:[%s0 + $0xa8] sm:$0xff]
  %v55 = vld [vmem:[%s0 + $0xb0] sm:$0xff]
  %v56 = vld [vmem:[%s0 + $0xb8] sm:$0xf]
  %v57 = vld [vmem:[%s0 + $0xc0] sm:$0xff]
  %v58 = vld [vmem:[%s0 + $0xc8] sm:$0xff]
  %v59 = vld [vmem:[%s0 + $0xd0] sm:$0xff]
  %v60 = vld [vmem:[%s0 + $0xd8] sm:$0xf]
  %v61 = vld [vmem:[%s0 + $0xe0] sm:$0xff]
  %v62 = vld [vmem:[%s0 + $0xe8] sm:$0xff]
  %v63 = vld [vmem:[%s0 + $0xf0] sm:$0xff]
  %v64 = vld [vmem:[%s0 + $0xf8] sm:$0xf]
  %vm97 = vcmask 1046528
  %v98 = vrot.slane %v33, 1
  %v99 = vrot.slane %v34, 1
  %v100 = vsel %vm97, %v98, %v99
  %v101 = vrot.slane %v35, 1
  %v102 = vsel %vm97, %v99, %v101
  %v103 = vrot.slane %v36, 1
  %v104 = vsel %vm97, %v101, %v103
  %v105 = vrot.slane %v37, 1
  %v106 = vrot.slane %v38, 1
  %v107 = vsel %vm97, %v105, %v106
  %v108 = vrot.slane %v39, 1
  %v109 = vsel %vm97, %v106, %v108
  %v110 = vrot.slane %v40, 1
  %v111 = vsel %vm97, %v108, %v110
  %v112 = vrot.slane %v41, 1
  %v113 = vrot.slane %v42, 1
  %v114 = vsel %vm97, %v112, %v113
  %v115 = vrot.slane %v43, 1
  %v116 = vsel %vm97, %v113, %v115
  %v117 = vrot.slane %v44, 1
  %v118 = vsel %vm97, %v115, %v117
  %v119 = vrot.slane %v45, 1
  %v120 = vrot.slane %v46, 1
  %v121 = vsel %vm97, %v119, %v120
  %v122 = vrot.slane %v47, 1
  %v123 = vsel %vm97, %v120, %v122
  %v124 = vrot.slane %v48, 1
  %v125 = vsel %vm97, %v122, %v124
  %v126 = vrot.slane %v49, 1
  %v127 = vrot.slane %v50, 1
  %v128 = vsel %vm97, %v126, %v127
  %v129 = vrot.slane %v51, 1
  %v130 = vsel %vm97, %v127, %v129
  %v131 = vrot.slane %v52, 1
  %v132 = vsel %vm97, %v129, %v131
  %v133 = vrot.slane %v53, 1
  %v134 = vrot.slane %v54, 1
  %v135 = vsel %vm97, %v133, %v134
  %v136 = vrot.slane %v55, 1
  %v137 = vsel %vm97, %v134, %v136
  %v138 = vrot.slane %v56, 1
  %v139 = vsel %vm97, %v136, %v138
  %v140 = vrot.slane %v57, 1
  %v141 = vrot.slane %v58, 1
  %v142 = vsel %vm97, %v140, %v141
  %v143 = vrot.slane %v59, 1
  %v144 = vsel %vm97, %v141, %v143
  %v145 = vrot.slane %v60, 1
  %v146 = vsel %vm97, %v143, %v145
  %v147 = vrot.slane %v61, 1
  %v148 = vrot.slane %v62, 1
  %v149 = vsel %vm97, %v147, %v148
  %v150 = vrot.slane %v63, 1
  %v151 = vsel %vm97, %v148, %v150
  %v152 = vrot.slane %v64, 1
  %v153 = vsel %vm97, %v150, %v152
  %154 = vrot.lane.b32.xlu0 %v100, 28
  %v155 = vpop.permute.xlu0 %154
  %156 = vrot.lane.b32.xlu0 %v102, 28
  %v157 = vpop.permute.xlu0 %156
  %158 = vrot.lane.b32.xlu0 %v104, 28
  %v159 = vpop.permute.xlu0 %158
  %160 = vrot.lane.b32.xlu0 %v107, 28
  %v161 = vpop.permute.xlu0 %160
  %162 = vrot.lane.b32.xlu0 %v109, 28
  %v163 = vpop.permute.xlu0 %162
  %164 = vrot.lane.b32.xlu0 %v111, 28
  %v165 = vpop.permute.xlu0 %164
  %166 = vrot.lane.b32.xlu0 %v114, 28
  %v167 = vpop.permute.xlu0 %166
  %168 = vrot.lane.b32.xlu0 %v116, 28
  %v169 = vpop.permute.xlu0 %168
  %170 = vrot.lane.b32.xlu0 %v118, 28
  %v171 = vpop.permute.xlu0 %170
  %172 = vrot.lane.b32.xlu0 %v121, 28
  %v173 = vpop.permute.xlu0 %172
  %174 = vrot.lane.b32.xlu0 %v123, 28
  %v175 = vpop.permute.xlu0 %174
  %176 = vrot.lane.b32.xlu0 %v125, 28
  %v177 = vpop.permute.xlu0 %176
  %178 = vrot.lane.b32.xlu0 %v128, 28
  %v179 = vpop.permute.xlu0 %178
  %180 = vrot.lane.b32.xlu0 %v130, 28
  %v181 = vpop.permute.xlu0 %180
  %182 = vrot.lane.b32.xlu0 %v132, 28
  %v183 = vpop.permute.xlu0 %182
  %184 = vrot.lane.b32.xlu0 %v135, 28
  %v185 = vpop.permute.xlu0 %184
  %186 = vrot.lane.b32.xlu0 %v137, 28
  %v187 = vpop.permute.xlu0 %186
  %188 = vrot.lane.b32.xlu0 %v139, 28
  %v189 = vpop.permute.xlu0 %188
  %190 = vrot.lane.b32.xlu0 %v142, 28
  %v191 = vpop.permute.xlu0 %190
  %192 = vrot.lane.b32.xlu0 %v144, 28
  %v193 = vpop.permute.xlu0 %192
  %194 = vrot.lane.b32.xlu0 %v146, 28
  %v195 = vpop.permute.xlu0 %194
  %196 = vrot.lane.b32.xlu0 %v149, 28
  %v197 = vpop.permute.xlu0 %196
  %198 = vrot.lane.b32.xlu0 %v151, 28
  %v199 = vpop.permute.xlu0 %198
  %200 = vrot.lane.b32.xlu0 %v153, 28
  %v201 = vpop.permute.xlu0 %200
  %vm226 = vcmask 1045504
  %v227 = vrot.slane %v33, 2
  %v228 = vrot.slane %v34, 2
  %v229 = vsel %vm226, %v227, %v228
  %v230 = vrot.slane %v35, 2
  %v231 = vsel %vm226, %v228, %v230
  %v232 = vrot.slane %v36, 2
  %v233 = vsel %vm226, %v230, %v232
  %v234 = vrot.slane %v37, 2
  %v235 = vrot.slane %v38, 2
  %v236 = vsel %vm226, %v234, %v235
  %v237 = vrot.slane %v39, 2
  %v238 = vsel %vm226, %v235, %v237
  %v239 = vrot.slane %v40, 2
  %v240 = vsel %vm226, %v237, %v239
  %v241 = vrot.slane %v41, 2
  %v242 = vrot.slane %v42, 2
  %v243 = vsel %vm226, %v241, %v242
  %v244 = vrot.slane %v43, 2
  %v245 = vsel %vm226, %v242, %v244
  %v246 = vrot.slane %v44, 2
  %v247 = vsel %vm226, %v244, %v246
  %v248 = vrot.slane %v45, 2
  %v249 = vrot.slane %v46, 2
  %v250 = vsel %vm226, %v248, %v249
  %v251 = vrot.slane %v47, 2
  %v252 = vsel %vm226, %v249, %v251
  %v253 = vrot.slane %v48, 2
  %v254 = vsel %vm226, %v251, %v253
  %v255 = vrot.slane %v49, 2
  %v256 = vrot.slane %v50, 2
  %v257 = vsel %vm226, %v255, %v256
  %v258 = vrot.slane %v51, 2
  %v259 = vsel %vm226, %v256, %v258
  %v260 = vrot.slane %v52, 2
  %v261 = vsel %vm226, %v258, %v260
  %v262 = vrot.slane %v53, 2
  %v263 = vrot.slane %v54, 2
  %v264 = vsel %vm226, %v262, %v263
  %v265 = vrot.slane %v55, 2
  %v266 = vsel %vm226, %v263, %v265
  %v267 = vrot.slane %v56, 2
  %v268 = vsel %vm226, %v265, %v267
  %v269 = vrot.slane %v57, 2
  %v270 = vrot.slane %v58, 2
  %v271 = vsel %vm226, %v269, %v270
  %v272 = vrot.slane %v59, 2
  %v273 = vsel %vm226, %v270, %v272
  %v274 = vrot.slane %v60, 2
  %v275 = vsel %vm226, %v272, %v274
  %v276 = vrot.slane %v61, 2
  %v277 = vrot.slane %v62, 2
  %v278 = vsel %vm226, %v276, %v277
  %v279 = vrot.slane %v63, 2
  %v280 = vsel %vm226, %v277, %v279
  %v281 = vrot.slane %v64, 2
  %v282 = vsel %vm226, %v279, %v281
  %283 = vrot.lane.b32.xlu0 %v229, 56
  %v284 = vpop.permute.xlu0 %283
  %285 = vrot.lane.b32.xlu0 %v231, 56
  %v286 = vpop.permute.xlu0 %285
  %287 = vrot.lane.b32.xlu0 %v233, 56
  %v288 = vpop.permute.xlu0 %287
  %289 = vrot.lane.b32.xlu0 %v236, 56
  %v290 = vpop.permute.xlu0 %289
  %291 = vrot.lane.b32.xlu0 %v238, 56
  %v292 = vpop.permute.xlu0 %291
  %293 = vrot.lane.b32.xlu0 %v240, 56
  %v294 = vpop.permute.xlu0 %293
  %295 = vrot.lane.b32.xlu0 %v243, 56
  %v296 = vpop.permute.xlu0 %295
  %297 = vrot.lane.b32.xlu0 %v245, 56
  %v298 = vpop.permute.xlu0 %297
  %299 = vrot.lane.b32.xlu0 %v247, 56
  %v300 = vpop.permute.xlu0 %299
  %301 = vrot.lane.b32.xlu0 %v250, 56
  %v302 = vpop.permute.xlu0 %301
  %303 = vrot.lane.b32.xlu0 %v252, 56
  %v304 = vpop.permute.xlu0 %303
  %305 = vrot.lane.b32.xlu0 %v254, 56
  %v306 = vpop.permute.xlu0 %305
  %307 = vrot.lane.b32.xlu0 %v257, 56
  %v308 = vpop.permute.xlu0 %307
  %309 = vrot.lane.b32.xlu0 %v259, 56
  %v310 = vpop.permute.xlu0 %309
  %311 = vrot.lane.b32.xlu0 %v261, 56
  %v312 = vpop.permute.xlu0 %311
  %313 = vrot.lane.b32.xlu0 %v264, 56
  %v314 = vpop.permute.xlu0 %313
  %315 = vrot.lane.b32.xlu0 %v266, 56
  %v316 = vpop.permute.xlu0 %315
  %317 = vrot.lane.b32.xlu0 %v268, 56
  %v318 = vpop.permute.xlu0 %317
  %319 = vrot.lane.b32.xlu0 %v271, 56
  %v320 = vpop.permute.xlu0 %319
  %321 = vrot.lane.b32.xlu0 %v273, 56
  %v322 = vpop.permute.xlu0 %321
  %323 = vrot.lane.b32.xlu0 %v275, 56
  %v324 = vpop.permute.xlu0 %323
  %325 = vrot.lane.b32.xlu0 %v278, 56
  %v326 = vpop.permute.xlu0 %325
  %327 = vrot.lane.b32.xlu0 %v280, 56
  %v328 = vpop.permute.xlu0 %327
  %329 = vrot.lane.b32.xlu0 %v282, 56
  %v330 = vpop.permute.xlu0 %329
  %vm355 = vcmask 1044480
  %v356 = vrot.slane %v33, 3
  %v357 = vrot.slane %v34, 3
  %v358 = vsel %vm355, %v356, %v357
  %v359 = vrot.slane %v35, 3
  %v360 = vsel %vm355, %v357, %v359
  %v361 = vrot.slane %v36, 3
  %v362 = vsel %vm355, %v359, %v361
  %v363 = vrot.slane %v37, 3
  %v364 = vrot.slane %v38, 3
  %v365 = vsel %vm355, %v363, %v364
  %v366 = vrot.slane %v39, 3
  %v367 = vsel %vm355, %v364, %v366
  %v368 = vrot.slane %v40, 3
  %v369 = vsel %vm355, %v366, %v368
  %v370 = vrot.slane %v41, 3
  %v371 = vrot.slane %v42, 3
  %v372 = vsel %vm355, %v370, %v371
  %v373 = vrot.slane %v43, 3
  %v374 = vsel %vm355, %v371, %v373
  %v375 = vrot.slane %v44, 3
  %v376 = vsel %vm355, %v373, %v375
  %v377 = vrot.slane %v45, 3
  %v378 = vrot.slane %v46, 3
  %v379 = vsel %vm355, %v377, %v378
  %v380 = vrot.slane %v47, 3
  %v381 = vsel %vm355, %v378, %v380
  %v382 = vrot.slane %v48, 3
  %v383 = vsel %vm355, %v380, %v382
  %v384 = vrot.slane %v49, 3
  %v385 = vrot.slane %v50, 3
  %v386 = vsel %vm355, %v384, %v385
  %v387 = vrot.slane %v51, 3
  %v388 = vsel %vm355, %v385, %v387
  %v389 = vrot.slane %v52, 3
  %v390 = vsel %vm355, %v387, %v389
  %v391 = vrot.slane %v53, 3
  %v392 = vrot.slane %v54, 3
  %v393 = vsel %vm355, %v391, %v392
  %v394 = vrot.slane %v55, 3
  %v395 = vsel %vm355, %v392, %v394
  %v396 = vrot.slane %v56, 3
  %v397 = vsel %vm355, %v394, %v396
  %v398 = vrot.slane %v57, 3
  %v399 = vrot.slane %v58, 3
  %v400 = vsel %vm355, %v398, %v399
  %v401 = vrot.slane %v59, 3
  %v402 = vsel %vm355, %v399, %v401
  %v403 = vrot.slane %v60, 3
  %v404 = vsel %vm355, %v401, %v403
  %v405 = vrot.slane %v61, 3
  %v406 = vrot.slane %v62, 3
  %v407 = vsel %vm355, %v405, %v406
  %v408 = vrot.slane %v63, 3
  %v409 = vsel %vm355, %v406, %v408
  %v410 = vrot.slane %v64, 3
  %v411 = vsel %vm355, %v408, %v410
  %412 = vrot.lane.b32.xlu0 %v358, 84
  %v413 = vpop.permute.xlu0 %412
  %414 = vrot.lane.b32.xlu0 %v360, 84
  %v415 = vpop.permute.xlu0 %414
  %416 = vrot.lane.b32.xlu0 %v362, 84
  %v417 = vpop.permute.xlu0 %416
  %418 = vrot.lane.b32.xlu0 %v365, 84
  %v419 = vpop.permute.xlu0 %418
  %420 = vrot.lane.b32.xlu0 %v367, 84
  %v421 = vpop.permute.xlu0 %420
  %422 = vrot.lane.b32.xlu0 %v369, 84
  %v423 = vpop.permute.xlu0 %422
  %424 = vrot.lane.b32.xlu0 %v372, 84
  %v425 = vpop.permute.xlu0 %424
  %426 = vrot.lane.b32.xlu0 %v374, 84
  %v427 = vpop.permute.xlu0 %426
  %428 = vrot.lane.b32.xlu0 %v376, 84
  %v429 = vpop.permute.xlu0 %428
  %430 = vrot.lane.b32.xlu0 %v379, 84
  %v431 = vpop.permute.xlu0 %430
  %432 = vrot.lane.b32.xlu0 %v381, 84
  %v433 = vpop.permute.xlu0 %432
  %434 = vrot.lane.b32.xlu0 %v383, 84
  %v435 = vpop.permute.xlu0 %434
  %436 = vrot.lane.b32.xlu0 %v386, 84
  %v437 = vpop.permute.xlu0 %436
  %438 = vrot.lane.b32.xlu0 %v388, 84
  %v439 = vpop.permute.xlu0 %438
  %440 = vrot.lane.b32.xlu0 %v390, 84
  %v441 = vpop.permute.xlu0 %440
  %442 = vrot.lane.b32.xlu0 %v393, 84
  %v443 = vpop.permute.xlu0 %442
  %444 = vrot.lane.b32.xlu0 %v395, 84
  %v445 = vpop.permute.xlu0 %444
  %446 = vrot.lane.b32.xlu0 %v397, 84
  %v447 = vpop.permute.xlu0 %446
  %448 = vrot.lane.b32.xlu0 %v400, 84
  %v449 = vpop.permute.xlu0 %448
  %450 = vrot.lane.b32.xlu0 %v402, 84
  %v451 = vpop.permute.xlu0 %450
  %452 = vrot.lane.b32.xlu0 %v404, 84
  %v453 = vpop.permute.xlu0 %452
  %454 = vrot.lane.b32.xlu0 %v407, 84
  %v455 = vpop.permute.xlu0 %454
  %456 = vrot.lane.b32.xlu0 %v409, 84
  %v457 = vpop.permute.xlu0 %456
  %458 = vrot.lane.b32.xlu0 %v411, 84
  %v459 = vpop.permute.xlu0 %458
  %vm484 = vcmask 1043456
  %v485 = vrot.slane %v33, 4
  %v486 = vrot.slane %v34, 4
  %v487 = vsel %vm484, %v485, %v486
  %v488 = vrot.slane %v35, 4
  %v489 = vsel %vm484, %v486, %v488
  %v490 = vrot.slane %v36, 4
  %v491 = vsel %vm484, %v488, %v490
  %v492 = vrot.slane %v37, 4
  %v493 = vrot.slane %v38, 4
  %v494 = vsel %vm484, %v492, %v493
  %v495 = vrot.slane %v39, 4
  %v496 = vsel %vm484, %v493, %v495
  %v497 = vrot.slane %v40, 4
  %v498 = vsel %vm484, %v495, %v497
  %v499 = vrot.slane %v41, 4
  %v500 = vrot.slane %v42, 4
  %v501 = vsel %vm484, %v499, %v500
  %v502 = vrot.slane %v43, 4
  %v503 = vsel %vm484, %v500, %v502
  %v504 = vrot.slane %v44, 4
  %v505 = vsel %vm484, %v502, %v504
  %v506 = vrot.slane %v45, 4
  %v507 = vrot.slane %v46, 4
  %v508 = vsel %vm484, %v506, %v507
  %v509 = vrot.slane %v47, 4
  %v510 = vsel %vm484, %v507, %v509
  %v511 = vrot.slane %v48, 4
  %v512 = vsel %vm484, %v509, %v511
  %v513 = vrot.slane %v49, 4
  %v514 = vrot.slane %v50, 4
  %v515 = vsel %vm484, %v513, %v514
  %v516 = vrot.slane %v51, 4
  %v517 = vsel %vm484, %v514, %v516
  %v518 = vrot.slane %v52, 4
  %v519 = vsel %vm484, %v516, %v518
  %v520 = vrot.slane %v53, 4
  %v521 = vrot.slane %v54, 4
  %v522 = vsel %vm484, %v520, %v521
  %v523 = vrot.slane %v55, 4
  %v524 = vsel %vm484, %v521, %v523
  %v525 = vrot.slane %v56, 4
  %v526 = vsel %vm484, %v523, %v525
  %v527 = vrot.slane %v57, 4
  %v528 = vrot.slane %v58, 4
  %v529 = vsel %vm484, %v527, %v528
  %v530 = vrot.slane %v59, 4
  %v531 = vsel %vm484, %v528, %v530
  %v532 = vrot.slane %v60, 4
  %v533 = vsel %vm484, %v530, %v532
  %v534 = vrot.slane %v61, 4
  %v535 = vrot.slane %v62, 4
  %v536 = vsel %vm484, %v534, %v535
  %v537 = vrot.slane %v63, 4
  %v538 = vsel %vm484, %v535, %v537
  %v539 = vrot.slane %v64, 4
  %v540 = vsel %vm484, %v537, %v539
  %541 = vrot.lane.b32.xlu0 %v487, 112
  %v542 = vpop.permute.xlu0 %541
  %543 = vrot.lane.b32.xlu0 %v489, 112
  %v544 = vpop.permute.xlu0 %543
  %545 = vrot.lane.b32.xlu0 %v491, 112
  %v546 = vpop.permute.xlu0 %545
  %547 = vrot.lane.b32.xlu0 %v494, 112
  %v548 = vpop.permute.xlu0 %547
  %549 = vrot.lane.b32.xlu0 %v496, 112
  %v550 = vpop.permute.xlu0 %549
  %551 = vrot.lane.b32.xlu0 %v498, 112
  %v552 = vpop.permute.xlu0 %551
  %553 = vrot.lane.b32.xlu0 %v501, 112
  %v554 = vpop.permute.xlu0 %553
  %555 = vrot.lane.b32.xlu0 %v503, 112
  %v556 = vpop.permute.xlu0 %555
  %557 = vrot.lane.b32.xlu0 %v505, 112
  %v558 = vpop.permute.xlu0 %557
  %559 = vrot.lane.b32.xlu0 %v508, 112
  %v560 = vpop.permute.xlu0 %559
  %561 = vrot.lane.b32.xlu0 %v510, 112
  %v562 = vpop.permute.xlu0 %561
  %563 = vrot.lane.b32.xlu0 %v512, 112
  %v564 = vpop.permute.xlu0 %563
  %565 = vrot.lane.b32.xlu0 %v515, 112
  %v566 = vpop.permute.xlu0 %565
  %567 = vrot.lane.b32.xlu0 %v517, 112
  %v568 = vpop.permute.xlu0 %567
  %569 = vrot.lane.b32.xlu0 %v519, 112
  %v570 = vpop.permute.xlu0 %569
  %571 = vrot.lane.b32.xlu0 %v522, 112
  %v572 = vpop.permute.xlu0 %571
  %573 = vrot.lane.b32.xlu0 %v524, 112
  %v574 = vpop.permute.xlu0 %573
  %575 = vrot.lane.b32.xlu0 %v526, 112
  %v576 = vpop.permute.xlu0 %575
  %577 = vrot.lane.b32.xlu0 %v529, 112
  %v578 = vpop.permute.xlu0 %577
  %579 = vrot.lane.b32.xlu0 %v531, 112
  %v580 = vpop.permute.xlu0 %579
  %581 = vrot.lane.b32.xlu0 %v533, 112
  %v582 = vpop.permute.xlu0 %581
  %583 = vrot.lane.b32.xlu0 %v536, 112
  %v584 = vpop.permute.xlu0 %583
  %585 = vrot.lane.b32.xlu0 %v538, 112
  %v586 = vpop.permute.xlu0 %585
  %587 = vrot.lane.b32.xlu0 %v540, 112
  %v588 = vpop.permute.xlu0 %587
  %vm613 = vcmask 228352
  %v614 = vsel %vm613, %v33, %v155
  %v615 = vsel %vm613, %v34, %v157
  %v616 = vsel %vm613, %v35, %v159
  %v617 = vsel %vm613, %v37, %v161
  %v618 = vsel %vm613, %v38, %v163
  %v619 = vsel %vm613, %v39, %v165
  %v620 = vsel %vm613, %v41, %v167
  %v621 = vsel %vm613, %v42, %v169
  %v622 = vsel %vm613, %v43, %v171
  %v623 = vsel %vm613, %v45, %v173
  %v624 = vsel %vm613, %v46, %v175
  %v625 = vsel %vm613, %v47, %v177
  %v626 = vsel %vm613, %v49, %v179
  %v627 = vsel %vm613, %v50, %v181
  %v628 = vsel %vm613, %v51, %v183
  %v629 = vsel %vm613, %v53, %v185
  %v630 = vsel %vm613, %v54, %v187
  %v631 = vsel %vm613, %v55, %v189
  %v632 = vsel %vm613, %v57, %v191
  %v633 = vsel %vm613, %v58, %v193
  %v634 = vsel %vm613, %v59, %v195
  %v635 = vsel %vm613, %v61, %v197
  %v636 = vsel %vm613, %v62, %v199
  %v637 = vsel %vm613, %v63, %v201
  %vm638 = vcmask 457728
  %v639 = vsel %vm638, %v614, %v284
  %v640 = vsel %vm638, %v615, %v286
  %v641 = vsel %vm638, %v616, %v288
  %v642 = vsel %vm638, %v617, %v290
  %v643 = vsel %vm638, %v618, %v292
  %v644 = vsel %vm638, %v619, %v294
  %v645 = vsel %vm638, %v620, %v296
  %v646 = vsel %vm638, %v621, %v298
  %v647 = vsel %vm638, %v622, %v300
  %v648 = vsel %vm638, %v623, %v302
  %v649 = vsel %vm638, %v624, %v304
  %v650 = vsel %vm638, %v625, %v306
  %v651 = vsel %vm638, %v626, %v308
  %v652 = vsel %vm638, %v627, %v310
  %v653 = vsel %vm638, %v628, %v312
  %v654 = vsel %vm638, %v629, %v314
  %v655 = vsel %vm638, %v630, %v316
  %v656 = vsel %vm638, %v631, %v318
  %v657 = vsel %vm638, %v632, %v320
  %v658 = vsel %vm638, %v633, %v322
  %v659 = vsel %vm638, %v634, %v324
  %v660 = vsel %vm638, %v635, %v326
  %v661 = vsel %vm638, %v636, %v328
  %v662 = vsel %vm638, %v637, %v330
  %vm663 = vcmask 687104
  %v664 = vsel %vm663, %v639, %v413
  %v665 = vsel %vm663, %v640, %v415
  %v666 = vsel %vm663, %v641, %v417
  %v667 = vsel %vm663, %v642, %v419
  %v668 = vsel %vm663, %v643, %v421
  %v669 = vsel %vm663, %v644, %v423
  %v670 = vsel %vm663, %v645, %v425
  %v671 = vsel %vm663, %v646, %v427
  %v672 = vsel %vm663, %v647, %v429
  %v673 = vsel %vm663, %v648, %v431
  %v674 = vsel %vm663, %v649, %v433
  %v675 = vsel %vm663, %v650, %v435
  %v676 = vsel %vm663, %v651, %v437
  %v677 = vsel %vm663, %v652, %v439
  %v678 = vsel %vm663, %v653, %v441
  %v679 = vsel %vm663, %v654, %v443
  %v680 = vsel %vm663, %v655, %v445
  %v681 = vsel %vm663, %v656, %v447
  %v682 = vsel %vm663, %v657, %v449
  %v683 = vsel %vm663, %v658, %v451
  %v684 = vsel %vm663, %v659, %v453
  %v685 = vsel %vm663, %v660, %v455
  %v686 = vsel %vm663, %v661, %v457
  %v687 = vsel %vm663, %v662, %v459
  %vm688 = vcmask 916480
  %v689 = vsel %vm688, %v664, %v542
  %v690 = vsel %vm688, %v665, %v544
  %v691 = vsel %vm688, %v666, %v546
  %v692 = vsel %vm688, %v667, %v548
  %v693 = vsel %vm688, %v668, %v550
  %v694 = vsel %vm688, %v669, %v552
  %v695 = vsel %vm688, %v670, %v554
  %v696 = vsel %vm688, %v671, %v556
  %v697 = vsel %vm688, %v672, %v558
  %v698 = vsel %vm688, %v673, %v560
  %v699 = vsel %vm688, %v674, %v562
  %v700 = vsel %vm688, %v675, %v564
  %v701 = vsel %vm688, %v676, %v566
  %v702 = vsel %vm688, %v677, %v568
  %v703 = vsel %vm688, %v678, %v570
  %v704 = vsel %vm688, %v679, %v572
  %v705 = vsel %vm688, %v680, %v574
  %v706 = vsel %vm688, %v681, %v576
  %v707 = vsel %vm688, %v682, %v578
  %v708 = vsel %vm688, %v683, %v580
  %v709 = vsel %vm688, %v684, %v582
  %v710 = vsel %vm688, %v685, %v584
  %v711 = vsel %vm688, %v686, %v586
  %v712 = vsel %vm688, %v687, %v588
  %v713 = vpack.c.bf16 %v690, %v689
  %v714 = vpack.c.bf16 %v544, %v542
  %v715 = vpack.c.bf16 %v692, %v691
  %v716 = vpack.c.bf16 %v548, %v546
  %v717 = vpack.c.bf16 %v694, %v693
  %v718 = vpack.c.bf16 %v552, %v550
  %v719 = vpack.c.bf16 %v696, %v695
  %v720 = vpack.c.bf16 %v556, %v554
  %v721 = vpack.c.bf16 %v698, %v697
  %v722 = vpack.c.bf16 %v560, %v558
  %v723 = vpack.c.bf16 %v700, %v699
  %v724 = vpack.c.bf16 %v564, %v562
  %v725 = vpack.c.bf16 %v702, %v701
  %v726 = vpack.c.bf16 %v568, %v566
  %v727 = vpack.c.bf16 %v704, %v703
  %v728 = vpack.c.bf16 %v572, %v570
  %v729 = vpack.c.bf16 %v706, %v705
  %v730 = vpack.c.bf16 %v576, %v574
  %v731 = vpack.c.bf16 %v708, %v707
  %v732 = vpack.c.bf16 %v580, %v578
  %v733 = vpack.c.bf16 %v710, %v709
  %v734 = vpack.c.bf16 %v584, %v582
  %v735 = vpack.c.bf16 %v712, %v711
  %v736 = vpack.c.bf16 %v588, %v586
  %v737 = vld [vmem:[%s1] sm:$0xff]
  %v738 = vld [vmem:[%s1 + $0x8] sm:$0xff]
  %v739 = vld [vmem:[%s1 + $0x10] sm:$0xff]
  %v740 = vld [vmem:[%s1 + $0x18] sm:$0xff]
  %v741 = vld [vmem:[%s1 + $0x20] sm:$0xff]
  %v742 = vld [vmem:[%s1 + $0x28] sm:$0xff]
  %v743 = vld [vmem:[%s1 + $0x30] sm:$0xff]
  %v744 = vld [vmem:[%s1 + $0x38] sm:$0xff]
  %v745 = vld [vmem:[%s1 + $0x40] sm:$0xff]
  %v746 = vld [vmem:[%s1 + $0x48] sm:$0xff]
  %v747 = vld [vmem:[%s1 + $0x50] sm:$0xff]
  %v748 = vld [vmem:[%s1 + $0x58] sm:$0xff]
  %v749 = vld [vmem:[%s1 + $0x60] sm:$0xff]
  %v750 = vld [vmem:[%s1 + $0x68] sm:$0xff]
  %v751 = vld [vmem:[%s1 + $0x70] sm:$0xff]
  %v752 = vld [vmem:[%s1 + $0x78] sm:$0xff]
  %v753 = vld [vmem:[%s1 + $0x80] sm:$0xff]
  %v754 = vld [vmem:[%s1 + $0x88] sm:$0x33]
  %v755 = vld [vmem:[%s2] sm:$0x3]
  %v757 = vlaneseq
  %v758 = vshrl.u32 %v757, 7
  %v759 = vsub.s32 0, %v758
  %v760 = vrot.slane %v755, %v759
  %v761 = vlaneseq
  %v762 = vshrl.u32 %v761, 7
  %v763 = vsub.s32 1, %v762
  %v764 = vrot.slane %v755, %v763
  %v785 = vunpack.c.l.b16 %v737
  %v786 = vunpack.c.h.b16 %v737
  %v787 = vunpack.c.l.b16 %v738
  %v788 = vunpack.c.h.b16 %v738
  %v789 = vunpack.c.l.b16 %v739
  %v790 = vunpack.c.h.b16 %v739
  %v791 = vunpack.c.l.b16 %v740
  %v792 = vunpack.c.h.b16 %v740
  %v793 = vunpack.c.l.b16 %v741
  %v794 = vunpack.c.h.b16 %v741
  %v795 = vunpack.c.l.b16 %v742
  %v796 = vunpack.c.h.b16 %v742
  %v797 = vunpack.c.l.b16 %v743
  %v798 = vunpack.c.h.b16 %v743
  %v799 = vunpack.c.l.b16 %v744
  %v800 = vunpack.c.h.b16 %v744
  %v801 = vunpack.c.l.b16 %v745
  %v802 = vunpack.c.h.b16 %v745
  %v803 = vunpack.c.l.b16 %v746
  %v804 = vunpack.c.h.b16 %v746
  %v805 = vunpack.c.l.b16 %v747
  %v806 = vunpack.c.h.b16 %v747
  %v807 = vunpack.c.l.b16 %v748
  %v808 = vunpack.c.h.b16 %v748
  %v809 = vunpack.c.l.b16 %v749
  %v810 = vunpack.c.h.b16 %v749
  %v811 = vunpack.c.l.b16 %v750
  %v812 = vunpack.c.h.b16 %v750
  %v813 = vunpack.c.l.b16 %v751
  %v814 = vunpack.c.h.b16 %v751
  %v815 = vunpack.c.l.b16 %v752
  %v816 = vunpack.c.h.b16 %v752
  %v817 = vunpack.c.l.b16 %v753
  %v818 = vunpack.c.h.b16 %v753
  %v819 = vunpack.c.l.b16 %v754
  %v820 = vunpack.c.h.b16 %v754
  %v821 = vpack.c.b16 %v787, %v785
  %v822 = vpack.c.b16 %v788, %v786
  %v823 = vpack.c.b16 %v791, %v789
  %v824 = vpack.c.b16 %v792, %v790
  %v825 = vpack.c.b16 %v795, %v793
  %v826 = vpack.c.b16 %v796, %v794
  %v827 = vpack.c.b16 %v799, %v797
  %v828 = vpack.c.b16 %v800, %v798
  %v829 = vpack.c.b16 %v803, %v801
  %v830 = vpack.c.b16 %v804, %v802
  %v831 = vpack.c.b16 %v807, %v805
  %v832 = vpack.c.b16 %v808, %v806
  %v833 = vpack.c.b16 %v811, %v809
  %v834 = vpack.c.b16 %v812, %v810
  %v835 = vpack.c.b16 %v815, %v813
  %v836 = vpack.c.b16 %v816, %v814
  %v837 = vpack.c.b16 %v819, %v817
  %v838 = vpack.c.b16 %v820, %v818
  %vm855 = vcmask 97280
  %v857 = vsel %vm855, %v714, 0
  %v860 = vsel %vm855, %v716, 0
  %v863 = vsel %vm855, %v718, 0
  %v866 = vsel %vm855, %v720, 0
  %v869 = vsel %vm855, %v722, 0
  %v872 = vsel %vm855, %v724, 0
  %v875 = vsel %vm855, %v726, 0
  %v878 = vsel %vm855, %v728, 0
  %v881 = vsel %vm855, %v730, 0
  %v884 = vsel %vm855, %v732, 0
  %v887 = vsel %vm855, %v734, 0
  %v890 = vsel %vm855, %v736, 0
  %v893 = vsel %vm226, %v837, 0
  %v896 = vsel %vm226, %v838, 0
  %898 = vmatprep.subr.bf16.mxu0 %v822
  %899 = vmatpush1.bf16.msra.mxu0 %v821
  %900 = vmatprep.subr.bf16.mxu0 %v824
  %901 = vmatpush1.bf16.msra.mxu0 %v823
  %902 = vmatprep.subr.bf16.mxu0 %v826
  %903 = vmatpush1.bf16.msra.mxu0 %v825
  %904 = vmatprep.subr.bf16.mxu0 %v828
  %905 = vmatpush1.bf16.msra.mxu0 %v827
  %906 = vmatprep.subr.bf16.mxu0 %v830
  %907 = vmatpush1.bf16.msra.mxu0 %v829
  %908 = vmatprep.subr.bf16.mxu0 %v832
  %909 = vmatpush1.bf16.msra.mxu0 %v831
  %910 = vmatprep.subr.bf16.mxu0 %v834
  %911 = vmatpush1.bf16.msra.mxu0 %v833
  %912 = vmatprep.subr.bf16.mxu0 %v836
  %913 = vmatpush1.bf16.msra.mxu0 %v835
  %914 = vmatprep.subr.bf16.mxu0 %v896
  %915 = vmatpush1.bf16.msra.mxu0 %v893
  %916 = vmatprep.subr.bf16.mxu0 0
  %917 = vmatpush1.bf16.msra.mxu0 0
  %918 = vmatprep.subr.bf16.mxu0 0
  %919 = vmatpush1.bf16.msra.mxu0 0
  %920 = vmatprep.subr.bf16.mxu0 0
  %921 = vmatpush1.bf16.msra.mxu0 0
  %922 = vmatprep.subr.bf16.mxu0 0
  %923 = vmatpush1.bf16.msra.mxu0 0
  %924 = vmatprep.subr.bf16.mxu0 0
  %925 = vmatpush1.bf16.msra.mxu0 0
  %926 = vmatprep.subr.bf16.mxu0 0
  %927 = vmatpush1.bf16.msra.mxu0 0
  %928 = vmatprep.subr.bf16.mxu0 0
  %929 = vmatpush1.bf16.msra.mxu0 0
  %930 = vmatprep.mubr.bf16.mxu0 %v857
  %931 = vmatmul.mubr.bf16.gmra.mrb[0].mxu0 %v713
  %v932 = vpop.f32.mrb[0].mxu0
  %v933 = vadd.f32 %v760, %v932
  %v934 = vpop.f32.mrb[0].mxu0
  %v935 = vadd.f32 %v764, %v934
  %v936 = vpop.f32.mrb[0].mxu0
  %v937 = vadd.f32 %v760, %v936
  %v938 = vpop.f32.mrb[0].mxu0
  %v939 = vadd.f32 %v764, %v938
  %940 = vmatprep.mubr.bf16.mxu0 %v860
  %941 = vmatmul.mubr.bf16.gmra.mrb[0].mxu0 %v715
  %v942 = vpop.f32.mrb[0].mxu0
  %v943 = vadd.f32 %v760, %v942
  %v944 = vpop.f32.mrb[0].mxu0
  %v945 = vadd.f32 %v764, %v944
  %v946 = vpop.f32.mrb[0].mxu0
  %v947 = vadd.f32 %v760, %v946
  %v948 = vpop.f32.mrb[0].mxu0
  %v949 = vadd.f32 %v764, %v948
  %950 = vmatprep.mubr.bf16.mxu0 %v863
  %951 = vmatmul.mubr.bf16.gmra.mrb[0].mxu0 %v717
  %v952 = vpop.f32.mrb[0].mxu0
  %v953 = vadd.f32 %v760, %v952
  %v954 = vpop.f32.mrb[0].mxu0
  %v955 = vadd.f32 %v764, %v954
  %v956 = vpop.f32.mrb[0].mxu0
  %v957 = vadd.f32 %v760, %v956
  %v958 = vpop.f32.mrb[0].mxu0
  %v959 = vadd.f32 %v764, %v958
  %960 = vmatprep.mubr.bf16.mxu0 %v866
  %961 = vmatmul.mubr.bf16.gmra.mrb[0].mxu0 %v719
  %v962 = vpop.f32.mrb[0].mxu0
  %v963 = vadd.f32 %v760, %v962
  %v964 = vpop.f32.mrb[0].mxu0
  %v965 = vadd.f32 %v764, %v964
  %v966 = vpop.f32.mrb[0].mxu0
  %v967 = vadd.f32 %v760, %v966
  %v968 = vpop.f32.mrb[0].mxu0
  %v969 = vadd.f32 %v764, %v968
  %970 = vmatprep.mubr.bf16.mxu0 %v869
  %971 = vmatmul.mubr.bf16.gmra.mrb[0].mxu0 %v721
  %v972 = vpop.f32.mrb[0].mxu0
  %v973 = vadd.f32 %v760, %v972
  %v974 = vpop.f32.mrb[0].mxu0
  %v975 = vadd.f32 %v764, %v974
  %v976 = vpop.f32.mrb[0].mxu0
  %v977 = vadd.f32 %v760, %v976
  %v978 = vpop.f32.mrb[0].mxu0
  %v979 = vadd.f32 %v764, %v978
  %980 = vmatprep.mubr.bf16.mxu0 %v872
  %981 = vmatmul.mubr.bf16.gmra.mrb[0].mxu0 %v723
  %v982 = vpop.f32.mrb[0].mxu0
  %v983 = vadd.f32 %v760, %v982
  %v984 = vpop.f32.mrb[0].mxu0
  %v985 = vadd.f32 %v764, %v984
  %v986 = vpop.f32.mrb[0].mxu0
  %v987 = vadd.f32 %v760, %v986
  %v988 = vpop.f32.mrb[0].mxu0
  %v989 = vadd.f32 %v764, %v988
  %990 = vmatprep.mubr.bf16.mxu0 %v875
  %991 = vmatmul.mubr.bf16.gmra.mrb[0].mxu0 %v725
  %v992 = vpop.f32.mrb[0].mxu0
  %v993 = vadd.f32 %v760, %v992
  %v994 = vpop.f32.mrb[0].mxu0
  %v995 = vadd.f32 %v764, %v994
  %v996 = vpop.f32.mrb[0].mxu0
  %v997 = vadd.f32 %v760, %v996
  %v998 = vpop.f32.mrb[0].mxu0
  %v999 = vadd.f32 %v764, %v998
  %1000 = vmatprep.mubr.bf16.mxu0 %v878
  %1001 = vmatmul.mubr.bf16.gmra.mrb[0].mxu0 %v727
  %v1002 = vpop.f32.mrb[0].mxu0
  %v1003 = vadd.f32 %v760, %v1002
  %v1004 = vpop.f32.mrb[0].mxu0
  %v1005 = vadd.f32 %v764, %v1004
  %v1006 = vpop.f32.mrb[0].mxu0
  %v1007 = vadd.f32 %v760, %v1006
  %v1008 = vpop.f32.mrb[0].mxu0
  %v1009 = vadd.f32 %v764, %v1008
  %1010 = vmatprep.mubr.bf16.mxu0 %v881
  %1011 = vmatmul.mubr.bf16.gmra.mrb[0].mxu0 %v729
  %v1012 = vpop.f32.mrb[0].mxu0
  %v1013 = vadd.f32 %v760, %v1012
  %v1014 = vpop.f32.mrb[0].mxu0
  %v1015 = vadd.f32 %v764, %v1014
  %v1016 = vpop.f32.mrb[0].mxu0
  %v1017 = vadd.f32 %v760, %v1016
  %v1018 = vpop.f32.mrb[0].mxu0
  %v1019 = vadd.f32 %v764, %v1018
  %1020 = vmatprep.mubr.bf16.mxu0 %v884
  %1021 = vmatmul.mubr.bf16.gmra.mrb[0].mxu0 %v731
  %v1022 = vpop.f32.mrb[0].mxu0
  %v1023 = vadd.f32 %v760, %v1022
  %v1024 = vpop.f32.mrb[0].mxu0
  %v1025 = vadd.f32 %v764, %v1024
  %v1026 = vpop.f32.mrb[0].mxu0
  %v1027 = vadd.f32 %v760, %v1026
  %v1028 = vpop.f32.mrb[0].mxu0
  %v1029 = vadd.f32 %v764, %v1028
  %1030 = vmatprep.mubr.bf16.mxu0 %v887
  %1031 = vmatmul.mubr.bf16.gmra.mrb[0].mxu0 %v733
  %v1032 = vpop.f32.mrb[0].mxu0
  %v1033 = vadd.f32 %v760, %v1032
  %v1034 = vpop.f32.mrb[0].mxu0
  %v1035 = vadd.f32 %v764, %v1034
  %v1036 = vpop.f32.mrb[0].mxu0
  %v1037 = vadd.f32 %v760, %v1036
  %v1038 = vpop.f32.mrb[0].mxu0
  %v1039 = vadd.f32 %v764, %v1038
  %1040 = vmatprep.mubr.bf16.mxu0 %v890
  %1041 = vmatmul.mubr.bf16.gmra.mrb[0].mxu0 %v735
  %v1042 = vpop.f32.mrb[0].mxu0
  %v1043 = vadd.f32 %v760, %v1042
  %v1044 = vpop.f32.mrb[0].mxu0
  %v1045 = vadd.f32 %v764, %v1044
  %v1046 = vpop.f32.mrb[0].mxu0
  %v1047 = vadd.f32 %v760, %v1046
  %v1048 = vpop.f32.mrb[0].mxu0
  %v1049 = vadd.f32 %v764, %v1048
  %1050 = vdwg.mxu0
  %v1051 = vmax.f32 %v933, 0.0
  %v1052 = vmax.f32 %v935, 0.0
  %v1053 = vmax.f32 %v937, 0.0
  %v1054 = vmax.f32 %v939, 0.0
  %v1055 = vmax.f32 %v943, 0.0
  %v1056 = vmax.f32 %v945, 0.0
  %v1057 = vmax.f32 %v947, 0.0
  %v1058 = vmax.f32 %v949, 0.0
  %v1059 = vmax.f32 %v953, 0.0
  %v1060 = vmax.f32 %v955, 0.0
  %v1061 = vmax.f32 %v957, 0.0
  %v1062 = vmax.f32 %v959, 0.0
  %v1063 = vmax.f32 %v963, 0.0
  %v1064 = vmax.f32 %v965, 0.0
  %v1065 = vmax.f32 %v967, 0.0
  %v1066 = vmax.f32 %v969, 0.0
  %v1067 = vmax.f32 %v973, 0.0
  %v1068 = vmax.f32 %v975, 0.0
  %v1069 = vmax.f32 %v977, 0.0
  %v1070 = vmax.f32 %v979, 0.0
  %v1071 = vmax.f32 %v983, 0.0
  %v1072 = vmax.f32 %v985, 0.0
  %v1073 = vmax.f32 %v987, 0.0
  %v1074 = vmax.f32 %v989, 0.0
  %v1075 = vmax.f32 %v993, 0.0
  %v1076 = vmax.f32 %v995, 0.0
  %v1077 = vmax.f32 %v997, 0.0
  %v1078 = vmax.f32 %v999, 0.0
  %v1079 = vmax.f32 %v1003, 0.0
  %v1080 = vmax.f32 %v1005, 0.0
  %v1081 = vmax.f32 %v1007, 0.0
  %v1082 = vmax.f32 %v1009, 0.0
  %v1083 = vmax.f32 %v1013, 0.0
  %v1084 = vmax.f32 %v1015, 0.0
  %v1085 = vmax.f32 %v1017, 0.0
  %v1086 = vmax.f32 %v1019, 0.0
  %v1087 = vmax.f32 %v1023, 0.0
  %v1088 = vmax.f32 %v1025, 0.0
  %v1089 = vmax.f32 %v1027, 0.0
  %v1090 = vmax.f32 %v1029, 0.0
  %v1091 = vmax.f32 %v1033, 0.0
  %v1092 = vmax.f32 %v1035, 0.0
  %v1093 = vmax.f32 %v1037, 0.0
  %v1094 = vmax.f32 %v1039, 0.0
  %v1095 = vmax.f32 %v1043, 0.0
  %v1096 = vmax.f32 %v1045, 0.0
  %v1097 = vmax.f32 %v1047, 0.0
  %v1098 = vmax.f32 %v1049, 0.0
  %1147 = vrot.lane.b32.xlu0 %v1051, 8
  %v1148 = vpop.permute.xlu0 %1147
  %1149 = vrot.lane.b32.xlu0 %v1052, 8
  %v1150 = vpop.permute.xlu0 %1149
  %1151 = vrot.lane.b32.xlu0 %v1053, 8
  %v1152 = vpop.permute.xlu0 %1151
  %1153 = vrot.lane.b32.xlu0 %v1054, 8
  %v1154 = vpop.permute.xlu0 %1153
  %1155 = vrot.lane.b32.xlu0 %v1055, 8
  %v1156 = vpop.permute.xlu0 %1155
  %1157 = vrot.lane.b32.xlu0 %v1056, 8
  %v1158 = vpop.permute.xlu0 %1157
  %1159 = vrot.lane.b32.xlu0 %v1057, 8
  %v1160 = vpop.permute.xlu0 %1159
  %1161 = vrot.lane.b32.xlu0 %v1058, 8
  %v1162 = vpop.permute.xlu0 %1161
  %1163 = vrot.lane.b32.xlu0 %v1059, 8
  %v1164 = vpop.permute.xlu0 %1163
  %1165 = vrot.lane.b32.xlu0 %v1060, 8
  %v1166 = vpop.permute.xlu0 %1165
  %1167 = vrot.lane.b32.xlu0 %v1061, 8
  %v1168 = vpop.permute.xlu0 %1167
  %1169 = vrot.lane.b32.xlu0 %v1062, 8
  %v1170 = vpop.permute.xlu0 %1169
  %1171 = vrot.lane.b32.xlu0 %v1063, 8
  %v1172 = vpop.permute.xlu0 %1171
  %1173 = vrot.lane.b32.xlu0 %v1064, 8
  %v1174 = vpop.permute.xlu0 %1173
  %1175 = vrot.lane.b32.xlu0 %v1065, 8
  %v1176 = vpop.permute.xlu0 %1175
  %1177 = vrot.lane.b32.xlu0 %v1066, 8
  %v1178 = vpop.permute.xlu0 %1177
  %1179 = vrot.lane.b32.xlu0 %v1067, 8
  %v1180 = vpop.permute.xlu0 %1179
  %1181 = vrot.lane.b32.xlu0 %v1068, 8
  %v1182 = vpop.permute.xlu0 %1181
  %1183 = vrot.lane.b32.xlu0 %v1069, 8
  %v1184 = vpop.permute.xlu0 %1183
  %1185 = vrot.lane.b32.xlu0 %v1070, 8
  %v1186 = vpop.permute.xlu0 %1185
  %1187 = vrot.lane.b32.xlu0 %v1071, 8
  %v1188 = vpop.permute.xlu0 %1187
  %1189 = vrot.lane.b32.xlu0 %v1072, 8
  %v1190 = vpop.permute.xlu0 %1189
  %1191 = vrot.lane.b32.xlu0 %v1073, 8
  %v1192 = vpop.permute.xlu0 %1191
  %1193 = vrot.lane.b32.xlu0 %v1074, 8
  %v1194 = vpop.permute.xlu0 %1193
  %1195 = vrot.lane.b32.xlu0 %v1075, 8
  %v1196 = vpop.permute.xlu0 %1195
  %1197 = vrot.lane.b32.xlu0 %v1076, 8
  %v1198 = vpop.permute.xlu0 %1197
  %1199 = vrot.lane.b32.xlu0 %v1077, 8
  %v1200 = vpop.permute.xlu0 %1199
  %1201 = vrot.lane.b32.xlu0 %v1078, 8
  %v1202 = vpop.permute.xlu0 %1201
  %1203 = vrot.lane.b32.xlu0 %v1079, 8
  %v1204 = vpop.permute.xlu0 %1203
  %1205 = vrot.lane.b32.xlu0 %v1080, 8
  %v1206 = vpop.permute.xlu0 %1205
  %1207 = vrot.lane.b32.xlu0 %v1081, 8
  %v1208 = vpop.permute.xlu0 %1207
  %1209 = vrot.lane.b32.xlu0 %v1082, 8
  %v1210 = vpop.permute.xlu0 %1209
  %1211 = vrot.lane.b32.xlu0 %v1083, 8
  %v1212 = vpop.permute.xlu0 %1211
  %1213 = vrot.lane.b32.xlu0 %v1084, 8
  %v1214 = vpop.permute.xlu0 %1213
  %1215 = vrot.lane.b32.xlu0 %v1085, 8
  %v1216 = vpop.permute.xlu0 %1215
  %1217 = vrot.lane.b32.xlu0 %v1086, 8
  %v1218 = vpop.permute.xlu0 %1217
  %1219 = vrot.lane.b32.xlu0 %v1087, 8
  %v1220 = vpop.permute.xlu0 %1219
  %1221 = vrot.lane.b32.xlu0 %v1088, 8
  %v1222 = vpop.permute.xlu0 %1221
  %1223 = vrot.lane.b32.xlu0 %v1089, 8
  %v1224 = vpop.permute.xlu0 %1223
  %1225 = vrot.lane.b32.xlu0 %v1090, 8
  %v1226 = vpop.permute.xlu0 %1225
  %1227 = vrot.lane.b32.xlu0 %v1091, 8
  %v1228 = vpop.permute.xlu0 %1227
  %1229 = vrot.lane.b32.xlu0 %v1092, 8
  %v1230 = vpop.permute.xlu0 %1229
  %1231 = vrot.lane.b32.xlu0 %v1093, 8
  %v1232 = vpop.permute.xlu0 %1231
  %1233 = vrot.lane.b32.xlu0 %v1094, 8
  %v1234 = vpop.permute.xlu0 %1233
  %1235 = vrot.lane.b32.xlu0 %v1095, 8
  %v1236 = vpop.permute.xlu0 %1235
  %1237 = vrot.lane.b32.xlu0 %v1096, 8
  %v1238 = vpop.permute.xlu0 %1237
  %1239 = vrot.lane.b32.xlu0 %v1097, 8
  %v1240 = vpop.permute.xlu0 %1239
  %1241 = vrot.lane.b32.xlu0 %v1098, 8
  %v1242 = vpop.permute.xlu0 %1241
  %vm1243 = vcmask 64512
  %v1244 = vsel %vm1243, %v1148, %v1150
  %v1245 = vsel %vm1243, %v1152, %v1154
  %v1246 = vsel %vm1243, %v1156, %v1158
  %v1247 = vsel %vm1243, %v1160, %v1162
  %v1248 = vsel %vm1243, %v1164, %v1166
  %v1249 = vsel %vm1243, %v1168, %v1170
  %v1250 = vsel %vm1243, %v1172, %v1174
  %v1251 = vsel %vm1243, %v1176, %v1178
  %v1252 = vsel %vm1243, %v1180, %v1182
  %v1253 = vsel %vm1243, %v1184, %v1186
  %v1254 = vsel %vm1243, %v1188, %v1190
  %v1255 = vsel %vm1243, %v1192, %v1194
  %v1256 = vsel %vm1243, %v1196, %v1198
  %v1257 = vsel %vm1243, %v1200, %v1202
  %v1258 = vsel %vm1243, %v1204, %v1206
  %v1259 = vsel %vm1243, %v1208, %v1210
  %v1260 = vsel %vm1243, %v1212, %v1214
  %v1261 = vsel %vm1243, %v1216, %v1218
  %v1262 = vsel %vm1243, %v1220, %v1222
  %v1263 = vsel %vm1243, %v1224, %v1226
  %v1264 = vsel %vm1243, %v1228, %v1230
  %v1265 = vsel %vm1243, %v1232, %v1234
  %v1266 = vsel %vm1243, %v1236, %v1238
  %v1267 = vsel %vm1243, %v1240, %v1242
  %v1292 = vmax.f32 %v1051, %v1244
  %v1293 = vmax.f32 %v1053, %v1245
  %v1294 = vmax.f32 %v1055, %v1246
  %v1295 = vmax.f32 %v1057, %v1247
  %v1296 = vmax.f32 %v1059, %v1248
  %v1297 = vmax.f32 %v1061, %v1249
  %v1298 = vmax.f32 %v1063, %v1250
  %v1299 = vmax.f32 %v1065, %v1251
  %v1300 = vmax.f32 %v1067, %v1252
  %v1301 = vmax.f32 %v1069, %v1253
  %v1302 = vmax.f32 %v1071, %v1254
  %v1303 = vmax.f32 %v1073, %v1255
  %v1304 = vmax.f32 %v1075, %v1256
  %v1305 = vmax.f32 %v1077, %v1257
  %v1306 = vmax.f32 %v1079, %v1258
  %v1307 = vmax.f32 %v1081, %v1259
  %v1308 = vmax.f32 %v1083, %v1260
  %v1309 = vmax.f32 %v1085, %v1261
  %v1310 = vmax.f32 %v1087, %v1262
  %v1311 = vmax.f32 %v1089, %v1263
  %v1312 = vmax.f32 %v1091, %v1264
  %v1313 = vmax.f32 %v1093, %v1265
  %v1314 = vmax.f32 %v1095, %v1266
  %v1315 = vmax.f32 %v1097, %v1267
  %v1324 = vrot.slane %v1292, 1
  %v1325 = vrot.slane %v1295, 1
  %v1326 = vrot.slane %v1298, 1
  %v1327 = vrot.slane %v1301, 1
  %v1328 = vrot.slane %v1304, 1
  %v1329 = vrot.slane %v1307, 1
  %v1330 = vrot.slane %v1310, 1
  %v1331 = vrot.slane %v1313, 1
  %v1340 = vmax.f32 %v1292, %v1324
  %v1341 = vmax.f32 %v1295, %v1325
  %v1342 = vmax.f32 %v1298, %v1326
  %v1343 = vmax.f32 %v1301, %v1327
  %v1344 = vmax.f32 %v1304, %v1328
  %v1345 = vmax.f32 %v1307, %v1329
  %v1346 = vmax.f32 %v1310, %v1330
  %v1347 = vmax.f32 %v1313, %v1331
  %v1356 = vrot.slane %v1293, 1
  %v1357 = vrot.slane %v1296, 1
  %v1358 = vrot.slane %v1299, 1
  %v1359 = vrot.slane %v1302, 1
  %v1360 = vrot.slane %v1305, 1
  %v1361 = vrot.slane %v1308, 1
  %v1362 = vrot.slane %v1311, 1
  %v1363 = vrot.slane %v1314, 1
  %v1372 = vmax.f32 %v1293, %v1356
  %v1373 = vmax.f32 %v1296, %v1357
  %v1374 = vmax.f32 %v1299, %v1358
  %v1375 = vmax.f32 %v1302, %v1359
  %v1376 = vmax.f32 %v1305, %v1360
  %v1377 = vmax.f32 %v1308, %v1361
  %v1378 = vmax.f32 %v1311, %v1362
  %v1379 = vmax.f32 %v1314, %v1363
  %v1388 = vrot.slane %v1294, 1
  %v1389 = vrot.slane %v1297, 1
  %v1390 = vrot.slane %v1300, 1
  %v1391 = vrot.slane %v1303, 1
  %v1392 = vrot.slane %v1306, 1
  %v1393 = vrot.slane %v1309, 1
  %v1394 = vrot.slane %v1312, 1
  %v1395 = vrot.slane %v1315, 1
  %v1404 = vmax.f32 %v1294, %v1388
  %v1405 = vmax.f32 %v1297, %v1389
  %v1406 = vmax.f32 %v1300, %v1390
  %v1407 = vmax.f32 %v1303, %v1391
  %v1408 = vmax.f32 %v1306, %v1392
  %v1409 = vmax.f32 %v1309, %v1393
  %v1410 = vmax.f32 %v1312, %v1394
  %v1411 = vmax.f32 %v1315, %v1395
  %v1420 = vrot.slane %v1340, 1
  %v1421 = vrot.slane %v1341, 1
  %v1422 = vrot.slane %v1342, 1
  %v1423 = vrot.slane %v1343, 1
  %v1424 = vrot.slane %v1344, 1
  %v1425 = vrot.slane %v1345, 1
  %v1426 = vrot.slane %v1346, 1
  %v1427 = vrot.slane %v1347, 1
  %v1436 = vrot.slane %v1340, 2
  %v1437 = vrot.slane %v1341, 2
  %v1438 = vrot.slane %v1342, 2
  %v1439 = vrot.slane %v1343, 2
  %v1440 = vrot.slane %v1344, 2
  %v1441 = vrot.slane %v1345, 2
  %v1442 = vrot.slane %v1346, 2
  %v1443 = vrot.slane %v1347, 2
  %v1452 = vrot.slane %v1340, 3
  %v1453 = vrot.slane %v1341, 3
  %v1454 = vrot.slane %v1342, 3
  %v1455 = vrot.slane %v1343, 3
  %v1456 = vrot.slane %v1344, 3
  %v1457 = vrot.slane %v1345, 3
  %v1458 = vrot.slane %v1346, 3
  %v1459 = vrot.slane %v1347, 3
  %v1476 = vrot.slane %v1372, 4
  %v1477 = vrot.slane %v1373, 4
  %v1478 = vrot.slane %v1374, 4
  %v1479 = vrot.slane %v1375, 4
  %v1480 = vrot.slane %v1376, 4
  %v1481 = vrot.slane %v1377, 4
  %v1482 = vrot.slane %v1378, 4
  %v1483 = vrot.slane %v1379, 4
  %v1492 = vrot.slane %v1372, 5
  %v1493 = vrot.slane %v1373, 5
  %v1494 = vrot.slane %v1374, 5
  %v1495 = vrot.slane %v1375, 5
  %v1496 = vrot.slane %v1376, 5
  %v1497 = vrot.slane %v1377, 5
  %v1498 = vrot.slane %v1378, 5
  %v1499 = vrot.slane %v1379, 5
  %v1508 = vrot.slane %v1372, 6
  %v1509 = vrot.slane %v1373, 6
  %v1510 = vrot.slane %v1374, 6
  %v1511 = vrot.slane %v1375, 6
  %v1512 = vrot.slane %v1376, 6
  %v1513 = vrot.slane %v1377, 6
  %v1514 = vrot.slane %v1378, 6
  %v1515 = vrot.slane %v1379, 6
  %v1524 = vrot.slane %v1372, 7
  %v1525 = vrot.slane %v1373, 7
  %v1526 = vrot.slane %v1374, 7
  %v1527 = vrot.slane %v1375, 7
  %v1528 = vrot.slane %v1376, 7
  %v1529 = vrot.slane %v1377, 7
  %v1530 = vrot.slane %v1378, 7
  %v1531 = vrot.slane %v1379, 7
  %v1548 = vrot.slane %v1404, 1
  %v1549 = vrot.slane %v1405, 1
  %v1550 = vrot.slane %v1406, 1
  %v1551 = vrot.slane %v1407, 1
  %v1552 = vrot.slane %v1408, 1
  %v1553 = vrot.slane %v1409, 1
  %v1554 = vrot.slane %v1410, 1
  %v1555 = vrot.slane %v1411, 1
  %v1564 = vrot.slane %v1404, 2
  %v1565 = vrot.slane %v1405, 2
  %v1566 = vrot.slane %v1406, 2
  %v1567 = vrot.slane %v1407, 2
  %v1568 = vrot.slane %v1408, 2
  %v1569 = vrot.slane %v1409, 2
  %v1570 = vrot.slane %v1410, 2
  %v1571 = vrot.slane %v1411, 2
  %v1580 = vrot.slane %v1404, 3
  %v1581 = vrot.slane %v1405, 3
  %v1582 = vrot.slane %v1406, 3
  %v1583 = vrot.slane %v1407, 3
  %v1584 = vrot.slane %v1408, 3
  %v1585 = vrot.slane %v1409, 3
  %v1586 = vrot.slane %v1410, 3
  %v1587 = vrot.slane %v1411, 3
  %vm1596 = vcmask 1040384
  %v1597 = vsel %vm1596, %v1340, %v1420
  %v1598 = vsel %vm1596, %v1341, %v1421
  %v1599 = vsel %vm1596, %v1342, %v1422
  %v1600 = vsel %vm1596, %v1343, %v1423
  %v1601 = vsel %vm1596, %v1344, %v1424
  %v1602 = vsel %vm1596, %v1345, %v1425
  %v1603 = vsel %vm1596, %v1346, %v1426
  %v1604 = vsel %vm1596, %v1347, %v1427
  %vm1605 = vcmask 1041408
  %v1606 = vsel %vm1605, %v1597, %v1436
  %v1607 = vsel %vm1605, %v1598, %v1437
  %v1608 = vsel %vm1605, %v1599, %v1438
  %v1609 = vsel %vm1605, %v1600, %v1439
  %v1610 = vsel %vm1605, %v1601, %v1440
  %v1611 = vsel %vm1605, %v1602, %v1441
  %v1612 = vsel %vm1605, %v1603, %v1442
  %v1613 = vsel %vm1605, %v1604, %v1443
  %vm1614 = vcmask 1042432
  %v1615 = vsel %vm1614, %v1606, %v1452
  %v1616 = vsel %vm1614, %v1607, %v1453
  %v1617 = vsel %vm1614, %v1608, %v1454
  %v1618 = vsel %vm1614, %v1609, %v1455
  %v1619 = vsel %vm1614, %v1610, %v1456
  %v1620 = vsel %vm1614, %v1611, %v1457
  %v1621 = vsel %vm1614, %v1612, %v1458
  %v1622 = vsel %vm1614, %v1613, %v1459
  %v1623 = vsel %vm484, %v1615, %v1476
  %v1624 = vsel %vm484, %v1616, %v1477
  %v1625 = vsel %vm484, %v1617, %v1478
  %v1626 = vsel %vm484, %v1618, %v1479
  %v1627 = vsel %vm484, %v1619, %v1480
  %v1628 = vsel %vm484, %v1620, %v1481
  %v1629 = vsel %vm484, %v1621, %v1482
  %v1630 = vsel %vm484, %v1622, %v1483
  %v1631 = vsel %vm355, %v1623, %v1492
  %v1632 = vsel %vm355, %v1624, %v1493
  %v1633 = vsel %vm355, %v1625, %v1494
  %v1634 = vsel %vm355, %v1626, %v1495
  %v1635 = vsel %vm355, %v1627, %v1496
  %v1636 = vsel %vm355, %v1628, %v1497
  %v1637 = vsel %vm355, %v1629, %v1498
  %v1638 = vsel %vm355, %v1630, %v1499
  %v1639 = vsel %vm226, %v1631, %v1508
  %v1640 = vsel %vm226, %v1632, %v1509
  %v1641 = vsel %vm226, %v1633, %v1510
  %v1642 = vsel %vm226, %v1634, %v1511
  %v1643 = vsel %vm226, %v1635, %v1512
  %v1644 = vsel %vm226, %v1636, %v1513
  %v1645 = vsel %vm226, %v1637, %v1514
  %v1646 = vsel %vm226, %v1638, %v1515
  %v1647 = vsel %vm97, %v1639, %v1524
  %v1648 = vsel %vm97, %v1640, %v1525
  %v1649 = vsel %vm97, %v1641, %v1526
  %v1650 = vsel %vm97, %v1642, %v1527
  %v1651 = vsel %vm97, %v1643, %v1528
  %v1652 = vsel %vm97, %v1644, %v1529
  %v1653 = vsel %vm97, %v1645, %v1530
  %v1654 = vsel %vm97, %v1646, %v1531
  %v1655 = vsel %vm1596, %v1404, %v1548
  %v1656 = vsel %vm1596, %v1405, %v1549
  %v1657 = vsel %vm1596, %v1406, %v1550
  %v1658 = vsel %vm1596, %v1407, %v1551
  %v1659 = vsel %vm1596, %v1408, %v1552
  %v1660 = vsel %vm1596, %v1409, %v1553
  %v1661 = vsel %vm1596, %v1410, %v1554
  %v1662 = vsel %vm1596, %v1411, %v1555
  %v1663 = vsel %vm1605, %v1655, %v1564
  %v1664 = vsel %vm1605, %v1656, %v1565
  %v1665 = vsel %vm1605, %v1657, %v1566
  %v1666 = vsel %vm1605, %v1658, %v1567
  %v1667 = vsel %vm1605, %v1659, %v1568
  %v1668 = vsel %vm1605, %v1660, %v1569
  %v1669 = vsel %vm1605, %v1661, %v1570
  %v1670 = vsel %vm1605, %v1662, %v1571
  %v1671 = vsel %vm1614, %v1663, %v1580
  %v1672 = vsel %vm1614, %v1664, %v1581
  %v1673 = vsel %vm1614, %v1665, %v1582
  %v1674 = vsel %vm1614, %v1666, %v1583
  %v1675 = vsel %vm1614, %v1667, %v1584
  %v1676 = vsel %vm1614, %v1668, %v1585
  %v1677 = vsel %vm1614, %v1669, %v1586
  %v1678 = vsel %vm1614, %v1670, %v1587
  %v1695 = vrot.slane %v1647, 1
  %v1696 = vrot.slane %v1671, 1
  %v1697 = vsel %vm97, %v1695, %v1696
  %v1698 = vrot.slane %v1648, 1
  %v1699 = vrot.slane %v1672, 1
  %v1700 = vsel %vm97, %v1698, %v1699
  %v1701 = vrot.slane %v1649, 1
  %v1702 = vrot.slane %v1673, 1
  %v1703 = vsel %vm97, %v1701, %v1702
  %v1704 = vrot.slane %v1650, 1
  %v1705 = vrot.slane %v1674, 1
  %v1706 = vsel %vm97, %v1704, %v1705
  %v1707 = vrot.slane %v1651, 1
  %v1708 = vrot.slane %v1675, 1
  %v1709 = vsel %vm97, %v1707, %v1708
  %v1710 = vrot.slane %v1652, 1
  %v1711 = vrot.slane %v1676, 1
  %v1712 = vsel %vm97, %v1710, %v1711
  %v1713 = vrot.slane %v1653, 1
  %v1714 = vrot.slane %v1677, 1
  %v1715 = vsel %vm97, %v1713, %v1714
  %v1716 = vrot.slane %v1654, 1
  %v1717 = vrot.slane %v1678, 1
  %v1718 = vsel %vm97, %v1716, %v1717
  %1719 = vrot.lane.b32.xlu0 %v1697, 120
  %v1720 = vpop.permute.xlu0 %1719
  %1721 = vrot.lane.b32.xlu0 %v1700, 120
  %v1722 = vpop.permute.xlu0 %1721
  %1723 = vrot.lane.b32.xlu0 %v1703, 120
  %v1724 = vpop.permute.xlu0 %1723
  %1725 = vrot.lane.b32.xlu0 %v1706, 120
  %v1726 = vpop.permute.xlu0 %1725
  %1727 = vrot.lane.b32.xlu0 %v1709, 120
  %v1728 = vpop.permute.xlu0 %1727
  %1729 = vrot.lane.b32.xlu0 %v1712, 120
  %v1730 = vpop.permute.xlu0 %1729
  %1731 = vrot.lane.b32.xlu0 %v1715, 120
  %v1732 = vpop.permute.xlu0 %1731
  %1733 = vrot.lane.b32.xlu0 %v1718, 120
  %v1734 = vpop.permute.xlu0 %1733
  %v1743 = vrot.slane %v1647, 2
  %v1744 = vrot.slane %v1671, 2
  %v1745 = vsel %vm226, %v1743, %v1744
  %v1746 = vrot.slane %v1648, 2
  %v1747 = vrot.slane %v1672, 2
  %v1748 = vsel %vm226, %v1746, %v1747
  %v1749 = vrot.slane %v1649, 2
  %v1750 = vrot.slane %v1673, 2
  %v1751 = vsel %vm226, %v1749, %v1750
  %v1752 = vrot.slane %v1650, 2
  %v1753 = vrot.slane %v1674, 2
  %v1754 = vsel %vm226, %v1752, %v1753
  %v1755 = vrot.slane %v1651, 2
  %v1756 = vrot.slane %v1675, 2
  %v1757 = vsel %vm226, %v1755, %v1756
  %v1758 = vrot.slane %v1652, 2
  %v1759 = vrot.slane %v1676, 2
  %v1760 = vsel %vm226, %v1758, %v1759
  %v1761 = vrot.slane %v1653, 2
  %v1762 = vrot.slane %v1677, 2
  %v1763 = vsel %vm226, %v1761, %v1762
  %v1764 = vrot.slane %v1654, 2
  %v1765 = vrot.slane %v1678, 2
  %v1766 = vsel %vm226, %v1764, %v1765
  %1767 = vrot.lane.b32.xlu0 %v1745, 112
  %v1768 = vpop.permute.xlu0 %1767
  %1769 = vrot.lane.b32.xlu0 %v1748, 112
  %v1770 = vpop.permute.xlu0 %1769
  %1771 = vrot.lane.b32.xlu0 %v1751, 112
  %v1772 = vpop.permute.xlu0 %1771
  %1773 = vrot.lane.b32.xlu0 %v1754, 112
  %v1774 = vpop.permute.xlu0 %1773
  %1775 = vrot.lane.b32.xlu0 %v1757, 112
  %v1776 = vpop.permute.xlu0 %1775
  %1777 = vrot.lane.b32.xlu0 %v1760, 112
  %v1778 = vpop.permute.xlu0 %1777
  %1779 = vrot.lane.b32.xlu0 %v1763, 112
  %v1780 = vpop.permute.xlu0 %1779
  %1781 = vrot.lane.b32.xlu0 %v1766, 112
  %v1782 = vpop.permute.xlu0 %1781
  %v1791 = vrot.slane %v1647, 3
  %v1792 = vrot.slane %v1671, 3
  %v1793 = vsel %vm355, %v1791, %v1792
  %v1794 = vrot.slane %v1648, 3
  %v1795 = vrot.slane %v1672, 3
  %v1796 = vsel %vm355, %v1794, %v1795
  %v1797 = vrot.slane %v1649, 3
  %v1798 = vrot.slane %v1673, 3
  %v1799 = vsel %vm355, %v1797, %v1798
  %v1800 = vrot.slane %v1650, 3
  %v1801 = vrot.slane %v1674, 3
  %v1802 = vsel %vm355, %v1800, %v1801
  %v1803 = vrot.slane %v1651, 3
  %v1804 = vrot.slane %v1675, 3
  %v1805 = vsel %vm355, %v1803, %v1804
  %v1806 = vrot.slane %v1652, 3
  %v1807 = vrot.slane %v1676, 3
  %v1808 = vsel %vm355, %v1806, %v1807
  %v1809 = vrot.slane %v1653, 3
  %v1810 = vrot.slane %v1677, 3
  %v1811 = vsel %vm355, %v1809, %v1810
  %v1812 = vrot.slane %v1654, 3
  %v1813 = vrot.slane %v1678, 3
  %v1814 = vsel %vm355, %v1812, %v1813
  %1815 = vrot.lane.b32.xlu0 %v1793, 104
  %v1816 = vpop.permute.xlu0 %1815
  %1817 = vrot.lane.b32.xlu0 %v1796, 104
  %v1818 = vpop.permute.xlu0 %1817
  %1819 = vrot.lane.b32.xlu0 %v1799, 104
  %v1820 = vpop.permute.xlu0 %1819
  %1821 = vrot.lane.b32.xlu0 %v1802, 104
  %v1822 = vpop.permute.xlu0 %1821
  %1823 = vrot.lane.b32.xlu0 %v1805, 104
  %v1824 = vpop.permute.xlu0 %1823
  %1825 = vrot.lane.b32.xlu0 %v1808, 104
  %v1826 = vpop.permute.xlu0 %1825
  %1827 = vrot.lane.b32.xlu0 %v1811, 104
  %v1828 = vpop.permute.xlu0 %1827
  %1829 = vrot.lane.b32.xlu0 %v1814, 104
  %v1830 = vpop.permute.xlu0 %1829
  %v1839 = vrot.slane %v1647, 4
  %v1840 = vrot.slane %v1671, 4
  %v1841 = vsel %vm484, %v1839, %v1840
  %v1842 = vrot.slane %v1648, 4
  %v1843 = vrot.slane %v1672, 4
  %v1844 = vsel %vm484, %v1842, %v1843
  %v1845 = vrot.slane %v1649, 4
  %v1846 = vrot.slane %v1673, 4
  %v1847 = vsel %vm484, %v1845, %v1846
  %v1848 = vrot.slane %v1650, 4
  %v1849 = vrot.slane %v1674, 4
  %v1850 = vsel %vm484, %v1848, %v1849
  %v1851 = vrot.slane %v1651, 4
  %v1852 = vrot.slane %v1675, 4
  %v1853 = vsel %vm484, %v1851, %v1852
  %v1854 = vrot.slane %v1652, 4
  %v1855 = vrot.slane %v1676, 4
  %v1856 = vsel %vm484, %v1854, %v1855
  %v1857 = vrot.slane %v1653, 4
  %v1858 = vrot.slane %v1677, 4
  %v1859 = vsel %vm484, %v1857, %v1858
  %v1860 = vrot.slane %v1654, 4
  %v1861 = vrot.slane %v1678, 4
  %v1862 = vsel %vm484, %v1860, %v1861
  %1863 = vrot.lane.b32.xlu0 %v1841, 96
  %v1864 = vpop.permute.xlu0 %1863
  %1865 = vrot.lane.b32.xlu0 %v1844, 96
  %v1866 = vpop.permute.xlu0 %1865
  %1867 = vrot.lane.b32.xlu0 %v1847, 96
  %v1868 = vpop.permute.xlu0 %1867
  %1869 = vrot.lane.b32.xlu0 %v1850, 96
  %v1870 = vpop.permute.xlu0 %1869
  %1871 = vrot.lane.b32.xlu0 %v1853, 96
  %v1872 = vpop.permute.xlu0 %1871
  %1873 = vrot.lane.b32.xlu0 %v1856, 96
  %v1874 = vpop.permute.xlu0 %1873
  %1875 = vrot.lane.b32.xlu0 %v1859, 96
  %v1876 = vpop.permute.xlu0 %1875
  %1877 = vrot.lane.b32.xlu0 %v1862, 96
  %v1878 = vpop.permute.xlu0 %1877
  %vm1887 = vcmask 982016
  %v1888 = vsel %vm1887, %v1647, %v1720
  %v1889 = vsel %vm1887, %v1648, %v1722
  %v1890 = vsel %vm1887, %v1649, %v1724
  %v1891 = vsel %vm1887, %v1650, %v1726
  %v1892 = vsel %vm1887, %v1651, %v1728
  %v1893 = vsel %vm1887, %v1652, %v1730
  %v1894 = vsel %vm1887, %v1653, %v1732
  %v1895 = vsel %vm1887, %v1654, %v1734
  %v1896 = vsel %vm688, %v1720, %v1768
  %v1897 = vsel %vm688, %v1722, %v1770
  %v1898 = vsel %vm688, %v1724, %v1772
  %v1899 = vsel %vm688, %v1726, %v1774
  %v1900 = vsel %vm688, %v1728, %v1776
  %v1901 = vsel %vm688, %v1730, %v1778
  %v1902 = vsel %vm688, %v1732, %v1780
  %v1903 = vsel %vm688, %v1734, %v1782
  %vm1904 = vcmask 850944
  %v1905 = vsel %vm1904, %v1768, %v1816
  %v1906 = vsel %vm1904, %v1770, %v1818
  %v1907 = vsel %vm1904, %v1772, %v1820
  %v1908 = vsel %vm1904, %v1774, %v1822
  %v1909 = vsel %vm1904, %v1776, %v1824
  %v1910 = vsel %vm1904, %v1778, %v1826
  %v1911 = vsel %vm1904, %v1780, %v1828
  %v1912 = vsel %vm1904, %v1782, %v1830
  %vm1913 = vcmask 785408
  %v1914 = vsel %vm1913, %v1816, %v1864
  %v1915 = vsel %vm1913, %v1818, %v1866
  %v1916 = vsel %vm1913, %v1820, %v1868
  %v1917 = vsel %vm1913, %v1822, %v1870
  %v1918 = vsel %vm1913, %v1824, %v1872
  %v1919 = vsel %vm1913, %v1826, %v1874
  %v1920 = vsel %vm1913, %v1828, %v1876
  %v1921 = vsel %vm1913, %v1830, %v1878
  %v1922 = vpack.c.bf16 %v1889, %v1888
  %v1923 = vpack.c.bf16 %v1897, %v1896
  %v1924 = vpack.c.bf16 %v1906, %v1905
  %v1925 = vpack.c.bf16 %v1915, %v1914
  %v1926 = vpack.c.bf16 %v1866, %v1864
  %v1927 = vpack.c.bf16 %v1891, %v1890
  %v1928 = vpack.c.bf16 %v1899, %v1898
  %v1929 = vpack.c.bf16 %v1908, %v1907
  %v1930 = vpack.c.bf16 %v1917, %v1916
  %v1931 = vpack.c.bf16 %v1870, %v1868
  %v1932 = vpack.c.bf16 %v1893, %v1892
  %v1933 = vpack.c.bf16 %v1901, %v1900
  %v1934 = vpack.c.bf16 %v1910, %v1909
  %v1935 = vpack.c.bf16 %v1919, %v1918
  %v1936 = vpack.c.bf16 %v1874, %v1872
  %v1937 = vpack.c.bf16 %v1895, %v1894
  %v1938 = vpack.c.bf16 %v1903, %v1902
  %v1939 = vpack.c.bf16 %v1912, %v1911
  %v1940 = vpack.c.bf16 %v1921, %v1920
  %v1941 = vpack.c.bf16 %v1878, %v1876
  %v1942 = vld [vmem:[%s3] sm:$0xff]
  %v1943 = vld [vmem:[%s3 + $0x8] sm:$0xff]
  %v1944 = vld [vmem:[%s3 + $0x10] sm:$0xff]
  %v1945 = vld [vmem:[%s3 + $0x18] sm:$0xff]
  %v1946 = vld [vmem:[%s3 + $0x20] sm:$0xff]
  %v1947 = vld [vmem:[%s3 + $0x28] sm:$0xff]
  %v1948 = vld [vmem:[%s3 + $0x30] sm:$0xff]
  %v1949 = vld [vmem:[%s3 + $0x38] sm:$0xff]
  %v1950 = vld [vmem:[%s3 + $0x40] sm:$0xff]
  %v1951 = vld [vmem:[%s3 + $0x48] sm:$0xff]
  %v1952 = vld [vmem:[%s3 + $0x50] sm:$0xff]
  %v1953 = vld [vmem:[%s3 + $0x58] sm:$0xff]
  %v1954 = vld [vmem:[%s3 + $0x60] sm:$0xff]
  %v1955 = vld [vmem:[%s3 + $0x68] sm:$0xff]
  %v1956 = vld [vmem:[%s3 + $0x70] sm:$0xff]
  %v1957 = vld [vmem:[%s3 + $0x78] sm:$0xff]
  %v1958 = vld [vmem:[%s3 + $0x80] sm:$0xff]
  %v1959 = vld [vmem:[%s3 + $0x88] sm:$0xff]
  %v1960 = vld [vmem:[%s3 + $0x90] sm:$0xff]
  %v1961 = vld [vmem:[%s3 + $0x98] sm:$0xff]
  %v1962 = vld [vmem:[%s3 + $0xa0] sm:$0xff]
  %v1963 = vld [vmem:[%s3 + $0xa8] sm:$0xff]
  %v1964 = vld [vmem:[%s3 + $0xb0] sm:$0xff]
  %v1965 = vld [vmem:[%s3 + $0xb8] sm:$0xff]
  %v1966 = vld [vmem:[%s3 + $0xc0] sm:$0xff]
  %v1967 = vld [vmem:[%s3 + $0xc8] sm:$0xff]
  %v1968 = vld [vmem:[%s3 + $0xd0] sm:$0xff]
  %v1969 = vld [vmem:[%s3 + $0xd8] sm:$0xff]
  %v1970 = vld [vmem:[%s3 + $0xe0] sm:$0xff]
  %v1971 = vld [vmem:[%s3 + $0xe8] sm:$0xff]
  %v1972 = vld [vmem:[%s3 + $0xf0] sm:$0xff]
  %v1973 = vld [vmem:[%s3 + $0xf8] sm:$0xff]
  %v1974 = vld [vmem:[%s3 + $0x100] sm:$0xff]
  %v1975 = vld [vmem:[%s3 + $0x108] sm:$0xff]
  %v1976 = vld [vmem:[%s3 + $0x110] sm:$0xff]
  %v1977 = vld [vmem:[%s3 + $0x118] sm:$0xff]
  %v1978 = vld [vmem:[%s3 + $0x120] sm:$0xff]
  %v1979 = vld [vmem:[%s3 + $0x128] sm:$0xff]
  %v1980 = vld [vmem:[%s3 + $0x130] sm:$0xff]
  %v1981 = vld [vmem:[%s3 + $0x138] sm:$0xff]
  %v1982 = vld [vmem:[%s3 + $0x140] sm:$0xff]
  %v1983 = vld [vmem:[%s3 + $0x148] sm:$0xff]
  %v1984 = vld [vmem:[%s3 + $0x150] sm:$0xff]
  %v1985 = vld [vmem:[%s3 + $0x158] sm:$0xff]
  %v1986 = vld [vmem:[%s3 + $0x160] sm:$0xff]
  %v1987 = vld [vmem:[%s3 + $0x168] sm:$0xff]
  %v1988 = vld [vmem:[%s3 + $0x170] sm:$0xff]
  %v1989 = vld [vmem:[%s3 + $0x178] sm:$0xff]
  %v1990 = vld [vmem:[%s3 + $0x180] sm:$0xff]
  %v1991 = vld [vmem:[%s3 + $0x188] sm:$0xff]
  %v1992 = vld [vmem:[%s3 + $0x190] sm:$0xff]
  %v1993 = vld [vmem:[%s3 + $0x198] sm:$0xff]
  %v1994 = vld [vmem:[%s3 + $0x1a0] sm:$0xff]
  %v1995 = vld [vmem:[%s3 + $0x1a8] sm:$0xff]
  %v1996 = vld [vmem:[%s3 + $0x1b0] sm:$0xff]
  %v1997 = vld [vmem:[%s3 + $0x1b8] sm:$0xff]
  %v1998 = vld [vmem:[%s3 + $0x1c0] sm:$0xff]
  %v1999 = vld [vmem:[%s3 + $0x1c8] sm:$0xff]
  %v2000 = vld [vmem:[%s3 + $0x1d0] sm:$0xff]
  %v2001 = vld [vmem:[%s3 + $0x1d8] sm:$0xff]
  %v2002 = vld [vmem:[%s3 + $0x1e0] sm:$0xff]
  %v2003 = vld [vmem:[%s3 + $0x1e8] sm:$0xff]
  %v2004 = vld [vmem:[%s3 + $0x1f0] sm:$0xff]
  %v2005 = vld [vmem:[%s3 + $0x1f8] sm:$0xff]
  %v2006 = vld [vmem:[%s3 + $0x200] sm:$0xff]
  %v2007 = vld [vmem:[%s3 + $0x208] sm:$0xff]
  %v2008 = vld [vmem:[%s3 + $0x210] sm:$0xff]
  %v2009 = vld [vmem:[%s3 + $0x218] sm:$0xff]
  %v2010 = vld [vmem:[%s3 + $0x220] sm:$0xff]
  %v2011 = vld [vmem:[%s3 + $0x228] sm:$0xff]
  %v2012 = vld [vmem:[%s3 + $0x230] sm:$0xff]
  %v2013 = vld [vmem:[%s3 + $0x238] sm:$0xff]
  %v2014 = vld [vmem:[%s3 + $0x240] sm:$0xff]
  %v2015 = vld [vmem:[%s3 + $0x248] sm:$0xff]
  %v2016 = vld [vmem:[%s3 + $0x250] sm:$0xff]
  %v2017 = vld [vmem:[%s4] sm:$0x3]
  %v2019 = vlaneseq
  %v2020 = vshrl.u32 %v2019, 7
  %v2021 = vsub.s32 0, %v2020
  %v2022 = vrot.slane %v2017, %v2021
  %v2023 = vlaneseq
  %v2024 = vshrl.u32 %v2023, 7
  %v2025 = vsub.s32 1, %v2024
  %v2026 = vrot.slane %v2017, %v2025
  %v2104 = vunpack.c.l.b16 %v1942
  %v2105 = vunpack.c.h.b16 %v1942
  %v2106 = vunpack.c.l.b16 %v1943
  %v2107 = vunpack.c.h.b16 %v1943
  %v2108 = vunpack.c.l.b16 %v1944
  %v2109 = vunpack.c.h.b16 %v1944
  %v2110 = vunpack.c.l.b16 %v1945
  %v2111 = vunpack.c.h.b16 %v1945
  %v2112 = vunpack.c.l.b16 %v1946
  %v2113 = vunpack.c.h.b16 %v1946
  %v2114 = vunpack.c.l.b16 %v1947
  %v2115 = vunpack.c.h.b16 %v1947
  %v2116 = vunpack.c.l.b16 %v1948
  %v2117 = vunpack.c.h.b16 %v1948
  %v2118 = vunpack.c.l.b16 %v1949
  %v2119 = vunpack.c.h.b16 %v1949
  %v2120 = vunpack.c.l.b16 %v1950
  %v2121 = vunpack.c.h.b16 %v1950
  %v2122 = vunpack.c.l.b16 %v1951
  %v2123 = vunpack.c.h.b16 %v1951
  %v2124 = vunpack.c.l.b16 %v1952
  %v2125 = vunpack.c.h.b16 %v1952
  %v2126 = vunpack.c.l.b16 %v1953
  %v2127 = vunpack.c.h.b16 %v1953
  %v2128 = vunpack.c.l.b16 %v1954
  %v2129 = vunpack.c.h.b16 %v1954
  %v2130 = vunpack.c.l.b16 %v1955
  %v2131 = vunpack.c.h.b16 %v1955
  %v2132 = vunpack.c.l.b16 %v1956
  %v2133 = vunpack.c.h.b16 %v1956
  %v2134 = vunpack.c.l.b16 %v1957
  %v2135 = vunpack.c.h.b16 %v1957
  %v2136 = vunpack.c.l.b16 %v1958
  %v2137 = vunpack.c.h.b16 %v1958
  %v2138 = vunpack.c.l.b16 %v1959
  %v2139 = vunpack.c.h.b16 %v1959
  %v2140 = vunpack.c.l.b16 %v1960
  %v2141 = vunpack.c.h.b16 %v1960
  %v2142 = vunpack.c.l.b16 %v1961
  %v2143 = vunpack.c.h.b16 %v1961
  %v2144 = vunpack.c.l.b16 %v1962
  %v2145 = vunpack.c.h.b16 %v1962
  %v2146 = vunpack.c.l.b16 %v1963
  %v2147 = vunpack.c.h.b16 %v1963
  %v2148 = vunpack.c.l.b16 %v1964
  %v2149 = vunpack.c.h.b16 %v1964
  %v2150 = vunpack.c.l.b16 %v1965
  %v2151 = vunpack.c.h.b16 %v1965
  %v2152 = vunpack.c.l.b16 %v1966
  %v2153 = vunpack.c.h.b16 %v1966
  %v2154 = vunpack.c.l.b16 %v1967
  %v2155 = vunpack.c.h.b16 %v1967
  %v2156 = vunpack.c.l.b16 %v1968
  %v2157 = vunpack.c.h.b16 %v1968
  %v2158 = vunpack.c.l.b16 %v1969
  %v2159 = vunpack.c.h.b16 %v1969
  %v2160 = vunpack.c.l.b16 %v1970
  %v2161 = vunpack.c.h.b16 %v1970
  %v2162 = vunpack.c.l.b16 %v1971
  %v2163 = vunpack.c.h.b16 %v1971
  %v2164 = vunpack.c.l.b16 %v1972
  %v2165 = vunpack.c.h.b16 %v1972
  %v2166 = vunpack.c.l.b16 %v1973
  %v2167 = vunpack.c.h.b16 %v1973
  %v2168 = vunpack.c.l.b16 %v1974
  %v2169 = vunpack.c.h.b16 %v1974
  %v2170 = vunpack.c.l.b16 %v1975
  %v2171 = vunpack.c.h.b16 %v1975
  %v2172 = vunpack.c.l.b16 %v1976
  %v2173 = vunpack.c.h.b16 %v1976
  %v2174 = vunpack.c.l.b16 %v1977
  %v2175 = vunpack.c.h.b16 %v1977
  %v2176 = vunpack.c.l.b16 %v1978
  %v2177 = vunpack.c.h.b16 %v1978
  %v2178 = vunpack.c.l.b16 %v1979
  %v2179 = vunpack.c.h.b16 %v1979
  %v2180 = vunpack.c.l.b16 %v1980
  %v2181 = vunpack.c.h.b16 %v1980
  %v2182 = vunpack.c.l.b16 %v1981
  %v2183 = vunpack.c.h.b16 %v1981
  %v2184 = vunpack.c.l.b16 %v1982
  %v2185 = vunpack.c.h.b16 %v1982
  %v2186 = vunpack.c.l.b16 %v1983
  %v2187 = vunpack.c.h.b16 %v1983
  %v2188 = vunpack.c.l.b16 %v1984
  %v2189 = vunpack.c.h.b16 %v1984
  %v2190 = vunpack.c.l.b16 %v1985
  %v2191 = vunpack.c.h.b16 %v1985
  %v2192 = vunpack.c.l.b16 %v1986
  %v2193 = vunpack.c.h.b16 %v1986
  %v2194 = vunpack.c.l.b16 %v1987
  %v2195 = vunpack.c.h.b16 %v1987
  %v2196 = vunpack.c.l.b16 %v1988
  %v2197 = vunpack.c.h.b16 %v1988
  %v2198 = vunpack.c.l.b16 %v1989
  %v2199 = vunpack.c.h.b16 %v1989
  %v2200 = vunpack.c.l.b16 %v1990
  %v2201 = vunpack.c.h.b16 %v1990
  %v2202 = vunpack.c.l.b16 %v1991
  %v2203 = vunpack.c.h.b16 %v1991
  %v2204 = vunpack.c.l.b16 %v1992
  %v2205 = vunpack.c.h.b16 %v1992
  %v2206 = vunpack.c.l.b16 %v1993
  %v2207 = vunpack.c.h.b16 %v1993
  %v2208 = vunpack.c.l.b16 %v1994
  %v2209 = vunpack.c.h.b16 %v1994
  %v2210 = vunpack.c.l.b16 %v1995
  %v2211 = vunpack.c.h.b16 %v1995
  %v2212 = vunpack.c.l.b16 %v1996
  %v2213 = vunpack.c.h.b16 %v1996
  %v2214 = vunpack.c.l.b16 %v1997
  %v2215 = vunpack.c.h.b16 %v1997
  %v2216 = vunpack.c.l.b16 %v1998
  %v2217 = vunpack.c.h.b16 %v1998
  %v2218 = vunpack.c.l.b16 %v1999
  %v2219 = vunpack.c.h.b16 %v1999
  %v2220 = vunpack.c.l.b16 %v2000
  %v2221 = vunpack.c.h.b16 %v2000
  %v2222 = vunpack.c.l.b16 %v2001
  %v2223 = vunpack.c.h.b16 %v2001
  %v2224 = vunpack.c.l.b16 %v2002
  %v2225 = vunpack.c.h.b16 %v2002
  %v2226 = vunpack.c.l.b16 %v2003
  %v2227 = vunpack.c.h.b16 %v2003
  %v2228 = vunpack.c.l.b16 %v2004
  %v2229 = vunpack.c.h.b16 %v2004
  %v2230 = vunpack.c.l.b16 %v2005
  %v2231 = vunpack.c.h.b16 %v2005
  %v2232 = vunpack.c.l.b16 %v2006
  %v2233 = vunpack.c.h.b16 %v2006
  %v2234 = vunpack.c.l.b16 %v2007
  %v2235 = vunpack.c.h.b16 %v2007
  %v2236 = vunpack.c.l.b16 %v2008
  %v2237 = vunpack.c.h.b16 %v2008
  %v2238 = vunpack.c.l.b16 %v2009
  %v2239 = vunpack.c.h.b16 %v2009
  %v2240 = vunpack.c.l.b16 %v2010
  %v2241 = vunpack.c.h.b16 %v2010
  %v2242 = vunpack.c.l.b16 %v2011
  %v2243 = vunpack.c.h.b16 %v2011
  %v2244 = vunpack.c.l.b16 %v2012
  %v2245 = vunpack.c.h.b16 %v2012
  %v2246 = vunpack.c.l.b16 %v2013
  %v2247 = vunpack.c.h.b16 %v2013
  %v2248 = vunpack.c.l.b16 %v2014
  %v2249 = vunpack.c.h.b16 %v2014
  %v2250 = vunpack.c.l.b16 %v2015
  %v2251 = vunpack.c.h.b16 %v2015
  %v2252 = vunpack.c.l.b16 %v2016
  %v2253 = vunpack.c.h.b16 %v2016
  %v2254 = vpack.c.b16 %v2106, %v2104
  %v2255 = vpack.c.b16 %v2107, %v2105
  %v2256 = vpack.c.b16 %v2110, %v2108
  %v2257 = vpack.c.b16 %v2111, %v2109
  %v2258 = vpack.c.b16 %v2114, %v2112
  %v2259 = vpack.c.b16 %v2115, %v2113
  %v2260 = vpack.c.b16 %v2118, %v2116
  %v2261 = vpack.c.b16 %v2119, %v2117
  %v2262 = vpack.c.b16 %v2122, %v2120
  %v2263 = vpack.c.b16 %v2123, %v2121
  %v2264 = vpack.c.b16 %v2126, %v2124
  %v2265 = vpack.c.b16 %v2127, %v2125
  %v2266 = vpack.c.b16 %v2130, %v2128
  %v2267 = vpack.c.b16 %v2131, %v2129
  %v2268 = vpack.c.b16 %v2134, %v2132
  %v2269 = vpack.c.b16 %v2135, %v2133
  %v2270 = vpack.c.b16 %v2138, %v2136
  %v2271 = vpack.c.b16 %v2139, %v2137
  %v2272 = vpack.c.b16 %v2142, %v2140
  %v2273 = vpack.c.b16 %v2143, %v2141
  %v2274 = vpack.c.b16 %v2146, %v2144
  %v2275 = vpack.c.b16 %v2147, %v2145
  %v2276 = vpack.c.b16 %v2150, %v2148
  %v2277 = vpack.c.b16 %v2151, %v2149
  %v2278 = vpack.c.b16 %v2154, %v2152
  %v2279 = vpack.c.b16 %v2155, %v2153
  %v2280 = vpack.c.b16 %v2158, %v2156
  %v2281 = vpack.c.b16 %v2159, %v2157
  %v2282 = vpack.c.b16 %v2162, %v2160
  %v2283 = vpack.c.b16 %v2163, %v2161
  %v2284 = vpack.c.b16 %v2166, %v2164
  %v2285 = vpack.c.b16 %v2167, %v2165
  %v2286 = vpack.c.b16 %v2170, %v2168
  %v2287 = vpack.c.b16 %v2171, %v2169
  %v2288 = vpack.c.b16 %v2174, %v2172
  %v2289 = vpack.c.b16 %v2175, %v2173
  %v2290 = vpack.c.b16 %v2178, %v2176
  %v2291 = vpack.c.b16 %v2179, %v2177
  %v2292 = vpack.c.b16 %v2182, %v2180
  %v2293 = vpack.c.b16 %v2183, %v2181
  %v2294 = vpack.c.b16 %v2186, %v2184
  %v2295 = vpack.c.b16 %v2187, %v2185
  %v2296 = vpack.c.b16 %v2190, %v2188
  %v2297 = vpack.c.b16 %v2191, %v2189
  %v2298 = vpack.c.b16 %v2194, %v2192
  %v2299 = vpack.c.b16 %v2195, %v2193
  %v2300 = vpack.c.b16 %v2198, %v2196
  %v2301 = vpack.c.b16 %v2199, %v2197
  %v2302 = vpack.c.b16 %v2202, %v2200
  %v2303 = vpack.c.b16 %v2203, %v2201
  %v2304 = vpack.c.b16 %v2206, %v2204
  %v2305 = vpack.c.b16 %v2207, %v2205
  %v2306 = vpack.c.b16 %v2210, %v2208
  %v2307 = vpack.c.b16 %v2211, %v2209
  %v2308 = vpack.c.b16 %v2214, %v2212
  %v2309 = vpack.c.b16 %v2215, %v2213
  %v2310 = vpack.c.b16 %v2218, %v2216
  %v2311 = vpack.c.b16 %v2219, %v2217
  %v2312 = vpack.c.b16 %v2222, %v2220
  %v2313 = vpack.c.b16 %v2223, %v2221
  %v2314 = vpack.c.b16 %v2226, %v2224
  %v2315 = vpack.c.b16 %v2227, %v2225
  %v2316 = vpack.c.b16 %v2230, %v2228
  %v2317 = vpack.c.b16 %v2231, %v2229
  %v2318 = vpack.c.b16 %v2234, %v2232
  %v2319 = vpack.c.b16 %v2235, %v2233
  %v2320 = vpack.c.b16 %v2238, %v2236
  %v2321 = vpack.c.b16 %v2239, %v2237
  %v2322 = vpack.c.b16 %v2242, %v2240
  %v2323 = vpack.c.b16 %v2243, %v2241
  %v2324 = vpack.c.b16 %v2246, %v2244
  %v2325 = vpack.c.b16 %v2247, %v2245
  %v2326 = vpack.c.b16 %v2250, %v2248
  %v2327 = vpack.c.b16 %v2251, %v2249
  %v2328 = vpack.c.b16 %v2252, %v2252
  %v2329 = vpack.c.b16 %v2253, %v2253
  %vm2404 = vcmask 719872
  %v2406 = vsel %vm2404, %v1926, 0
  %v2409 = vsel %vm2404, %v1931, 0
  %v2412 = vsel %vm2404, %v1936, 0
  %v2415 = vsel %vm2404, %v1941, 0
  %v2418 = vsel %vm484, %v2328, 0
  %v2421 = vsel %vm484, %v2329, 0
  %2423 = vmatprep.subr.bf16.mxu0 %v2255
  %2424 = vmatpush1.bf16.msra.mxu0 %v2254
  %2425 = vmatprep.subr.bf16.mxu0 %v2257
  %2426 = vmatpush1.bf16.msra.mxu0 %v2256
  %2427 = vmatprep.subr.bf16.mxu0 %v2259
  %2428 = vmatpush1.bf16.msra.mxu0 %v2258
  %2429 = vmatprep.subr.bf16.mxu0 %v2261
  %2430 = vmatpush1.bf16.msra.mxu0 %v2260
  %2431 = vmatprep.subr.bf16.mxu0 %v2263
  %2432 = vmatpush1.bf16.msra.mxu0 %v2262
  %2433 = vmatprep.subr.bf16.mxu0 %v2265
  %2434 = vmatpush1.bf16.msra.mxu0 %v2264
  %2435 = vmatprep.subr.bf16.mxu0 %v2267
  %2436 = vmatpush1.bf16.msra.mxu0 %v2266
  %2437 = vmatprep.subr.bf16.mxu0 %v2269
  %2438 = vmatpush1.bf16.msra.mxu0 %v2268
  %2439 = vmatprep.subr.bf16.mxu0 %v2271
  %2440 = vmatpush1.bf16.msra.mxu0 %v2270
  %2441 = vmatprep.subr.bf16.mxu0 %v2273
  %2442 = vmatpush1.bf16.msra.mxu0 %v2272
  %2443 = vmatprep.subr.bf16.mxu0 %v2275
  %2444 = vmatpush1.bf16.msra.mxu0 %v2274
  %2445 = vmatprep.subr.bf16.mxu0 %v2277
  %2446 = vmatpush1.bf16.msra.mxu0 %v2276
  %2447 = vmatprep.subr.bf16.mxu0 %v2279
  %2448 = vmatpush1.bf16.msra.mxu0 %v2278
  %2449 = vmatprep.subr.bf16.mxu0 %v2281
  %2450 = vmatpush1.bf16.msra.mxu0 %v2280
  %2451 = vmatprep.subr.bf16.mxu0 %v2283
  %2452 = vmatpush1.bf16.msra.mxu0 %v2282
  %2453 = vmatprep.subr.bf16.mxu0 %v2285
  %2454 = vmatpush1.bf16.msra.mxu0 %v2284
  %2455 = vmatprep.mubr.bf16.mxu0 %v1923
  %2456 = vmatmul.mubr.bf16.gmra.mrb[0].mxu0 %v1922
  %v2457 = vpop.f32.mrb[0].mxu0
  %v2458 = vadd.f32 %v2022, %v2457
  %v2459 = vpop.f32.mrb[0].mxu0
  %v2460 = vadd.f32 %v2026, %v2459
  %v2461 = vpop.f32.mrb[0].mxu0
  %v2462 = vadd.f32 %v2022, %v2461
  %v2463 = vpop.f32.mrb[0].mxu0
  %v2464 = vadd.f32 %v2026, %v2463
  %2465 = vmatprep.mubr.bf16.mxu0 %v1928
  %2466 = vmatmul.mubr.bf16.gmra.mrb[0].mxu0 %v1927
  %v2467 = vpop.f32.mrb[0].mxu0
  %v2468 = vadd.f32 %v2022, %v2467
  %v2469 = vpop.f32.mrb[0].mxu0
  %v2470 = vadd.f32 %v2026, %v2469
  %v2471 = vpop.f32.mrb[0].mxu0
  %v2472 = vadd.f32 %v2022, %v2471
  %v2473 = vpop.f32.mrb[0].mxu0
  %v2474 = vadd.f32 %v2026, %v2473
  %2475 = vmatprep.mubr.bf16.mxu0 %v1933
  %2476 = vmatmul.mubr.bf16.gmra.mrb[0].mxu0 %v1932
  %v2477 = vpop.f32.mrb[0].mxu0
  %v2478 = vadd.f32 %v2022, %v2477
  %v2479 = vpop.f32.mrb[0].mxu0
  %v2480 = vadd.f32 %v2026, %v2479
  %v2481 = vpop.f32.mrb[0].mxu0
  %v2482 = vadd.f32 %v2022, %v2481
  %v2483 = vpop.f32.mrb[0].mxu0
  %v2484 = vadd.f32 %v2026, %v2483
  %2485 = vmatprep.mubr.bf16.mxu0 %v1938
  %2486 = vmatmul.mubr.bf16.gmra.mrb[0].mxu0 %v1937
  %v2487 = vpop.f32.mrb[0].mxu0
  %v2488 = vadd.f32 %v2022, %v2487
  %v2489 = vpop.f32.mrb[0].mxu0
  %v2490 = vadd.f32 %v2026, %v2489
  %v2491 = vpop.f32.mrb[0].mxu0
  %v2492 = vadd.f32 %v2022, %v2491
  %v2493 = vpop.f32.mrb[0].mxu0
  %v2494 = vadd.f32 %v2026, %v2493
  %2495 = vdwg.mxu0
  %2496 = vmatprep.subr.bf16.mxu0 %v2287
  %2497 = vmatpush1.bf16.msra.mxu0 %v2286
  %2498 = vmatprep.subr.bf16.mxu0 %v2289
  %2499 = vmatpush1.bf16.msra.mxu0 %v2288
  %2500 = vmatprep.subr.bf16.mxu0 %v2291
  %2501 = vmatpush1.bf16.msra.mxu0 %v2290
  %2502 = vmatprep.subr.bf16.mxu0 %v2293
  %2503 = vmatpush1.bf16.msra.mxu0 %v2292
  %2504 = vmatprep.subr.bf16.mxu0 %v2295
  %2505 = vmatpush1.bf16.msra.mxu0 %v2294
  %2506 = vmatprep.subr.bf16.mxu0 %v2297
  %2507 = vmatpush1.bf16.msra.mxu0 %v2296
  %2508 = vmatprep.subr.bf16.mxu0 %v2299
  %2509 = vmatpush1.bf16.msra.mxu0 %v2298
  %2510 = vmatprep.subr.bf16.mxu0 %v2301
  %2511 = vmatpush1.bf16.msra.mxu0 %v2300
  %2512 = vmatprep.subr.bf16.mxu0 %v2303
  %2513 = vmatpush1.bf16.msra.mxu0 %v2302
  %2514 = vmatprep.subr.bf16.mxu0 %v2305
  %2515 = vmatpush1.bf16.msra.mxu0 %v2304
  %2516 = vmatprep.subr.bf16.mxu0 %v2307
  %2517 = vmatpush1.bf16.msra.mxu0 %v2306
  %2518 = vmatprep.subr.bf16.mxu0 %v2309
  %2519 = vmatpush1.bf16.msra.mxu0 %v2308
  %2520 = vmatprep.subr.bf16.mxu0 %v2311
  %2521 = vmatpush1.bf16.msra.mxu0 %v2310
  %2522 = vmatprep.subr.bf16.mxu0 %v2313
  %2523 = vmatpush1.bf16.msra.mxu0 %v2312
  %2524 = vmatprep.subr.bf16.mxu0 %v2315
  %2525 = vmatpush1.bf16.msra.mxu0 %v2314
  %2526 = vmatprep.subr.bf16.mxu0 %v2317
  %2527 = vmatpush1.bf16.msra.mxu0 %v2316
  %2528 = vmatprep.mubr.bf16.mxu0 %v1925
  %2529 = vmatmul.mubr.bf16.gmra.mrb[0].mxu0 %v1924
  %v2530 = vpop.f32.mrb[0].mxu0
  %v2531 = vadd.f32 %v2458, %v2530
  %v2532 = vpop.f32.mrb[0].mxu0
  %v2533 = vadd.f32 %v2460, %v2532
  %v2534 = vpop.f32.mrb[0].mxu0
  %v2535 = vadd.f32 %v2462, %v2534
  %v2536 = vpop.f32.mrb[0].mxu0
  %v2537 = vadd.f32 %v2464, %v2536
  %2538 = vmatprep.mubr.bf16.mxu0 %v1930
  %2539 = vmatmul.mubr.bf16.gmra.mrb[0].mxu0 %v1929
  %v2540 = vpop.f32.mrb[0].mxu0
  %v2541 = vadd.f32 %v2468, %v2540
  %v2542 = vpop.f32.mrb[0].mxu0
  %v2543 = vadd.f32 %v2470, %v2542
  %v2544 = vpop.f32.mrb[0].mxu0
  %v2545 = vadd.f32 %v2472, %v2544
  %v2546 = vpop.f32.mrb[0].mxu0
  %v2547 = vadd.f32 %v2474, %v2546
  %2548 = vmatprep.mubr.bf16.mxu0 %v1935
  %2549 = vmatmul.mubr.bf16.gmra.mrb[0].mxu0 %v1934
  %v2550 = vpop.f32.mrb[0].mxu0
  %v2551 = vadd.f32 %v2478, %v2550
  %v2552 = vpop.f32.mrb[0].mxu0
  %v2553 = vadd.f32 %v2480, %v2552
  %v2554 = vpop.f32.mrb[0].mxu0
  %v2555 = vadd.f32 %v2482, %v2554
  %v2556 = vpop.f32.mrb[0].mxu0
  %v2557 = vadd.f32 %v2484, %v2556
  %2558 = vmatprep.mubr.bf16.mxu0 %v1940
  %2559 = vmatmul.mubr.bf16.gmra.mrb[0].mxu0 %v1939
  %v2560 = vpop.f32.mrb[0].mxu0
  %v2561 = vadd.f32 %v2488, %v2560
  %v2562 = vpop.f32.mrb[0].mxu0
  %v2563 = vadd.f32 %v2490, %v2562
  %v2564 = vpop.f32.mrb[0].mxu0
  %v2565 = vadd.f32 %v2492, %v2564
  %v2566 = vpop.f32.mrb[0].mxu0
  %v2567 = vadd.f32 %v2494, %v2566
  %2568 = vdwg.mxu0
  %2569 = vmatprep.subr.bf16.mxu0 %v2319
  %2570 = vmatpush1.bf16.msra.mxu0 %v2318
  %2571 = vmatprep.subr.bf16.mxu0 %v2321
  %2572 = vmatpush1.bf16.msra.mxu0 %v2320
  %2573 = vmatprep.subr.bf16.mxu0 %v2323
  %2574 = vmatpush1.bf16.msra.mxu0 %v2322
  %2575 = vmatprep.subr.bf16.mxu0 %v2325
  %2576 = vmatpush1.bf16.msra.mxu0 %v2324
  %2577 = vmatprep.subr.bf16.mxu0 %v2327
  %2578 = vmatpush1.bf16.msra.mxu0 %v2326
  %2579 = vmatprep.subr.bf16.mxu0 %v2421
  %2580 = vmatpush1.bf16.msra.mxu0 %v2418
  %2581 = vmatprep.subr.bf16.mxu0 0
  %2582 = vmatpush1.bf16.msra.mxu0 0
  %2583 = vmatprep.subr.bf16.mxu0 0
  %2584 = vmatpush1.bf16.msra.mxu0 0
  %2585 = vmatprep.subr.bf16.mxu0 0
  %2586 = vmatpush1.bf16.msra.mxu0 0
  %2587 = vmatprep.subr.bf16.mxu0 0
  %2588 = vmatpush1.bf16.msra.mxu0 0
  %2589 = vmatprep.subr.bf16.mxu0 0
  %2590 = vmatpush1.bf16.msra.mxu0 0
  %2591 = vmatprep.subr.bf16.mxu0 0
  %2592 = vmatpush1.bf16.msra.mxu0 0
  %2593 = vmatprep.subr.bf16.mxu0 0
  %2594 = vmatpush1.bf16.msra.mxu0 0
  %2595 = vmatprep.subr.bf16.mxu0 0
  %2596 = vmatpush1.bf16.msra.mxu0 0
  %2597 = vmatprep.subr.bf16.mxu0 0
  %2598 = vmatpush1.bf16.msra.mxu0 0
  %2599 = vmatprep.subr.bf16.mxu0 0
  %2600 = vmatpush1.bf16.msra.mxu0 0
  %2601 = vmatprep.mubr.bf16.mxu0 0
  %2602 = vmatmul.mubr.bf16.gmra.mrb[0].mxu0 %v2406
  %v2603 = vpop.f32.mrb[0].mxu0
  %v2604 = vadd.f32 %v2531, %v2603
  %v2605 = vpop.f32.mrb[0].mxu0
  %v2606 = vadd.f32 %v2533, %v2605
  %v2607 = vpop.f32.mrb[0].mxu0
  %v2608 = vadd.f32 %v2535, %v2607
  %v2609 = vpop.f32.mrb[0].mxu0
  %v2610 = vadd.f32 %v2537, %v2609
  %2611 = vmatprep.mubr.bf16.mxu0 0
  %2612 = vmatmul.mubr.bf16.gmra.mrb[0].mxu0 %v2409
  %v2613 = vpop.f32.mrb[0].mxu0
  %v2614 = vadd.f32 %v2541, %v2613
  %v2615 = vpop.f32.mrb[0].mxu0
  %v2616 = vadd.f32 %v2543, %v2615
  %v2617 = vpop.f32.mrb[0].mxu0
  %v2618 = vadd.f32 %v2545, %v2617
  %v2619 = vpop.f32.mrb[0].mxu0
  %v2620 = vadd.f32 %v2547, %v2619
  %2621 = vmatprep.mubr.bf16.mxu0 0
  %2622 = vmatmul.mubr.bf16.gmra.mrb[0].mxu0 %v2412
  %v2623 = vpop.f32.mrb[0].mxu0
  %v2624 = vadd.f32 %v2551, %v2623
  %v2625 = vpop.f32.mrb[0].mxu0
  %v2626 = vadd.f32 %v2553, %v2625
  %v2627 = vpop.f32.mrb[0].mxu0
  %v2628 = vadd.f32 %v2555, %v2627
  %v2629 = vpop.f32.mrb[0].mxu0
  %v2630 = vadd.f32 %v2557, %v2629
  %2631 = vmatprep.mubr.bf16.mxu0 0
  %2632 = vmatmul.mubr.bf16.gmra.mrb[0].mxu0 %v2415
  %v2633 = vpop.f32.mrb[0].mxu0
  %v2634 = vadd.f32 %v2561, %v2633
  %v2635 = vpop.f32.mrb[0].mxu0
  %v2636 = vadd.f32 %v2563, %v2635
  %v2637 = vpop.f32.mrb[0].mxu0
  %v2638 = vadd.f32 %v2565, %v2637
  %v2639 = vpop.f32.mrb[0].mxu0
  %v2640 = vadd.f32 %v2567, %v2639
  %2641 = vdwg.mxu0
  %v2642 = vmax.f32 %v2604, 0.0
  %v2643 = vmax.f32 %v2606, 0.0
  %v2644 = vmax.f32 %v2608, 0.0
  %v2645 = vmax.f32 %v2610, 0.0
  %v2646 = vmax.f32 %v2614, 0.0
  %v2647 = vmax.f32 %v2616, 0.0
  %v2648 = vmax.f32 %v2618, 0.0
  %v2649 = vmax.f32 %v2620, 0.0
  %v2650 = vmax.f32 %v2624, 0.0
  %v2651 = vmax.f32 %v2626, 0.0
  %v2652 = vmax.f32 %v2628, 0.0
  %v2653 = vmax.f32 %v2630, 0.0
  %v2654 = vmax.f32 %v2634, 0.0
  %v2655 = vmax.f32 %v2636, 0.0
  %v2656 = vmax.f32 %v2638, 0.0
  %v2657 = vmax.f32 %v2640, 0.0
  %2674 = vrot.lane.b32.xlu0 %v2642, 48
  %v2675 = vpop.permute.xlu0 %2674
  %2676 = vrot.lane.b32.xlu0 %v2643, 48
  %v2677 = vpop.permute.xlu0 %2676
  %2678 = vrot.lane.b32.xlu0 %v2644, 48
  %v2679 = vpop.permute.xlu0 %2678
  %2680 = vrot.lane.b32.xlu0 %v2645, 48
  %v2681 = vpop.permute.xlu0 %2680
  %2682 = vrot.lane.b32.xlu0 %v2646, 48
  %v2683 = vpop.permute.xlu0 %2682
  %2684 = vrot.lane.b32.xlu0 %v2647, 48
  %v2685 = vpop.permute.xlu0 %2684
  %2686 = vrot.lane.b32.xlu0 %v2648, 48
  %v2687 = vpop.permute.xlu0 %2686
  %2688 = vrot.lane.b32.xlu0 %v2649, 48
  %v2689 = vpop.permute.xlu0 %2688
  %2690 = vrot.lane.b32.xlu0 %v2650, 48
  %v2691 = vpop.permute.xlu0 %2690
  %2692 = vrot.lane.b32.xlu0 %v2651, 48
  %v2693 = vpop.permute.xlu0 %2692
  %2694 = vrot.lane.b32.xlu0 %v2652, 48
  %v2695 = vpop.permute.xlu0 %2694
  %2696 = vrot.lane.b32.xlu0 %v2653, 48
  %v2697 = vpop.permute.xlu0 %2696
  %2698 = vrot.lane.b32.xlu0 %v2654, 48
  %v2699 = vpop.permute.xlu0 %2698
  %2700 = vrot.lane.b32.xlu0 %v2655, 48
  %v2701 = vpop.permute.xlu0 %2700
  %2702 = vrot.lane.b32.xlu0 %v2656, 48
  %v2703 = vpop.permute.xlu0 %2702
  %2704 = vrot.lane.b32.xlu0 %v2657, 48
  %v2705 = vpop.permute.xlu0 %2704
  %vm2706 = vcmask 392192
  %v2707 = vsel %vm2706, %v2675, %v2677
  %v2708 = vsel %vm2706, %v2679, %v2681
  %v2709 = vsel %vm2706, %v2683, %v2685
  %v2710 = vsel %vm2706, %v2687, %v2689
  %v2711 = vsel %vm2706, %v2691, %v2693
  %v2712 = vsel %vm2706, %v2695, %v2697
  %v2713 = vsel %vm2706, %v2699, %v2701
  %v2714 = vsel %vm2706, %v2703, %v2705
  %v2723 = vmax.f32 %v2642, %v2707
  %v2724 = vmax.f32 %v2644, %v2708
  %v2725 = vmax.f32 %v2646, %v2709
  %v2726 = vmax.f32 %v2648, %v2710
  %v2727 = vmax.f32 %v2650, %v2711
  %v2728 = vmax.f32 %v2652, %v2712
  %v2729 = vmax.f32 %v2654, %v2713
  %v2730 = vmax.f32 %v2656, %v2714
  %v2739 = vrot.slane %v2723, 1
  %v2740 = vrot.slane %v2724, 1
  %v2741 = vrot.slane %v2725, 1
  %v2742 = vrot.slane %v2726, 1
  %v2743 = vrot.slane %v2727, 1
  %v2744 = vrot.slane %v2728, 1
  %v2745 = vrot.slane %v2729, 1
  %v2746 = vrot.slane %v2730, 1
  %v2755 = vmax.f32 %v2723, %v2739
  %v2756 = vmax.f32 %v2724, %v2740
  %v2757 = vmax.f32 %v2725, %v2741
  %v2758 = vmax.f32 %v2726, %v2742
  %v2759 = vmax.f32 %v2727, %v2743
  %v2760 = vmax.f32 %v2728, %v2744
  %v2761 = vmax.f32 %v2729, %v2745
  %v2762 = vmax.f32 %v2730, %v2746
  %v2771 = vrot.slane %v2755, 1
  %v2772 = vrot.slane %v2756, 1
  %v2773 = vrot.slane %v2757, 1
  %v2774 = vrot.slane %v2758, 1
  %v2775 = vrot.slane %v2759, 1
  %v2776 = vrot.slane %v2760, 1
  %v2777 = vrot.slane %v2761, 1
  %v2778 = vrot.slane %v2762, 1
  %v2787 = vrot.slane %v2755, 2
  %v2788 = vrot.slane %v2756, 2
  %v2789 = vrot.slane %v2757, 2
  %v2790 = vrot.slane %v2758, 2
  %v2791 = vrot.slane %v2759, 2
  %v2792 = vrot.slane %v2760, 2
  %v2793 = vrot.slane %v2761, 2
  %v2794 = vrot.slane %v2762, 2
  %v2803 = vrot.slane %v2755, 3
  %v2804 = vrot.slane %v2756, 3
  %v2805 = vrot.slane %v2757, 3
  %v2806 = vrot.slane %v2758, 3
  %v2807 = vrot.slane %v2759, 3
  %v2808 = vrot.slane %v2760, 3
  %v2809 = vrot.slane %v2761, 3
  %v2810 = vrot.slane %v2762, 3
  %v2819 = vsel %vm1596, %v2755, %v2771
  %v2820 = vsel %vm1596, %v2756, %v2772
  %v2821 = vsel %vm1596, %v2757, %v2773
  %v2822 = vsel %vm1596, %v2758, %v2774
  %v2823 = vsel %vm1596, %v2759, %v2775
  %v2824 = vsel %vm1596, %v2760, %v2776
  %v2825 = vsel %vm1596, %v2761, %v2777
  %v2826 = vsel %vm1596, %v2762, %v2778
  %v2827 = vsel %vm1605, %v2819, %v2787
  %v2828 = vsel %vm1605, %v2820, %v2788
  %v2829 = vsel %vm1605, %v2821, %v2789
  %v2830 = vsel %vm1605, %v2822, %v2790
  %v2831 = vsel %vm1605, %v2823, %v2791
  %v2832 = vsel %vm1605, %v2824, %v2792
  %v2833 = vsel %vm1605, %v2825, %v2793
  %v2834 = vsel %vm1605, %v2826, %v2794
  %v2835 = vsel %vm1614, %v2827, %v2803
  %v2836 = vsel %vm1614, %v2828, %v2804
  %v2837 = vsel %vm1614, %v2829, %v2805
  %v2838 = vsel %vm1614, %v2830, %v2806
  %v2839 = vsel %vm1614, %v2831, %v2807
  %v2840 = vsel %vm1614, %v2832, %v2808
  %v2841 = vsel %vm1614, %v2833, %v2809
  %v2842 = vsel %vm1614, %v2834, %v2810
  %v2843 = vcombine.low %v2835, %v2837
  %v2845 = vunpack.c.l.s4 1983009808
  %v2846 = vunpack.c.0.s8 %v2845
  %v2847 = vlaneseq
  %v2848 = vshrl.u32 %v2847, 7
  %v2849 = vsub.s32 %v2846, %v2848
  %v2850 = vrot.slane %v2843, %v2849
  %v2851 = vcombine.low %v2836, %v2838
  %v2853 = vunpack.c.l.s4 1983009808
  %v2854 = vunpack.c.0.s8 %v2853
  %v2855 = vlaneseq
  %v2856 = vshrl.u32 %v2855, 7
  %v2857 = vsub.s32 %v2854, %v2856
  %v2858 = vrot.slane %v2851, %v2857
  %v2859 = vcombine.low %v2839, %v2841
  %v2861 = vunpack.c.l.s4 1983009808
  %v2862 = vunpack.c.0.s8 %v2861
  %v2863 = vlaneseq
  %v2864 = vshrl.u32 %v2863, 7
  %v2865 = vsub.s32 %v2862, %v2864
  %v2866 = vrot.slane %v2859, %v2865
  %v2867 = vcombine.low %v2840, %v2842
  %v2869 = vunpack.c.l.s4 1983009808
  %v2870 = vunpack.c.0.s8 %v2869
  %v2871 = vlaneseq
  %v2872 = vshrl.u32 %v2871, 7
  %v2873 = vsub.s32 %v2870, %v2872
  %v2874 = vrot.slane %v2867, %v2873
  %v2875 = vcombine.low %v2850, %v2858
  %v2876 = vcombine.high %v2850, %v2858
  %v2878 = vunpack.c.l.s4 1934713408
  %v2879 = vunpack.c.0.s8 %v2878
  %v2880 = vlaneseq
  %v2881 = vshrl.u32 %v2880, 7
  %v2882 = vsub.s32 %v2879, %v2881
  %v2883 = vrot.slane %v2875, %v2882
  %v2885 = vunpack.c.l.s4 1934713408
  %v2886 = vunpack.c.0.s8 %v2885
  %v2887 = vlaneseq
  %v2888 = vshrl.u32 %v2887, 7
  %v2889 = vsub.s32 %v2886, %v2888
  %v2890 = vrot.slane %v2876, %v2889
  %v2891 = vcombine.low %v2866, %v2874
  %v2892 = vcombine.high %v2866, %v2874
  %v2894 = vunpack.c.l.s4 1934713408
  %v2895 = vunpack.c.0.s8 %v2894
  %v2896 = vlaneseq
  %v2897 = vshrl.u32 %v2896, 7
  %v2898 = vsub.s32 %v2895, %v2897
  %v2899 = vrot.slane %v2891, %v2898
  %v2901 = vunpack.c.l.s4 1934713408
  %v2902 = vunpack.c.0.s8 %v2901
  %v2903 = vlaneseq
  %v2904 = vshrl.u32 %v2903, 7
  %v2905 = vsub.s32 %v2902, %v2904
  %v2906 = vrot.slane %v2892, %v2905
  %v2907 = vcombine.low %v2883, %v2899
  %v2908 = vcombine.high %v2883, %v2899
  %v2909 = vcombine.low %v2890, %v2906
  %v2910 = vcombine.high %v2890, %v2906
  %2912 = vrot.lane.b32.xlu0 %v2908, 80
  %v2913 = vpop.permute.xlu0 %2912
  %2916 = vrot.lane.b32.xlu0 %v2909, 32
  %v2917 = vpop.permute.xlu0 %2916
  %2920 = vrot.lane.b32.xlu0 %v2910, 112
  %v2921 = vpop.permute.xlu0 %2920
  %vm2923 = vcmask 654336
  %v2924 = vsel %vm2923, %v2907, %v2913
  %vm2925 = vcmask 261120
  %v2926 = vsel %vm2925, %v2913, %v2917
  %v2927 = vsel %vm688, %v2926, %v2921
  %v2928 = vpack.c.bf16 %v2924, %v2924
  %v2929 = vpack.c.bf16 %v2927, %v2927
  %v2930 = vpack.c.bf16 %v2921, %v2921
  %v2931 = vld [vmem:[%s5] sm:$0xf]
  %v2932 = vld [vmem:[%s5 + $0x4] sm:$0xf]
  %v2933 = vld [vmem:[%s5 + $0x8] sm:$0xf]
  %v2934 = vld [vmem:[%s5 + $0xc] sm:$0xf]
  %v2935 = vld [vmem:[%s5 + $0x10] sm:$0xf]
  %v2936 = vld [vmem:[%s5 + $0x14] sm:$0xf]
  %v2937 = vld [vmem:[%s5 + $0x18] sm:$0xf]
  %v2938 = vld [vmem:[%s5 + $0x1c] sm:$0xf]
  %v2939 = vld [vmem:[%s5 + $0x20] sm:$0xf]
  %v2940 = vld [vmem:[%s5 + $0x24] sm:$0xf]
  %v2941 = vld [vmem:[%s5 + $0x28] sm:$0xf]
  %v2942 = vld [vmem:[%s5 + $0x2c] sm:$0xf]
  %v2943 = vld [vmem:[%s5 + $0x30] sm:$0xf]
  %v2944 = vld [vmem:[%s5 + $0x34] sm:$0xf]
  %v2945 = vld [vmem:[%s5 + $0x38] sm:$0xf]
  %v2946 = vld [vmem:[%s5 + $0x3c] sm:$0xf]
  %v2947 = vld [vmem:[%s5 + $0x40] sm:$0xf]
  %v2948 = vld [vmem:[%s5 + $0x44] sm:$0xf]
  %v2949 = vld [vmem:[%s5 + $0x48] sm:$0xf]
  %v2950 = vld [vmem:[%s5 + $0x4c] sm:$0xf]
  %v2951 = vld [vmem:[%s5 + $0x50] sm:$0xf]
  %v2952 = vld [vmem:[%s5 + $0x54] sm:$0xf]
  %v2953 = vld [vmem:[%s5 + $0x58] sm:$0xf]
  %v2954 = vld [vmem:[%s5 + $0x5c] sm:$0xf]
  %v2955 = vld [vmem:[%s5 + $0x60] sm:$0xf]
  %v2956 = vld [vmem:[%s5 + $0x64] sm:$0xf]
  %v2957 = vld [vmem:[%s5 + $0x68] sm:$0xf]
  %v2958 = vld [vmem:[%s5 + $0x6c] sm:$0xf]
  %v2959 = vld [vmem:[%s5 + $0x70] sm:$0xf]
  %v2960 = vld [vmem:[%s5 + $0x74] sm:$0xf]
  %v2961 = vld [vmem:[%s5 + $0x78] sm:$0xf]
  %v2962 = vld [vmem:[%s5 + $0x7c] sm:$0xf]
  %v2963 = vld [vmem:[%s5 + $0x80] sm:$0xf]
  %v2964 = vld [vmem:[%s5 + $0x84] sm:$0xf]
  %v2965 = vld [vmem:[%s5 + $0x88] sm:$0xf]
  %v2966 = vld [vmem:[%s5 + $0x8c] sm:$0xf]
  %v2967 = vld [vmem:[%s5 + $0x90] sm:$0xf]
  %v2968 = vld [vmem:[%s5 + $0x94] sm:$0xf]
  %v2969 = vld [vmem:[%s5 + $0x98] sm:$0xf]
  %v2970 = vld [vmem:[%s5 + $0x9c] sm:$0xf]
  %v2971 = vld [vmem:[%s6] sm:$0x1]
  %v2973 = vlaneseq
  %v2974 = vshrl.u32 %v2973, 7
  %v2975 = vsub.s32 0, %v2974
  %v2976 = vrot.slane %v2971, %v2975
  %v3018 = vunpack.c.l.b16 %v2931
  %v3019 = vunpack.c.l.b16 %v2932
  %v3020 = vunpack.c.l.b16 %v2933
  %v3021 = vunpack.c.l.b16 %v2934
  %v3022 = vunpack.c.l.b16 %v2935
  %v3023 = vunpack.c.l.b16 %v2936
  %v3024 = vunpack.c.l.b16 %v2937
  %v3025 = vunpack.c.l.b16 %v2938
  %v3026 = vunpack.c.l.b16 %v2939
  %v3027 = vunpack.c.l.b16 %v2940
  %v3028 = vunpack.c.l.b16 %v2941
  %v3029 = vunpack.c.l.b16 %v2942
  %v3030 = vunpack.c.l.b16 %v2943
  %v3031 = vunpack.c.l.b16 %v2944
  %v3032 = vunpack.c.l.b16 %v2945
  %v3033 = vunpack.c.l.b16 %v2946
  %v3034 = vunpack.c.l.b16 %v2947
  %v3035 = vunpack.c.l.b16 %v2948
  %v3036 = vunpack.c.l.b16 %v2949
  %v3037 = vunpack.c.l.b16 %v2950
  %v3038 = vunpack.c.l.b16 %v2951
  %v3039 = vunpack.c.l.b16 %v2952
  %v3040 = vunpack.c.l.b16 %v2953
  %v3041 = vunpack.c.l.b16 %v2954
  %v3042 = vunpack.c.l.b16 %v2955
  %v3043 = vunpack.c.l.b16 %v2956
  %v3044 = vunpack.c.l.b16 %v2957
  %v3045 = vunpack.c.l.b16 %v2958
  %v3046 = vunpack.c.l.b16 %v2959
  %v3047 = vunpack.c.l.b16 %v2960
  %v3048 = vunpack.c.l.b16 %v2961
  %v3049 = vunpack.c.l.b16 %v2962
  %v3050 = vunpack.c.l.b16 %v2963
  %v3051 = vunpack.c.l.b16 %v2964
  %v3052 = vunpack.c.l.b16 %v2965
  %v3053 = vunpack.c.l.b16 %v2966
  %v3054 = vunpack.c.l.b16 %v2967
  %v3055 = vunpack.c.l.b16 %v2968
  %v3056 = vunpack.c.l.b16 %v2969
  %v3057 = vunpack.c.l.b16 %v2970
  %v3058 = vpack.c.b16 %v3019, %v3018
  %v3059 = vpack.c.b16 %v3021, %v3020
  %v3060 = vpack.c.b16 %v3023, %v3022
  %v3061 = vpack.c.b16 %v3025, %v3024
  %v3062 = vpack.c.b16 %v3027, %v3026
  %v3063 = vpack.c.b16 %v3029, %v3028
  %v3064 = vpack.c.b16 %v3031, %v3030
  %v3065 = vpack.c.b16 %v3033, %v3032
  %v3066 = vpack.c.b16 %v3035, %v3034
  %v3067 = vpack.c.b16 %v3037, %v3036
  %v3068 = vpack.c.b16 %v3039, %v3038
  %v3069 = vpack.c.b16 %v3041, %v3040
  %v3070 = vpack.c.b16 %v3043, %v3042
  %v3071 = vpack.c.b16 %v3045, %v3044
  %v3072 = vpack.c.b16 %v3047, %v3046
  %v3073 = vpack.c.b16 %v3049, %v3048
  %v3074 = vpack.c.b16 %v3051, %v3050
  %v3075 = vpack.c.b16 %v3053, %v3052
  %v3076 = vpack.c.b16 %v3055, %v3054
  %v3077 = vpack.c.b16 %v3057, %v3056
  %vm3098 = vcmask 523264
  %v3100 = vsel %vm3098, %v2930, 0
  %3102 = vmatprep.subr.bf16.mxu0 0
  %3103 = vmatpush1.bf16.msra.mxu0 %v3058
  %3104 = vmatprep.subr.bf16.mxu0 0
  %3105 = vmatpush1.bf16.msra.mxu0 %v3059
  %3106 = vmatprep.subr.bf16.mxu0 0
  %3107 = vmatpush1.bf16.msra.mxu0 %v3060
  %3108 = vmatprep.subr.bf16.mxu0 0
  %3109 = vmatpush1.bf16.msra.mxu0 %v3061
  %3110 = vmatprep.subr.bf16.mxu0 0
  %3111 = vmatpush1.bf16.msra.mxu0 %v3062
  %3112 = vmatprep.subr.bf16.mxu0 0
  %3113 = vmatpush1.bf16.msra.mxu0 %v3063
  %3114 = vmatprep.subr.bf16.mxu0 0
  %3115 = vmatpush1.bf16.msra.mxu0 %v3064
  %3116 = vmatprep.subr.bf16.mxu0 0
  %3117 = vmatpush1.bf16.msra.mxu0 %v3065
  %3118 = vmatprep.subr.bf16.mxu0 0
  %3119 = vmatpush1.bf16.msra.mxu0 %v3066
  %3120 = vmatprep.subr.bf16.mxu0 0
  %3121 = vmatpush1.bf16.msra.mxu0 %v3067
  %3122 = vmatprep.subr.bf16.mxu0 0
  %3123 = vmatpush1.bf16.msra.mxu0 %v3068
  %3124 = vmatprep.subr.bf16.mxu0 0
  %3125 = vmatpush1.bf16.msra.mxu0 %v3069
  %3126 = vmatprep.subr.bf16.mxu0 0
  %3127 = vmatpush1.bf16.msra.mxu0 %v3070
  %3128 = vmatprep.subr.bf16.mxu0 0
  %3129 = vmatpush1.bf16.msra.mxu0 %v3071
  %3130 = vmatprep.subr.bf16.mxu0 0
  %3131 = vmatpush1.bf16.msra.mxu0 %v3072
  %3132 = vmatprep.subr.bf16.mxu0 0
  %3133 = vmatpush1.bf16.msra.mxu0 %v3073
  %3134 = vmatprep.mubr.bf16.mxu0 %v2929
  %3135 = vmatmul.mubr.bf16.gmra.mrb[0].mxu0 %v2928
  %v3136 = vpop.f32.mrb[0].mxu0
  %v3137 = vadd.f32 %v2976, %v3136
  %v3138 = vpop.f32.mrb[0].mxu0
  %v3139 = vpop.f32.mrb[0].mxu0
  %v3140 = vpop.f32.mrb[0].mxu0
  %3141 = vdwg.mxu0
  %3142 = vmatprep.subr.bf16.mxu0 0
  %3143 = vmatpush1.bf16.msra.mxu0 %v3074
  %3144 = vmatprep.subr.bf16.mxu0 0
  %3145 = vmatpush1.bf16.msra.mxu0 %v3075
  %3146 = vmatprep.subr.bf16.mxu0 0
  %3147 = vmatpush1.bf16.msra.mxu0 %v3076
  %3148 = vmatprep.subr.bf16.mxu0 0
  %3149 = vmatpush1.bf16.msra.mxu0 %v3077
  %3150 = vmatprep.subr.bf16.mxu0 0
  %3151 = vmatpush1.bf16.msra.mxu0 0
  %3152 = vmatprep.subr.bf16.mxu0 0
  %3153 = vmatpush1.bf16.msra.mxu0 0
  %3154 = vmatprep.subr.bf16.mxu0 0
  %3155 = vmatpush1.bf16.msra.mxu0 0
  %3156 = vmatprep.subr.bf16.mxu0 0
  %3157 = vmatpush1.bf16.msra.mxu0 0
  %3158 = vmatprep.subr.bf16.mxu0 0
  %3159 = vmatpush1.bf16.msra.mxu0 0
  %3160 = vmatprep.subr.bf16.mxu0 0
  %3161 = vmatpush1.bf16.msra.mxu0 0
  %3162 = vmatprep.subr.bf16.mxu0 0
  %3163 = vmatpush1.bf16.msra.mxu0 0
  %3164 = vmatprep.subr.bf16.mxu0 0
  %3165 = vmatpush1.bf16.msra.mxu0 0
  %3166 = vmatprep.subr.bf16.mxu0 0
  %3167 = vmatpush1.bf16.msra.mxu0 0
  %3168 = vmatprep.subr.bf16.mxu0 0
  %3169 = vmatpush1.bf16.msra.mxu0 0
  %3170 = vmatprep.subr.bf16.mxu0 0
  %3171 = vmatpush1.bf16.msra.mxu0 0
  %3172 = vmatprep.subr.bf16.mxu0 0
  %3173 = vmatpush1.bf16.msra.mxu0 0
  %3174 = vmatprep.mubr.bf16.mxu0 0
  %3175 = vmatmul.mubr.bf16.gmra.mrb[0].mxu0 %v3100
  %v3176 = vpop.f32.mrb[0].mxu0
  %v3177 = vadd.f32 %v3137, %v3176
  %v3178 = vpop.f32.mrb[0].mxu0
  %v3179 = vpop.f32.mrb[0].mxu0
  %v3180 = vpop.f32.mrb[0].mxu0
  %3181 = vdwg.mxu0
  %v3182 = vmax.f32 %v3177, 0.0
  %v3183 = vpack.c.bf16 %v3182, %v3182
  %v3184 = vld [vmem:[%s7] sm:$0xf]
  %v3185 = vld [vmem:[%s7 + $0x4] sm:$0xf]
  %v3186 = vld [vmem:[%s7 + $0x8] sm:$0xf]
  %v3187 = vld [vmem:[%s7 + $0xc] sm:$0xf]
  %v3188 = vld [vmem:[%s7 + $0x10] sm:$0xf]
  %v3189 = vld [vmem:[%s7 + $0x14] sm:$0xf]
  %v3190 = vld [vmem:[%s7 + $0x18] sm:$0xf]
  %v3191 = vld [vmem:[%s7 + $0x1c] sm:$0xf]
  %v3192 = vld [vmem:[%s7 + $0x20] sm:$0xf]
  %v3193 = vld [vmem:[%s7 + $0x24] sm:$0xf]
  %v3194 = vld [vmem:[%s7 + $0x28] sm:$0xf]
  %v3195 = vld [vmem:[%s7 + $0x2c] sm:$0xf]
  %v3196 = vld [vmem:[%s7 + $0x30] sm:$0xf]
  %v3197 = vld [vmem:[%s7 + $0x34] sm:$0xf]
  %v3198 = vld [vmem:[%s7 + $0x38] sm:$0xf]
  %v3199 = vld [vmem:[%s7 + $0x3c] sm:$0xf]
  %v3200 = vld [vmem:[%s8] sm:$0x1]
  %v3202 = vlaneseq
  %v3203 = vshrl.u32 %v3202, 7
  %v3204 = vsub.s32 0, %v3203
  %v3205 = vrot.slane %v3200, %v3204
  %v3223 = vunpack.c.l.b16 %v3184
  %v3224 = vunpack.c.l.b16 %v3185
  %v3225 = vunpack.c.l.b16 %v3186
  %v3226 = vunpack.c.l.b16 %v3187
  %v3227 = vunpack.c.l.b16 %v3188
  %v3228 = vunpack.c.l.b16 %v3189
  %v3229 = vunpack.c.l.b16 %v3190
  %v3230 = vunpack.c.l.b16 %v3191
  %v3231 = vunpack.c.l.b16 %v3192
  %v3232 = vunpack.c.l.b16 %v3193
  %v3233 = vunpack.c.l.b16 %v3194
  %v3234 = vunpack.c.l.b16 %v3195
  %v3235 = vunpack.c.l.b16 %v3196
  %v3236 = vunpack.c.l.b16 %v3197
  %v3237 = vunpack.c.l.b16 %v3198
  %v3238 = vunpack.c.l.b16 %v3199
  %v3239 = vpack.c.b16 %v3224, %v3223
  %v3240 = vpack.c.b16 %v3226, %v3225
  %v3241 = vpack.c.b16 %v3228, %v3227
  %v3242 = vpack.c.b16 %v3230, %v3229
  %v3243 = vpack.c.b16 %v3232, %v3231
  %v3244 = vpack.c.b16 %v3234, %v3233
  %v3245 = vpack.c.b16 %v3236, %v3235
  %v3246 = vpack.c.b16 %v3238, %v3237
  %3255 = vmatprep.subr.bf16.mxu0 0
  %3256 = vmatpush1.bf16.msra.mxu0 %v3239
  %3257 = vmatprep.subr.bf16.mxu0 0
  %3258 = vmatpush1.bf16.msra.mxu0 %v3240
  %3259 = vmatprep.subr.bf16.mxu0 0
  %3260 = vmatpush1.bf16.msra.mxu0 %v3241
  %3261 = vmatprep.subr.bf16.mxu0 0
  %3262 = vmatpush1.bf16.msra.mxu0 %v3242
  %3263 = vmatprep.subr.bf16.mxu0 0
  %3264 = vmatpush1.bf16.msra.mxu0 %v3243
  %3265 = vmatprep.subr.bf16.mxu0 0
  %3266 = vmatpush1.bf16.msra.mxu0 %v3244
  %3267 = vmatprep.subr.bf16.mxu0 0
  %3268 = vmatpush1.bf16.msra.mxu0 %v3245
  %3269 = vmatprep.subr.bf16.mxu0 0
  %3270 = vmatpush1.bf16.msra.mxu0 %v3246
  %3271 = vmatprep.subr.bf16.mxu0 0
  %3272 = vmatpush1.bf16.msra.mxu0 0
  %3273 = vmatprep.subr.bf16.mxu0 0
  %3274 = vmatpush1.bf16.msra.mxu0 0
  %3275 = vmatprep.subr.bf16.mxu0 0
  %3276 = vmatpush1.bf16.msra.mxu0 0
  %3277 = vmatprep.subr.bf16.mxu0 0
  %3278 = vmatpush1.bf16.msra.mxu0 0
  %3279 = vmatprep.subr.bf16.mxu0 0
  %3280 = vmatpush1.bf16.msra.mxu0 0
  %3281 = vmatprep.subr.bf16.mxu0 0
  %3282 = vmatpush1.bf16.msra.mxu0 0
  %3283 = vmatprep.subr.bf16.mxu0 0
  %3284 = vmatpush1.bf16.msra.mxu0 0
  %3285 = vmatprep.subr.bf16.mxu0 0
  %3286 = vmatpush1.bf16.msra.mxu0 0
  %3287 = vmatprep.mubr.bf16.mxu0 0
  %3288 = vmatmul.mubr.bf16.gmra.mrb[0].mxu0 %v3183
  %v3289 = vpop.f32.mrb[0].mxu0
  %v3290 = vadd.f32 %v3205, %v3289
  %v3291 = vpop.f32.mrb[0].mxu0
  %v3292 = vpop.f32.mrb[0].mxu0
  %v3293 = vpop.f32.mrb[0].mxu0
  %3294 = vdwg.mxu0
  %3295 = vmax.xlane.f32.xlu0 %v3290
  %v3296 = vpop.xlane.xlu0 %3295
  %v3297 = vsub.f32 %v3290, %v3296
  %v3298 = vmul.f32 %v3297, 1.442695
  %v3299 = vpow.pop %v3298
  %3300 = vadd.xlane.f32.xlu0 %v3299
  %v3301 = vpop.xlane.xlu0 %3300
  %v3302 = vrcp.pop %v3301
  %v3303 = vmul.f32 %v3299, %v3302
  %3304 = vst [vmem:[%s9] sm:$0xff] %v3303
  // Predicated region
  $region38: #{cnn_forward.1} parent=0 // pred_check
    _
  $region39: #{cnn_forward.1} parent=0 // pred_check_branch
    %3306 = sbr.rel (0) target = $region41
  $region40: #{cnn_forward.1} parent=0 // pred_region
    _
  $region41: #{cnn_forward.1} parent=0 // pred_fallthru
    _
  // Predicated region
  $region42: #{cnn_forward.1} parent=0 // pred_check
    _
  $region43: #{cnn_forward.1} parent=0 // pred_check_branch
    %3308 = sbr.rel (0) target = $region45
  $region44: #{cnn_forward.1} parent=0 // pred_region
    _
  $region45: #{cnn_forward.1} parent=0 // pred_fallthru
    _

</llo_original>
